<compile_context>
chip_gen: v6e
topology: v6e:2x2x1
jax: 0.10.0
libtpu: 0.0.40
codegen_flags: <defaults>
</compile_context>

<pallas_src>
import functools
import math

import jax
import jax.numpy as jnp
import numpy as np
from jax.experimental import pallas as pl
from jax.experimental.pallas import tpu as pltpu

KSIZE = 7
PAD = 3
EPS = 1e-6


def _block_kernel(x_ref, colmask_ref, wdw_ref, bdw_ref, gnw_ref, gnb_ref,
                  w1_ref, b1_ref, w2_ref, b2_ref, gamma_ref,
                  out_ref, zpad_ref, *, height, width):
    # x_ref / out_ref : (1, C, H*W)   channels-first, flattened spatial (lane-dense)
    # zpad_ref        : (C, (H+6)*W + 6) VMEM scratch holding the zero-padded flat image
    H, W = height, width
    HW = H * W
    C = x_ref.shape[1]
    base = PAD * W + PAD                      # flat offset of pixel (0, 0) inside zpad

    # ---- build the zero-padded, flattened image in the VMEM scratch ----
    zpad_ref[...] = jnp.zeros_like(zpad_ref)  # re-zeroed every step (megacore-safe)
    zpad_ref[:, base:base + HW] = x_ref[0]

    # ---- depthwise 7x7 conv: 49 static shifted-slice reads from the scratch ref ----
    # tap (kh, kw) reads zpad[p + base + (kh-3)*W + (kw-3)]; vertical out-of-range hits
    # the zero pad rows, horizontal bleed is masked once per kw with colmask.
    acc = None
    for kw in range(KSIZE):
        part = None
        for kh in range(KSIZE):
            s = base + (kh - PAD) * W + (kw - PAD)
            win = zpad_ref[:, s:s + HW]                              # (C, HW)
            t = kh * KSIZE + kw
            wk = wdw_ref[:, t:t + 1]                                 # (C, 1) tap weight
            term = win * wk
            part = term if part is None else part + term
        if kw != PAD:                                                # mask row-wrap bleed
            part = part * colmask_ref[kw:kw + 1, :]                  # (1, HW) broadcast
        acc = part if acc is None else acc + part
    acc = acc + bdw_ref[...]                                         # conv bias (C,1)

    # ---- LayerNorm over channels (eps = 1e-6, biased variance) ----
    mu = jnp.mean(acc, axis=0, keepdims=True)                        # (1, HW)
    xc = acc - mu
    var = jnp.mean(xc * xc, axis=0, keepdims=True)
    xn = xc * jax.lax.rsqrt(var + EPS)
    xn = xn * gnw_ref[...] + gnb_ref[...]                            # (C,1) affine

    # ---- pointwise MLP: (4C,C)@(C,HW) -> exact GELU -> (C,4C)@(4C,HW) ----
    h = jnp.dot(w1_ref[...], xn, preferred_element_type=jnp.float32) + b1_ref[...]
    h = 0.5 * h * (1.0 + jax.lax.erf(h * (1.0 / math.sqrt(2.0))))    # nn.GELU() (exact)
    y = jnp.dot(w2_ref[...], h, preferred_element_type=jnp.float32) + b2_ref[...]

    # ---- layer scale + residual (lane-dense store) ----
    out_ref[0] = x_ref[0] + y * gamma_ref[...]


@jax.jit
def convnext_block(x, conv_w, conv_b, ln_w, ln_b, lin1_w, lin1_b, lin2_w, lin2_b, gamma):
    """ConvNeXt Block forward with parameters in native PyTorch layouts.
       x: (N,C,H,W); conv_w: (C,1,7,7); conv_b/ln_w/ln_b/lin2_b/gamma: (C,);
       lin1_w: (4C,C); lin1_b: (4C,); lin2_w: (C,4C).  Returns (N,C,H,W)."""
    N, C, H, W = x.shape
    HW = H * W
    C4 = lin1_w.shape[0]
    LZ = (H + 2 * PAD) * W + 2 * PAD

    # Free reshapes only — no transposes / padding / extra activation copies in HBM.
    x_flat = x.reshape(N, C, HW)
    wdw = conv_w.reshape(C, KSIZE * KSIZE)
    bdw = conv_b.reshape(C, 1)
    gnw = ln_w.reshape(C, 1)
    gnb = ln_b.reshape(C, 1)
    b1 = lin1_b.reshape(C4, 1)
    b2 = lin2_b.reshape(C, 1)
    gam = gamma.reshape(C, 1)

    # Column masks cancelling horizontal bleed of the flattened-row dwconv taps.
    col = jnp.arange(HW, dtype=jnp.int32) % W
    colmask = jnp.stack(
        [((col + (kw - PAD) >= 0) & (col + (kw - PAD) < W)).astype(jnp.float32)
         for kw in range(KSIZE)], axis=0)                            # (7, HW)

    rep = lambda shape: pl.BlockSpec(shape, lambda n: (0,) * len(shape))

    out_flat = pl.pallas_call(
        functools.partial(_block_kernel, height=H, width=W),
        out_shape=jax.ShapeDtypeStruct((N, C, HW), jnp.float32),
        grid_spec=pltpu.PrefetchScalarGridSpec(
            num_scalar_prefetch=0,
            grid=(N,),
            in_specs=[
                pl.BlockSpec((1, C, HW), lambda n: (n, 0, 0)),   # activation (also residual)
                rep((KSIZE, HW)),            # column masks
                rep((C, KSIZE * KSIZE)),     # dwconv weight
                rep((C, 1)),                 # dwconv bias
                rep((C, 1)),                 # LN weight
                rep((C, 1)),                 # LN bias
                rep((C4, C)),                # pwconv1 weight (out, in)
                rep((C4, 1)),                # pwconv1 bias
                rep((C, C4)),                # pwconv2 weight (out, in)
                rep((C, 1)),                 # pwconv2 bias
                rep((C, 1)),                 # gamma (layer scale)
            ],
            out_specs=pl.BlockSpec((1, C, HW), lambda n: (n, 0, 0)),
            scratch_shapes=[pltpu.VMEM((C, LZ), jnp.float32)],
        ),
        compiler_params=pltpu.CompilerParams(
            dimension_semantics=("parallel",),
            vmem_limit_bytes=32 * 1024 * 1024,
        ),
    )(x_flat, colmask, wdw, bdw, gnw, gnb, lin1_w, b1, lin2_w, b2, gam)

    # TODO(synk): for real ConvNeXt resolutions add a spatial grid axis (H tiles with a
    # 3-row halo) and bf16 MXU operands; unnecessary at these small shapes.
    return out_flat.reshape(N, C, H, W)


def _reference(x, conv_w, conv_b, ln_w, ln_b, lin1_w, lin1_b, lin2_w, lin2_b, gamma):
    """Pure-JAX reference of the PyTorch Block.forward (NCHW in/out)."""
    hi = jax.lax.Precision.HIGHEST
    y = jax.lax.conv_general_dilated(x, conv_w, (1, 1), [(PAD, PAD), (PAD, PAD)],
                                     feature_group_count=x.shape[1], precision=hi)
    y = y + conv_b[None, :, None, None]
    y = jnp.transpose(y, (0, 2, 3, 1))                               # NHWC
    mu = jnp.mean(y, -1, keepdims=True)
    var = jnp.mean((y - mu) ** 2, -1, keepdims=True)
    y = (y - mu) / jnp.sqrt(var + EPS) * ln_w + ln_b
    y = jnp.einsum("nhwc,oc->nhwo", y, lin1_w, precision=hi) + lin1_b
    y = jax.nn.gelu(y, approximate=False)
    y = jnp.einsum("nhwc,oc->nhwo", y, lin2_w, precision=hi) + lin2_b
    y = y * gamma
    return x + jnp.transpose(y, (0, 3, 1, 2))


if __name__ == "__main__":
    N, C, H, W = 2, 32, 16, 16
    key = jax.random.PRNGKey(0)
    ks = jax.random.split(key, 9)

    x = jax.random.normal(ks[0], (N, C, H, W), jnp.float32)

    # Parameters in PyTorch-native layouts (Block.__init__ with dim=C).
    conv_w = jax.random.normal(ks[1], (C, 1, KSIZE, KSIZE), jnp.float32) * 0.05
    conv_b = jax.random.normal(ks[2], (C,), jnp.float32) * 0.05
    ln_w = jnp.ones((C,), jnp.float32) + 0.1 * jax.random.normal(ks[3], (C,), jnp.float32)
    ln_b = 0.05 * jax.random.normal(ks[4], (C,), jnp.float32)
    lin1_w = jax.random.normal(ks[5], (4 * C, C), jnp.float32) * 0.05
    lin1_b = jax.random.normal(ks[6], (4 * C,), jnp.float32) * 0.05
    lin2_w = jax.random.normal(ks[7], (C, 4 * C), jnp.float32) * 0.05
    lin2_b = jax.random.normal(ks[8], (C,), jnp.float32) * 0.05
    gamma = jnp.full((C,), 0.5, jnp.float32)   # non-trivial layer scale to exercise the branch

    out = convnext_block(x, conv_w, conv_b, ln_w, ln_b,
                         lin1_w, lin1_b, lin2_w, lin2_b, gamma)
    out = jax.block_until_ready(out)

    ref = _reference(x, conv_w, conv_b, ln_w, ln_b,
                     lin1_w, lin1_b, lin2_w, lin2_b, gamma)
    np.testing.assert_allclose(np.asarray(out), np.asarray(ref), rtol=2e-3, atol=2e-3)

    print("KERNEL_OK")
</pallas_src>

<mosaic_0001>
module attributes {stable_mosaic.version = 11 : i64} {
  func.func @_block_kernel(%arg0: i32, %arg1: memref<1x32x256xf32, #tpu.memory_space<vmem>>, %arg2: memref<7x256xf32, #tpu.memory_space<vmem>>, %arg3: memref<32x49xf32, #tpu.memory_space<vmem>>, %arg4: memref<32x1xf32, #tpu.memory_space<vmem>>, %arg5: memref<32x1xf32, #tpu.memory_space<vmem>>, %arg6: memref<32x1xf32, #tpu.memory_space<vmem>>, %arg7: memref<128x32xf32, #tpu.memory_space<vmem>>, %arg8: memref<128x1xf32, #tpu.memory_space<vmem>>, %arg9: memref<32x128xf32, #tpu.memory_space<vmem>>, %arg10: memref<32x1xf32, #tpu.memory_space<vmem>>, %arg11: memref<32x1xf32, #tpu.memory_space<vmem>>, %arg12: memref<1x32x256xf32, #tpu.memory_space<vmem>>, %arg13: memref<32x358xf32, #tpu.memory_space<vmem>>) attributes {dimension_semantics = [#tpu.dimension_semantics<parallel>], iteration_bounds = array<i64: 2>, scalar_prefetch = 0 : i64, scratch_operands = 1 : i64, tpu.core_type = #tpu.core_type<tc>, window_params = [{transform_indices = @transform_0, window_bounds = array<i64: 1, 32, 256>}, {pipeline_mode = #tpu.pipeline_mode<synchronous>, transform_indices = @transform_1, window_bounds = array<i64: 7, 256>}, {pipeline_mode = #tpu.pipeline_mode<synchronous>, transform_indices = @transform_2, window_bounds = array<i64: 32, 49>}, {pipeline_mode = #tpu.pipeline_mode<synchronous>, transform_indices = @transform_3, window_bounds = array<i64: 32, 1>}, {pipeline_mode = #tpu.pipeline_mode<synchronous>, transform_indices = @transform_4, window_bounds = array<i64: 32, 1>}, {pipeline_mode = #tpu.pipeline_mode<synchronous>, transform_indices = @transform_5, window_bounds = array<i64: 32, 1>}, {pipeline_mode = #tpu.pipeline_mode<synchronous>, transform_indices = @transform_6, window_bounds = array<i64: 128, 32>}, {pipeline_mode = #tpu.pipeline_mode<synchronous>, transform_indices = @transform_7, window_bounds = array<i64: 128, 1>}, {pipeline_mode = #tpu.pipeline_mode<synchronous>, transform_indices = @transform_8, window_bounds = array<i64: 32, 128>}, {pipeline_mode = #tpu.pipeline_mode<synchronous>, transform_indices = @transform_9, window_bounds = array<i64: 32, 1>}, {pipeline_mode = #tpu.pipeline_mode<synchronous>, transform_indices = @transform_10, window_bounds = array<i64: 32, 1>}, {transform_indices = @transform_11, window_bounds = array<i64: 1, 32, 256>}]} {
    %cst = arith.constant 0.000000e+00 : f32
    %0 = vector.broadcast %cst : f32 to vector<32x358xf32>
    %c0 = arith.constant 0 : index
    %c0_0 = arith.constant 0 : index
    %1 = vector.load %arg13[%c0, %c0_0] : memref<32x358xf32, #tpu.memory_space<vmem>>, vector<32x358xf32>
    tpu.vector_store %arg13[%c0, %c0_0], %0 {strides = array<i32>} : memref<32x358xf32, #tpu.memory_space<vmem>>, vector<32x358xf32>,
    %c0_1 = arith.constant 0 : index
    %c0_2 = arith.constant 0 : index
    %c0_3 = arith.constant 0 : index
    %2 = vector.load %arg1[%c0_1, %c0_2, %c0_3] : memref<1x32x256xf32, #tpu.memory_space<vmem>>, vector<1x32x256xf32>
    %3 = vector.shape_cast %2 : vector<1x32x256xf32> to vector<32x256xf32>
    %c0_4 = arith.constant 0 : index
    %c51 = arith.constant 51 : index
    %4 = vector.load %arg13[%c0_4, %c51] : memref<32x358xf32, #tpu.memory_space<vmem>>, vector<32x256xf32>
    tpu.vector_store %arg13[%c0_4, %c51], %3 {strides = array<i32>} : memref<32x358xf32, #tpu.memory_space<vmem>>, vector<32x256xf32>,
    %c0_5 = arith.constant 0 : index
    %c0_6 = arith.constant 0 : index
    %5 = vector.load %arg13[%c0_5, %c0_6] : memref<32x358xf32, #tpu.memory_space<vmem>>, vector<32x256xf32>
    %c0_7 = arith.constant 0 : index
    %c0_8 = arith.constant 0 : index
    %6 = vector.load %arg3[%c0_7, %c0_8] : memref<32x49xf32, #tpu.memory_space<vmem>>, vector<32x1xf32>
    %7 = vector.broadcast %6 : vector<32x1xf32> to vector<32x256xf32>
    %8 = arith.mulf %5, %7 : vector<32x256xf32>
    %c0_9 = arith.constant 0 : index
    %c16 = arith.constant 16 : index
    %9 = vector.load %arg13[%c0_9, %c16] : memref<32x358xf32, #tpu.memory_space<vmem>>, vector<32x256xf32>
    %c0_10 = arith.constant 0 : index
    %c7 = arith.constant 7 : index
    %10 = vector.load %arg3[%c0_10, %c7] : memref<32x49xf32, #tpu.memory_space<vmem>>, vector<32x1xf32>
    %11 = vector.broadcast %10 : vector<32x1xf32> to vector<32x256xf32>
    %12 = arith.mulf %9, %11 : vector<32x256xf32>
    %13 = arith.addf %8, %12 : vector<32x256xf32>
    %c0_11 = arith.constant 0 : index
    %c32 = arith.constant 32 : index
    %14 = vector.load %arg13[%c0_11, %c32] : memref<32x358xf32, #tpu.memory_space<vmem>>, vector<32x256xf32>
    %c0_12 = arith.constant 0 : index
    %c14 = arith.constant 14 : index
    %15 = vector.load %arg3[%c0_12, %c14] : memref<32x49xf32, #tpu.memory_space<vmem>>, vector<32x1xf32>
    %16 = vector.broadcast %15 : vector<32x1xf32> to vector<32x256xf32>
    %17 = arith.mulf %14, %16 : vector<32x256xf32>
    %18 = arith.addf %13, %17 : vector<32x256xf32>
    %c0_13 = arith.constant 0 : index
    %c48 = arith.constant 48 : index
    %19 = vector.load %arg13[%c0_13, %c48] : memref<32x358xf32, #tpu.memory_space<vmem>>, vector<32x256xf32>
    %c0_14 = arith.constant 0 : index
    %c21 = arith.constant 21 : index
    %20 = vector.load %arg3[%c0_14, %c21] : memref<32x49xf32, #tpu.memory_space<vmem>>, vector<32x1xf32>
    %21 = vector.broadcast %20 : vector<32x1xf32> to vector<32x256xf32>
    %22 = arith.mulf %19, %21 : vector<32x256xf32>
    %23 = arith.addf %18, %22 : vector<32x256xf32>
    %c0_15 = arith.constant 0 : index
    %c64 = arith.constant 64 : index
    %24 = vector.load %arg13[%c0_15, %c64] : memref<32x358xf32, #tpu.memory_space<vmem>>, vector<32x256xf32>
    %c0_16 = arith.constant 0 : index
    %c28 = arith.constant 28 : index
    %25 = vector.load %arg3[%c0_16, %c28] : memref<32x49xf32, #tpu.memory_space<vmem>>, vector<32x1xf32>
    %26 = vector.broadcast %25 : vector<32x1xf32> to vector<32x256xf32>
    %27 = arith.mulf %24, %26 : vector<32x256xf32>
    %28 = arith.addf %23, %27 : vector<32x256xf32>
    %c0_17 = arith.constant 0 : index
    %c80 = arith.constant 80 : index
    %29 = vector.load %arg13[%c0_17, %c80] : memref<32x358xf32, #tpu.memory_space<vmem>>, vector<32x256xf32>
    %c0_18 = arith.constant 0 : index
    %c35 = arith.constant 35 : index
    %30 = vector.load %arg3[%c0_18, %c35] : memref<32x49xf32, #tpu.memory_space<vmem>>, vector<32x1xf32>
    %31 = vector.broadcast %30 : vector<32x1xf32> to vector<32x256xf32>
    %32 = arith.mulf %29, %31 : vector<32x256xf32>
    %33 = arith.addf %28, %32 : vector<32x256xf32>
    %c0_19 = arith.constant 0 : index
    %c96 = arith.constant 96 : index
    %34 = vector.load %arg13[%c0_19, %c96] : memref<32x358xf32, #tpu.memory_space<vmem>>, vector<32x256xf32>
    %c0_20 = arith.constant 0 : index
    %c42 = arith.constant 42 : index
    %35 = vector.load %arg3[%c0_20, %c42] : memref<32x49xf32, #tpu.memory_space<vmem>>, vector<32x1xf32>
    %36 = vector.broadcast %35 : vector<32x1xf32> to vector<32x256xf32>
    %37 = arith.mulf %34, %36 : vector<32x256xf32>
    %38 = arith.addf %33, %37 : vector<32x256xf32>
    %c0_21 = arith.constant 0 : index
    %c0_22 = arith.constant 0 : index
    %39 = vector.load %arg2[%c0_21, %c0_22] : memref<7x256xf32, #tpu.memory_space<vmem>>, vector<1x256xf32>
    %40 = vector.broadcast %39 : vector<1x256xf32> to vector<32x256xf32>
    %41 = arith.mulf %38, %40 : vector<32x256xf32>
    %c0_23 = arith.constant 0 : index
    %c1 = arith.constant 1 : index
    %42 = vector.load %arg13[%c0_23, %c1] : memref<32x358xf32, #tpu.memory_space<vmem>>, vector<32x256xf32>
    %c0_24 = arith.constant 0 : index
    %c1_25 = arith.constant 1 : index
    %43 = vector.load %arg3[%c0_24, %c1_25] : memref<32x49xf32, #tpu.memory_space<vmem>>, vector<32x1xf32>
    %44 = vector.broadcast %43 : vector<32x1xf32> to vector<32x256xf32>
    %45 = arith.mulf %42, %44 : vector<32x256xf32>
    %c0_26 = arith.constant 0 : index
    %c17 = arith.constant 17 : index
    %46 = vector.load %arg13[%c0_26, %c17] : memref<32x358xf32, #tpu.memory_space<vmem>>, vector<32x256xf32>
    %c0_27 = arith.constant 0 : index
    %c8 = arith.constant 8 : index
    %47 = vector.load %arg3[%c0_27, %c8] : memref<32x49xf32, #tpu.memory_space<vmem>>, vector<32x1xf32>
    %48 = vector.broadcast %47 : vector<32x1xf32> to vector<32x256xf32>
    %49 = arith.mulf %46, %48 : vector<32x256xf32>
    %50 = arith.addf %45, %49 : vector<32x256xf32>
    %c0_28 = arith.constant 0 : index
    %c33 = arith.constant 33 : index
    %51 = vector.load %arg13[%c0_28, %c33] : memref<32x358xf32, #tpu.memory_space<vmem>>, vector<32x256xf32>
    %c0_29 = arith.constant 0 : index
    %c15 = arith.constant 15 : index
    %52 = vector.load %arg3[%c0_29, %c15] : memref<32x49xf32, #tpu.memory_space<vmem>>, vector<32x1xf32>
    %53 = vector.broadcast %52 : vector<32x1xf32> to vector<32x256xf32>
    %54 = arith.mulf %51, %53 : vector<32x256xf32>
    %55 = arith.addf %50, %54 : vector<32x256xf32>
    %c0_30 = arith.constant 0 : index
    %c49 = arith.constant 49 : index
    %56 = vector.load %arg13[%c0_30, %c49] : memref<32x358xf32, #tpu.memory_space<vmem>>, vector<32x256xf32>
    %c0_31 = arith.constant 0 : index
    %c22 = arith.constant 22 : index
    %57 = vector.load %arg3[%c0_31, %c22] : memref<32x49xf32, #tpu.memory_space<vmem>>, vector<32x1xf32>
    %58 = vector.broadcast %57 : vector<32x1xf32> to vector<32x256xf32>
    %59 = arith.mulf %56, %58 : vector<32x256xf32>
    %60 = arith.addf %55, %59 : vector<32x256xf32>
    %c0_32 = arith.constant 0 : index
    %c65 = arith.constant 65 : index
    %61 = vector.load %arg13[%c0_32, %c65] : memref<32x358xf32, #tpu.memory_space<vmem>>, vector<32x256xf32>
    %c0_33 = arith.constant 0 : index
    %c29 = arith.constant 29 : index
    %62 = vector.load %arg3[%c0_33, %c29] : memref<32x49xf32, #tpu.memory_space<vmem>>, vector<32x1xf32>
    %63 = vector.broadcast %62 : vector<32x1xf32> to vector<32x256xf32>
    %64 = arith.mulf %61, %63 : vector<32x256xf32>
    %65 = arith.addf %60, %64 : vector<32x256xf32>
    %c0_34 = arith.constant 0 : index
    %c81 = arith.constant 81 : index
    %66 = vector.load %arg13[%c0_34, %c81] : memref<32x358xf32, #tpu.memory_space<vmem>>, vector<32x256xf32>
    %c0_35 = arith.constant 0 : index
    %c36 = arith.constant 36 : index
    %67 = vector.load %arg3[%c0_35, %c36] : memref<32x49xf32, #tpu.memory_space<vmem>>, vector<32x1xf32>
    %68 = vector.broadcast %67 : vector<32x1xf32> to vector<32x256xf32>
    %69 = arith.mulf %66, %68 : vector<32x256xf32>
    %70 = arith.addf %65, %69 : vector<32x256xf32>
    %c0_36 = arith.constant 0 : index
    %c97 = arith.constant 97 : index
    %71 = vector.load %arg13[%c0_36, %c97] : memref<32x358xf32, #tpu.memory_space<vmem>>, vector<32x256xf32>
    %c0_37 = arith.constant 0 : index
    %c43 = arith.constant 43 : index
    %72 = vector.load %arg3[%c0_37, %c43] : memref<32x49xf32, #tpu.memory_space<vmem>>, vector<32x1xf32>
    %73 = vector.broadcast %72 : vector<32x1xf32> to vector<32x256xf32>
    %74 = arith.mulf %71, %73 : vector<32x256xf32>
    %75 = arith.addf %70, %74 : vector<32x256xf32>
    %c1_38 = arith.constant 1 : index
    %c0_39 = arith.constant 0 : index
    %76 = vector.load %arg2[%c1_38, %c0_39] : memref<7x256xf32, #tpu.memory_space<vmem>>, vector<1x256xf32>
    %77 = vector.broadcast %76 : vector<1x256xf32> to vector<32x256xf32>
    %78 = arith.mulf %75, %77 : vector<32x256xf32>
    %79 = arith.addf %41, %78 : vector<32x256xf32>
    %c0_40 = arith.constant 0 : index
    %c2 = arith.constant 2 : index
    %80 = vector.load %arg13[%c0_40, %c2] : memref<32x358xf32, #tpu.memory_space<vmem>>, vector<32x256xf32>
    %c0_41 = arith.constant 0 : index
    %c2_42 = arith.constant 2 : index
    %81 = vector.load %arg3[%c0_41, %c2_42] : memref<32x49xf32, #tpu.memory_space<vmem>>, vector<32x1xf32>
    %82 = vector.broadcast %81 : vector<32x1xf32> to vector<32x256xf32>
    %83 = arith.mulf %80, %82 : vector<32x256xf32>
    %c0_43 = arith.constant 0 : index
    %c18 = arith.constant 18 : index
    %84 = vector.load %arg13[%c0_43, %c18] : memref<32x358xf32, #tpu.memory_space<vmem>>, vector<32x256xf32>
    %c0_44 = arith.constant 0 : index
    %c9 = arith.constant 9 : index
    %85 = vector.load %arg3[%c0_44, %c9] : memref<32x49xf32, #tpu.memory_space<vmem>>, vector<32x1xf32>
    %86 = vector.broadcast %85 : vector<32x1xf32> to vector<32x256xf32>
    %87 = arith.mulf %84, %86 : vector<32x256xf32>
    %88 = arith.addf %83, %87 : vector<32x256xf32>
    %c0_45 = arith.constant 0 : index
    %c34 = arith.constant 34 : index
    %89 = vector.load %arg13[%c0_45, %c34] : memref<32x358xf32, #tpu.memory_space<vmem>>, vector<32x256xf32>
    %c0_46 = arith.constant 0 : index
    %c16_47 = arith.constant 16 : index
    %90 = vector.load %arg3[%c0_46, %c16_47] : memref<32x49xf32, #tpu.memory_space<vmem>>, vector<32x1xf32>
    %91 = vector.broadcast %90 : vector<32x1xf32> to vector<32x256xf32>
    %92 = arith.mulf %89, %91 : vector<32x256xf32>
    %93 = arith.addf %88, %92 : vector<32x256xf32>
    %c0_48 = arith.constant 0 : index
    %c50 = arith.constant 50 : index
    %94 = vector.load %arg13[%c0_48, %c50] : memref<32x358xf32, #tpu.memory_space<vmem>>, vector<32x256xf32>
    %c0_49 = arith.constant 0 : index
    %c23 = arith.constant 23 : index
    %95 = vector.load %arg3[%c0_49, %c23] : memref<32x49xf32, #tpu.memory_space<vmem>>, vector<32x1xf32>
    %96 = vector.broadcast %95 : vector<32x1xf32> to vector<32x256xf32>
    %97 = arith.mulf %94, %96 : vector<32x256xf32>
    %98 = arith.addf %93, %97 : vector<32x256xf32>
    %c0_50 = arith.constant 0 : index
    %c66 = arith.constant 66 : index
    %99 = vector.load %arg13[%c0_50, %c66] : memref<32x358xf32, #tpu.memory_space<vmem>>, vector<32x256xf32>
    %c0_51 = arith.constant 0 : index
    %c30 = arith.constant 30 : index
    %100 = vector.load %arg3[%c0_51, %c30] : memref<32x49xf32, #tpu.memory_space<vmem>>, vector<32x1xf32>
    %101 = vector.broadcast %100 : vector<32x1xf32> to vector<32x256xf32>
    %102 = arith.mulf %99, %101 : vector<32x256xf32>
    %103 = arith.addf %98, %102 : vector<32x256xf32>
    %c0_52 = arith.constant 0 : index
    %c82 = arith.constant 82 : index
    %104 = vector.load %arg13[%c0_52, %c82] : memref<32x358xf32, #tpu.memory_space<vmem>>, vector<32x256xf32>
    %c0_53 = arith.constant 0 : index
    %c37 = arith.constant 37 : index
    %105 = vector.load %arg3[%c0_53, %c37] : memref<32x49xf32, #tpu.memory_space<vmem>>, vector<32x1xf32>
    %106 = vector.broadcast %105 : vector<32x1xf32> to vector<32x256xf32>
    %107 = arith.mulf %104, %106 : vector<32x256xf32>
    %108 = arith.addf %103, %107 : vector<32x256xf32>
    %c0_54 = arith.constant 0 : index
    %c98 = arith.constant 98 : index
    %109 = vector.load %arg13[%c0_54, %c98] : memref<32x358xf32, #tpu.memory_space<vmem>>, vector<32x256xf32>
    %c0_55 = arith.constant 0 : index
    %c44 = arith.constant 44 : index
    %110 = vector.load %arg3[%c0_55, %c44] : memref<32x49xf32, #tpu.memory_space<vmem>>, vector<32x1xf32>
    %111 = vector.broadcast %110 : vector<32x1xf32> to vector<32x256xf32>
    %112 = arith.mulf %109, %111 : vector<32x256xf32>
    %113 = arith.addf %108, %112 : vector<32x256xf32>
    %c2_56 = arith.constant 2 : index
    %c0_57 = arith.constant 0 : index
    %114 = vector.load %arg2[%c2_56, %c0_57] : memref<7x256xf32, #tpu.memory_space<vmem>>, vector<1x256xf32>
    %115 = vector.broadcast %114 : vector<1x256xf32> to vector<32x256xf32>
    %116 = arith.mulf %113, %115 : vector<32x256xf32>
    %117 = arith.addf %79, %116 : vector<32x256xf32>
    %c0_58 = arith.constant 0 : index
    %c3 = arith.constant 3 : index
    %118 = vector.load %arg13[%c0_58, %c3] : memref<32x358xf32, #tpu.memory_space<vmem>>, vector<32x256xf32>
    %c0_59 = arith.constant 0 : index
    %c3_60 = arith.constant 3 : index
    %119 = vector.load %arg3[%c0_59, %c3_60] : memref<32x49xf32, #tpu.memory_space<vmem>>, vector<32x1xf32>
    %120 = vector.broadcast %119 : vector<32x1xf32> to vector<32x256xf32>
    %121 = arith.mulf %118, %120 : vector<32x256xf32>
    %c0_61 = arith.constant 0 : index
    %c19 = arith.constant 19 : index
    %122 = vector.load %arg13[%c0_61, %c19] : memref<32x358xf32, #tpu.memory_space<vmem>>, vector<32x256xf32>
    %c0_62 = arith.constant 0 : index
    %c10 = arith.constant 10 : index
    %123 = vector.load %arg3[%c0_62, %c10] : memref<32x49xf32, #tpu.memory_space<vmem>>, vector<32x1xf32>
    %124 = vector.broadcast %123 : vector<32x1xf32> to vector<32x256xf32>
    %125 = arith.mulf %122, %124 : vector<32x256xf32>
    %126 = arith.addf %121, %125 : vector<32x256xf32>
    %c0_63 = arith.constant 0 : index
    %c35_64 = arith.constant 35 : index
    %127 = vector.load %arg13[%c0_63, %c35_64] : memref<32x358xf32, #tpu.memory_space<vmem>>, vector<32x256xf32>
    %c0_65 = arith.constant 0 : index
    %c17_66 = arith.constant 17 : index
    %128 = vector.load %arg3[%c0_65, %c17_66] : memref<32x49xf32, #tpu.memory_space<vmem>>, vector<32x1xf32>
    %129 = vector.broadcast %128 : vector<32x1xf32> to vector<32x256xf32>
    %130 = arith.mulf %127, %129 : vector<32x256xf32>
    %131 = arith.addf %126, %130 : vector<32x256xf32>
    %c0_67 = arith.constant 0 : index
    %c51_68 = arith.constant 51 : index
    %132 = vector.load %arg13[%c0_67, %c51_68] : memref<32x358xf32, #tpu.memory_space<vmem>>, vector<32x256xf32>
    %c0_69 = arith.constant 0 : index
    %c24 = arith.constant 24 : index
    %133 = vector.load %arg3[%c0_69, %c24] : memref<32x49xf32, #tpu.memory_space<vmem>>, vector<32x1xf32>
    %134 = vector.broadcast %133 : vector<32x1xf32> to vector<32x256xf32>
    %135 = arith.mulf %132, %134 : vector<32x256xf32>
    %136 = arith.addf %131, %135 : vector<32x256xf32>
    %c0_70 = arith.constant 0 : index
    %c67 = arith.constant 67 : index
    %137 = vector.load %arg13[%c0_70, %c67] : memref<32x358xf32, #tpu.memory_space<vmem>>, vector<32x256xf32>
    %c0_71 = arith.constant 0 : index
    %c31 = arith.constant 31 : index
    %138 = vector.load %arg3[%c0_71, %c31] : memref<32x49xf32, #tpu.memory_space<vmem>>, vector<32x1xf32>
    %139 = vector.broadcast %138 : vector<32x1xf32> to vector<32x256xf32>
    %140 = arith.mulf %137, %139 : vector<32x256xf32>
    %141 = arith.addf %136, %140 : vector<32x256xf32>
    %c0_72 = arith.constant 0 : index
    %c83 = arith.constant 83 : index
    %142 = vector.load %arg13[%c0_72, %c83] : memref<32x358xf32, #tpu.memory_space<vmem>>, vector<32x256xf32>
    %c0_73 = arith.constant 0 : index
    %c38 = arith.constant 38 : index
    %143 = vector.load %arg3[%c0_73, %c38] : memref<32x49xf32, #tpu.memory_space<vmem>>, vector<32x1xf32>
    %144 = vector.broadcast %143 : vector<32x1xf32> to vector<32x256xf32>
    %145 = arith.mulf %142, %144 : vector<32x256xf32>
    %146 = arith.addf %141, %145 : vector<32x256xf32>
    %c0_74 = arith.constant 0 : index
    %c99 = arith.constant 99 : index
    %147 = vector.load %arg13[%c0_74, %c99] : memref<32x358xf32, #tpu.memory_space<vmem>>, vector<32x256xf32>
    %c0_75 = arith.constant 0 : index
    %c45 = arith.constant 45 : index
    %148 = vector.load %arg3[%c0_75, %c45] : memref<32x49xf32, #tpu.memory_space<vmem>>, vector<32x1xf32>
    %149 = vector.broadcast %148 : vector<32x1xf32> to vector<32x256xf32>
    %150 = arith.mulf %147, %149 : vector<32x256xf32>
    %151 = arith.addf %146, %150 : vector<32x256xf32>
    %152 = arith.addf %117, %151 : vector<32x256xf32>
    %c0_76 = arith.constant 0 : index
    %c4 = arith.constant 4 : index
    %153 = vector.load %arg13[%c0_76, %c4] : memref<32x358xf32, #tpu.memory_space<vmem>>, vector<32x256xf32>
    %c0_77 = arith.constant 0 : index
    %c4_78 = arith.constant 4 : index
    %154 = vector.load %arg3[%c0_77, %c4_78] : memref<32x49xf32, #tpu.memory_space<vmem>>, vector<32x1xf32>
    %155 = vector.broadcast %154 : vector<32x1xf32> to vector<32x256xf32>
    %156 = arith.mulf %153, %155 : vector<32x256xf32>
    %c0_79 = arith.constant 0 : index
    %c20 = arith.constant 20 : index
    %157 = vector.load %arg13[%c0_79, %c20] : memref<32x358xf32, #tpu.memory_space<vmem>>, vector<32x256xf32>
    %c0_80 = arith.constant 0 : index
    %c11 = arith.constant 11 : index
    %158 = vector.load %arg3[%c0_80, %c11] : memref<32x49xf32, #tpu.memory_space<vmem>>, vector<32x1xf32>
    %159 = vector.broadcast %158 : vector<32x1xf32> to vector<32x256xf32>
    %160 = arith.mulf %157, %159 : vector<32x256xf32>
    %161 = arith.addf %156, %160 : vector<32x256xf32>
    %c0_81 = arith.constant 0 : index
    %c36_82 = arith.constant 36 : index
    %162 = vector.load %arg13[%c0_81, %c36_82] : memref<32x358xf32, #tpu.memory_space<vmem>>, vector<32x256xf32>
    %c0_83 = arith.constant 0 : index
    %c18_84 = arith.constant 18 : index
    %163 = vector.load %arg3[%c0_83, %c18_84] : memref<32x49xf32, #tpu.memory_space<vmem>>, vector<32x1xf32>
    %164 = vector.broadcast %163 : vector<32x1xf32> to vector<32x256xf32>
    %165 = arith.mulf %162, %164 : vector<32x256xf32>
    %166 = arith.addf %161, %165 : vector<32x256xf32>
    %c0_85 = arith.constant 0 : index
    %c52 = arith.constant 52 : index
    %167 = vector.load %arg13[%c0_85, %c52] : memref<32x358xf32, #tpu.memory_space<vmem>>, vector<32x256xf32>
    %c0_86 = arith.constant 0 : index
    %c25 = arith.constant 25 : index
    %168 = vector.load %arg3[%c0_86, %c25] : memref<32x49xf32, #tpu.memory_space<vmem>>, vector<32x1xf32>
    %169 = vector.broadcast %168 : vector<32x1xf32> to vector<32x256xf32>
    %170 = arith.mulf %167, %169 : vector<32x256xf32>
    %171 = arith.addf %166, %170 : vector<32x256xf32>
    %c0_87 = arith.constant 0 : index
    %c68 = arith.constant 68 : index
    %172 = vector.load %arg13[%c0_87, %c68] : memref<32x358xf32, #tpu.memory_space<vmem>>, vector<32x256xf32>
    %c0_88 = arith.constant 0 : index
    %c32_89 = arith.constant 32 : index
    %173 = vector.load %arg3[%c0_88, %c32_89] : memref<32x49xf32, #tpu.memory_space<vmem>>, vector<32x1xf32>
    %174 = vector.broadcast %173 : vector<32x1xf32> to vector<32x256xf32>
    %175 = arith.mulf %172, %174 : vector<32x256xf32>
    %176 = arith.addf %171, %175 : vector<32x256xf32>
    %c0_90 = arith.constant 0 : index
    %c84 = arith.constant 84 : index
    %177 = vector.load %arg13[%c0_90, %c84] : memref<32x358xf32, #tpu.memory_space<vmem>>, vector<32x256xf32>
    %c0_91 = arith.constant 0 : index
    %c39 = arith.constant 39 : index
    %178 = vector.load %arg3[%c0_91, %c39] : memref<32x49xf32, #tpu.memory_space<vmem>>, vector<32x1xf32>
    %179 = vector.broadcast %178 : vector<32x1xf32> to vector<32x256xf32>
    %180 = arith.mulf %177, %179 : vector<32x256xf32>
    %181 = arith.addf %176, %180 : vector<32x256xf32>
    %c0_92 = arith.constant 0 : index
    %c100 = arith.constant 100 : index
    %182 = vector.load %arg13[%c0_92, %c100] : memref<32x358xf32, #tpu.memory_space<vmem>>, vector<32x256xf32>
    %c0_93 = arith.constant 0 : index
    %c46 = arith.constant 46 : index
    %183 = vector.load %arg3[%c0_93, %c46] : memref<32x49xf32, #tpu.memory_space<vmem>>, vector<32x1xf32>
    %184 = vector.broadcast %183 : vector<32x1xf32> to vector<32x256xf32>
    %185 = arith.mulf %182, %184 : vector<32x256xf32>
    %186 = arith.addf %181, %185 : vector<32x256xf32>
    %c4_94 = arith.constant 4 : index
    %c0_95 = arith.constant 0 : index
    %187 = vector.load %arg2[%c4_94, %c0_95] : memref<7x256xf32, #tpu.memory_space<vmem>>, vector<1x256xf32>
    %188 = vector.broadcast %187 : vector<1x256xf32> to vector<32x256xf32>
    %189 = arith.mulf %186, %188 : vector<32x256xf32>
    %190 = arith.addf %152, %189 : vector<32x256xf32>
    %c0_96 = arith.constant 0 : index
    %c5 = arith.constant 5 : index
    %191 = vector.load %arg13[%c0_96, %c5] : memref<32x358xf32, #tpu.memory_space<vmem>>, vector<32x256xf32>
    %c0_97 = arith.constant 0 : index
    %c5_98 = arith.constant 5 : index
    %192 = vector.load %arg3[%c0_97, %c5_98] : memref<32x49xf32, #tpu.memory_space<vmem>>, vector<32x1xf32>
    %193 = vector.broadcast %192 : vector<32x1xf32> to vector<32x256xf32>
    %194 = arith.mulf %191, %193 : vector<32x256xf32>
    %c0_99 = arith.constant 0 : index
    %c21_100 = arith.constant 21 : index
    %195 = vector.load %arg13[%c0_99, %c21_100] : memref<32x358xf32, #tpu.memory_space<vmem>>, vector<32x256xf32>
    %c0_101 = arith.constant 0 : index
    %c12 = arith.constant 12 : index
    %196 = vector.load %arg3[%c0_101, %c12] : memref<32x49xf32, #tpu.memory_space<vmem>>, vector<32x1xf32>
    %197 = vector.broadcast %196 : vector<32x1xf32> to vector<32x256xf32>
    %198 = arith.mulf %195, %197 : vector<32x256xf32>
    %199 = arith.addf %194, %198 : vector<32x256xf32>
    %c0_102 = arith.constant 0 : index
    %c37_103 = arith.constant 37 : index
    %200 = vector.load %arg13[%c0_102, %c37_103] : memref<32x358xf32, #tpu.memory_space<vmem>>, vector<32x256xf32>
    %c0_104 = arith.constant 0 : index
    %c19_105 = arith.constant 19 : index
    %201 = vector.load %arg3[%c0_104, %c19_105] : memref<32x49xf32, #tpu.memory_space<vmem>>, vector<32x1xf32>
    %202 = vector.broadcast %201 : vector<32x1xf32> to vector<32x256xf32>
    %203 = arith.mulf %200, %202 : vector<32x256xf32>
    %204 = arith.addf %199, %203 : vector<32x256xf32>
    %c0_106 = arith.constant 0 : index
    %c53 = arith.constant 53 : index
    %205 = vector.load %arg13[%c0_106, %c53] : memref<32x358xf32, #tpu.memory_space<vmem>>, vector<32x256xf32>
    %c0_107 = arith.constant 0 : index
    %c26 = arith.constant 26 : index
    %206 = vector.load %arg3[%c0_107, %c26] : memref<32x49xf32, #tpu.memory_space<vmem>>, vector<32x1xf32>
    %207 = vector.broadcast %206 : vector<32x1xf32> to vector<32x256xf32>
    %208 = arith.mulf %205, %207 : vector<32x256xf32>
    %209 = arith.addf %204, %208 : vector<32x256xf32>
    %c0_108 = arith.constant 0 : index
    %c69 = arith.constant 69 : index
    %210 = vector.load %arg13[%c0_108, %c69] : memref<32x358xf32, #tpu.memory_space<vmem>>, vector<32x256xf32>
    %c0_109 = arith.constant 0 : index
    %c33_110 = arith.constant 33 : index
    %211 = vector.load %arg3[%c0_109, %c33_110] : memref<32x49xf32, #tpu.memory_space<vmem>>, vector<32x1xf32>
    %212 = vector.broadcast %211 : vector<32x1xf32> to vector<32x256xf32>
    %213 = arith.mulf %210, %212 : vector<32x256xf32>
    %214 = arith.addf %209, %213 : vector<32x256xf32>
    %c0_111 = arith.constant 0 : index
    %c85 = arith.constant 85 : index
    %215 = vector.load %arg13[%c0_111, %c85] : memref<32x358xf32, #tpu.memory_space<vmem>>, vector<32x256xf32>
    %c0_112 = arith.constant 0 : index
    %c40 = arith.constant 40 : index
    %216 = vector.load %arg3[%c0_112, %c40] : memref<32x49xf32, #tpu.memory_space<vmem>>, vector<32x1xf32>
    %217 = vector.broadcast %216 : vector<32x1xf32> to vector<32x256xf32>
    %218 = arith.mulf %215, %217 : vector<32x256xf32>
    %219 = arith.addf %214, %218 : vector<32x256xf32>
    %c0_113 = arith.constant 0 : index
    %c101 = arith.constant 101 : index
    %220 = vector.load %arg13[%c0_113, %c101] : memref<32x358xf32, #tpu.memory_space<vmem>>, vector<32x256xf32>
    %c0_114 = arith.constant 0 : index
    %c47 = arith.constant 47 : index
    %221 = vector.load %arg3[%c0_114, %c47] : memref<32x49xf32, #tpu.memory_space<vmem>>, vector<32x1xf32>
    %222 = vector.broadcast %221 : vector<32x1xf32> to vector<32x256xf32>
    %223 = arith.mulf %220, %222 : vector<32x256xf32>
    %224 = arith.addf %219, %223 : vector<32x256xf32>
    %c5_115 = arith.constant 5 : index
    %c0_116 = arith.constant 0 : index
    %225 = vector.load %arg2[%c5_115, %c0_116] : memref<7x256xf32, #tpu.memory_space<vmem>>, vector<1x256xf32>
    %226 = vector.broadcast %225 : vector<1x256xf32> to vector<32x256xf32>
    %227 = arith.mulf %224, %226 : vector<32x256xf32>
    %228 = arith.addf %190, %227 : vector<32x256xf32>
    %c0_117 = arith.constant 0 : index
    %c6 = arith.constant 6 : index
    %229 = vector.load %arg13[%c0_117, %c6] : memref<32x358xf32, #tpu.memory_space<vmem>>, vector<32x256xf32>
    %c0_118 = arith.constant 0 : index
    %c6_119 = arith.constant 6 : index
    %230 = vector.load %arg3[%c0_118, %c6_119] : memref<32x49xf32, #tpu.memory_space<vmem>>, vector<32x1xf32>
    %231 = vector.broadcast %230 : vector<32x1xf32> to vector<32x256xf32>
    %232 = arith.mulf %229, %231 : vector<32x256xf32>
    %c0_120 = arith.constant 0 : index
    %c22_121 = arith.constant 22 : index
    %233 = vector.load %arg13[%c0_120, %c22_121] : memref<32x358xf32, #tpu.memory_space<vmem>>, vector<32x256xf32>
    %c0_122 = arith.constant 0 : index
    %c13 = arith.constant 13 : index
    %234 = vector.load %arg3[%c0_122, %c13] : memref<32x49xf32, #tpu.memory_space<vmem>>, vector<32x1xf32>
    %235 = vector.broadcast %234 : vector<32x1xf32> to vector<32x256xf32>
    %236 = arith.mulf %233, %235 : vector<32x256xf32>
    %237 = arith.addf %232, %236 : vector<32x256xf32>
    %c0_123 = arith.constant 0 : index
    %c38_124 = arith.constant 38 : index
    %238 = vector.load %arg13[%c0_123, %c38_124] : memref<32x358xf32, #tpu.memory_space<vmem>>, vector<32x256xf32>
    %c0_125 = arith.constant 0 : index
    %c20_126 = arith.constant 20 : index
    %239 = vector.load %arg3[%c0_125, %c20_126] : memref<32x49xf32, #tpu.memory_space<vmem>>, vector<32x1xf32>
    %240 = vector.broadcast %239 : vector<32x1xf32> to vector<32x256xf32>
    %241 = arith.mulf %238, %240 : vector<32x256xf32>
    %242 = arith.addf %237, %241 : vector<32x256xf32>
    %c0_127 = arith.constant 0 : index
    %c54 = arith.constant 54 : index
    %243 = vector.load %arg13[%c0_127, %c54] : memref<32x358xf32, #tpu.memory_space<vmem>>, vector<32x256xf32>
    %c0_128 = arith.constant 0 : index
    %c27 = arith.constant 27 : index
    %244 = vector.load %arg3[%c0_128, %c27] : memref<32x49xf32, #tpu.memory_space<vmem>>, vector<32x1xf32>
    %245 = vector.broadcast %244 : vector<32x1xf32> to vector<32x256xf32>
    %246 = arith.mulf %243, %245 : vector<32x256xf32>
    %247 = arith.addf %242, %246 : vector<32x256xf32>
    %c0_129 = arith.constant 0 : index
    %c70 = arith.constant 70 : index
    %248 = vector.load %arg13[%c0_129, %c70] : memref<32x358xf32, #tpu.memory_space<vmem>>, vector<32x256xf32>
    %c0_130 = arith.constant 0 : index
    %c34_131 = arith.constant 34 : index
    %249 = vector.load %arg3[%c0_130, %c34_131] : memref<32x49xf32, #tpu.memory_space<vmem>>, vector<32x1xf32>
    %250 = vector.broadcast %249 : vector<32x1xf32> to vector<32x256xf32>
    %251 = arith.mulf %248, %250 : vector<32x256xf32>
    %252 = arith.addf %247, %251 : vector<32x256xf32>
    %c0_132 = arith.constant 0 : index
    %c86 = arith.constant 86 : index
    %253 = vector.load %arg13[%c0_132, %c86] : memref<32x358xf32, #tpu.memory_space<vmem>>, vector<32x256xf32>
    %c0_133 = arith.constant 0 : index
    %c41 = arith.constant 41 : index
    %254 = vector.load %arg3[%c0_133, %c41] : memref<32x49xf32, #tpu.memory_space<vmem>>, vector<32x1xf32>
    %255 = vector.broadcast %254 : vector<32x1xf32> to vector<32x256xf32>
    %256 = arith.mulf %253, %255 : vector<32x256xf32>
    %257 = arith.addf %252, %256 : vector<32x256xf32>
    %c0_134 = arith.constant 0 : index
    %c102 = arith.constant 102 : index
    %258 = vector.load %arg13[%c0_134, %c102] : memref<32x358xf32, #tpu.memory_space<vmem>>, vector<32x256xf32>
    %c0_135 = arith.constant 0 : index
    %c48_136 = arith.constant 48 : index
    %259 = vector.load %arg3[%c0_135, %c48_136] : memref<32x49xf32, #tpu.memory_space<vmem>>, vector<32x1xf32>
    %260 = vector.broadcast %259 : vector<32x1xf32> to vector<32x256xf32>
    %261 = arith.mulf %258, %260 : vector<32x256xf32>
    %262 = arith.addf %257, %261 : vector<32x256xf32>
    %c6_137 = arith.constant 6 : index
    %c0_138 = arith.constant 0 : index
    %263 = vector.load %arg2[%c6_137, %c0_138] : memref<7x256xf32, #tpu.memory_space<vmem>>, vector<1x256xf32>
    %264 = vector.broadcast %263 : vector<1x256xf32> to vector<32x256xf32>
    %265 = arith.mulf %262, %264 : vector<32x256xf32>
    %266 = arith.addf %228, %265 : vector<32x256xf32>
    %c0_139 = arith.constant 0 : index
    %c0_140 = arith.constant 0 : index
    %267 = vector.load %arg4[%c0_139, %c0_140] : memref<32x1xf32, #tpu.memory_space<vmem>>, vector<32x1xf32>
    %268 = vector.broadcast %267 : vector<32x1xf32> to vector<32x256xf32>
    %269 = arith.addf %266, %268 : vector<32x256xf32>
    %cst_141 = arith.constant dense<0.000000e+00> : vector<256xf32>
    %270 = vector.multi_reduction <add>, %269, %cst_141 [0] : vector<32x256xf32> to vector<256xf32>
    %271 = vector.shape_cast %270 : vector<256xf32> to vector<1x256xf32>
    %cst_142 = arith.constant 3.200000e+01 : f32
    %272 = vector.broadcast %cst_142 : f32 to vector<1x256xf32>
    %273 = arith.divf %271, %272 : vector<1x256xf32>
    %274 = vector.broadcast %273 : vector<1x256xf32> to vector<32x256xf32>
    %275 = arith.subf %269, %274 : vector<32x256xf32>
    %276 = arith.mulf %275, %275 : vector<32x256xf32>
    %cst_143 = arith.constant dense<0.000000e+00> : vector<256xf32>
    %277 = vector.multi_reduction <add>, %276, %cst_143 [0] : vector<32x256xf32> to vector<256xf32>
    %278 = vector.shape_cast %277 : vector<256xf32> to vector<1x256xf32>
    %cst_144 = arith.constant 3.200000e+01 : f32
    %279 = vector.broadcast %cst_144 : f32 to vector<1x256xf32>
    %280 = arith.divf %278, %279 : vector<1x256xf32>
    %cst_145 = arith.constant 9.99999997E-7 : f32
    %281 = vector.broadcast %cst_145 : f32 to vector<1x256xf32>
    %282 = arith.addf %280, %281 : vector<1x256xf32>
    %283 = math.rsqrt %282 : vector<1x256xf32>
    %284 = vector.broadcast %283 : vector<1x256xf32> to vector<32x256xf32>
    %285 = arith.mulf %275, %284 : vector<32x256xf32>
    %c0_146 = arith.constant 0 : index
    %c0_147 = arith.constant 0 : index
    %286 = vector.load %arg5[%c0_146, %c0_147] : memref<32x1xf32, #tpu.memory_space<vmem>>, vector<32x1xf32>
    %287 = vector.broadcast %286 : vector<32x1xf32> to vector<32x256xf32>
    %288 = arith.mulf %285, %287 : vector<32x256xf32>
    %c0_148 = arith.constant 0 : index
    %c0_149 = arith.constant 0 : index
    %289 = vector.load %arg6[%c0_148, %c0_149] : memref<32x1xf32, #tpu.memory_space<vmem>>, vector<32x1xf32>
    %290 = vector.broadcast %289 : vector<32x1xf32> to vector<32x256xf32>
    %291 = arith.addf %288, %290 : vector<32x256xf32>
    %c0_150 = arith.constant 0 : index
    %c0_151 = arith.constant 0 : index
    %292 = vector.load %arg7[%c0_150, %c0_151] : memref<128x32xf32, #tpu.memory_space<vmem>>, vector<128x32xf32>
    %cst_152 = arith.constant dense<0.000000e+00> : vector<128x256xf32>
    %293 = tpu.matmul %292, %291, %cst_152 {dimension_numbers = #tpu.dot_dimension_numbers<[1], [0], [0], [1], [0, 0, 1, 1], [], []>} : vector<128x32xf32>, vector<32x256xf32>, vector<128x256xf32> -> vector<128x256xf32>
    %c0_153 = arith.constant 0 : index
    %c0_154 = arith.constant 0 : index
    %294 = vector.load %arg8[%c0_153, %c0_154] : memref<128x1xf32, #tpu.memory_space<vmem>>, vector<128x1xf32>
    %295 = vector.broadcast %294 : vector<128x1xf32> to vector<128x256xf32>
    %296 = arith.addf %293, %295 : vector<128x256xf32>
    %cst_155 = arith.constant 5.000000e-01 : f32
    %297 = vector.broadcast %cst_155 : f32 to vector<128x256xf32>
    %298 = arith.mulf %297, %296 : vector<128x256xf32>
    %cst_156 = arith.constant 0.707106769 : f32
    %299 = vector.broadcast %cst_156 : f32 to vector<128x256xf32>
    %300 = arith.mulf %296, %299 : vector<128x256xf32>
    %301 = math.erf %300 : vector<128x256xf32>
    %cst_157 = arith.constant 1.000000e+00 : f32
    %302 = vector.broadcast %cst_157 : f32 to vector<128x256xf32>
    %303 = arith.addf %302, %301 : vector<128x256xf32>
    %304 = arith.mulf %298, %303 : vector<128x256xf32>
    %c0_158 = arith.constant 0 : index
    %c0_159 = arith.constant 0 : index
    %305 = vector.load %arg9[%c0_158, %c0_159] : memref<32x128xf32, #tpu.memory_space<vmem>>, vector<32x128xf32>
    %cst_160 = arith.constant dense<0.000000e+00> : vector<32x256xf32>
    %306 = tpu.matmul %305, %304, %cst_160 {dimension_numbers = #tpu.dot_dimension_numbers<[1], [0], [0], [1], [0, 0, 1, 1], [], []>} : vector<32x128xf32>, vector<128x256xf32>, vector<32x256xf32> -> vector<32x256xf32>
    %c0_161 = arith.constant 0 : index
    %c0_162 = arith.constant 0 : index
    %307 = vector.load %arg10[%c0_161, %c0_162] : memref<32x1xf32, #tpu.memory_space<vmem>>, vector<32x1xf32>
    %308 = vector.broadcast %307 : vector<32x1xf32> to vector<32x256xf32>
    %309 = arith.addf %306, %308 : vector<32x256xf32>
    %c0_163 = arith.constant 0 : index
    %c0_164 = arith.constant 0 : index
    %c0_165 = arith.constant 0 : index
    %310 = vector.load %arg1[%c0_163, %c0_164, %c0_165] : memref<1x32x256xf32, #tpu.memory_space<vmem>>, vector<1x32x256xf32>
    %311 = vector.shape_cast %310 : vector<1x32x256xf32> to vector<32x256xf32>
    %c0_166 = arith.constant 0 : index
    %c0_167 = arith.constant 0 : index
    %312 = vector.load %arg11[%c0_166, %c0_167] : memref<32x1xf32, #tpu.memory_space<vmem>>, vector<32x1xf32>
    %313 = vector.broadcast %312 : vector<32x1xf32> to vector<32x256xf32>
    %314 = arith.mulf %309, %313 : vector<32x256xf32>
    %315 = arith.addf %311, %314 : vector<32x256xf32>
    %c0_168 = arith.constant 0 : index
    %c0_169 = arith.constant 0 : index
    %c0_170 = arith.constant 0 : index
    %316 = vector.load %arg12[%c0_168, %c0_169, %c0_170] : memref<1x32x256xf32, #tpu.memory_space<vmem>>, vector<1x32x256xf32>
    %317 = vector.shape_cast %316 : vector<1x32x256xf32> to vector<32x256xf32>
    %318 = vector.shape_cast %315 : vector<32x256xf32> to vector<1x32x256xf32>
    tpu.vector_store %arg12[%c0_168, %c0_169, %c0_170], %318 {strides = array<i32>} : memref<1x32x256xf32, #tpu.memory_space<vmem>>, vector<1x32x256xf32>,
    return
  }
  func.func @transform_0(%arg0: i32) -> (i32, i32, i32) {
    %c0_i32 = arith.constant 0 : i32
    %c0_i32_0 = arith.constant 0 : i32
    %c0_i32_1 = arith.constant 0 : i32
    return %arg0, %c0_i32, %c0_i32_0 : i32, i32, i32
  }
  func.func @transform_1(%arg0: i32) -> (i32, i32) {
    %c0_i32 = arith.constant 0 : i32
    %c0_i32_0 = arith.constant 0 : i32
    %c0_i32_1 = arith.constant 0 : i32
    return %c0_i32, %c0_i32_0 : i32, i32
  }
  func.func @transform_2(%arg0: i32) -> (i32, i32) {
    %c0_i32 = arith.constant 0 : i32
    %c0_i32_0 = arith.constant 0 : i32
    %c0_i32_1 = arith.constant 0 : i32
    return %c0_i32, %c0_i32_0 : i32, i32
  }
  func.func @transform_3(%arg0: i32) -> (i32, i32) {
    %c0_i32 = arith.constant 0 : i32
    %c0_i32_0 = arith.constant 0 : i32
    %c0_i32_1 = arith.constant 0 : i32
    return %c0_i32, %c0_i32_0 : i32, i32
  }
  func.func @transform_4(%arg0: i32) -> (i32, i32) {
    %c0_i32 = arith.constant 0 : i32
    %c0_i32_0 = arith.constant 0 : i32
    %c0_i32_1 = arith.constant 0 : i32
    return %c0_i32, %c0_i32_0 : i32, i32
  }
  func.func @transform_5(%arg0: i32) -> (i32, i32) {
    %c0_i32 = arith.constant 0 : i32
    %c0_i32_0 = arith.constant 0 : i32
    %c0_i32_1 = arith.constant 0 : i32
    return %c0_i32, %c0_i32_0 : i32, i32
  }
  func.func @transform_6(%arg0: i32) -> (i32, i32) {
    %c0_i32 = arith.constant 0 : i32
    %c0_i32_0 = arith.constant 0 : i32
    %c0_i32_1 = arith.constant 0 : i32
    return %c0_i32, %c0_i32_0 : i32, i32
  }
  func.func @transform_7(%arg0: i32) -> (i32, i32) {
    %c0_i32 = arith.constant 0 : i32
    %c0_i32_0 = arith.constant 0 : i32
    %c0_i32_1 = arith.constant 0 : i32
    return %c0_i32, %c0_i32_0 : i32, i32
  }
  func.func @transform_8(%arg0: i32) -> (i32, i32) {
    %c0_i32 = arith.constant 0 : i32
    %c0_i32_0 = arith.constant 0 : i32
    %c0_i32_1 = arith.constant 0 : i32
    return %c0_i32, %c0_i32_0 : i32, i32
  }
  func.func @transform_9(%arg0: i32) -> (i32, i32) {
    %c0_i32 = arith.constant 0 : i32
    %c0_i32_0 = arith.constant 0 : i32
    %c0_i32_1 = arith.constant 0 : i32
    return %c0_i32, %c0_i32_0 : i32, i32
  }
  func.func @transform_10(%arg0: i32) -> (i32, i32) {
    %c0_i32 = arith.constant 0 : i32
    %c0_i32_0 = arith.constant 0 : i32
    %c0_i32_1 = arith.constant 0 : i32
    return %c0_i32, %c0_i32_0 : i32, i32
  }
  func.func @transform_11(%arg0: i32) -> (i32, i32, i32) {
    %c0_i32 = arith.constant 0 : i32
    %c0_i32_0 = arith.constant 0 : i32
    %c0_i32_1 = arith.constant 0 : i32
    return %arg0, %c0_i32, %c0_i32_0 : i32, i32, i32
  }
}

</mosaic_0001>

<llo_original>
// kernel: convnext_block.1
$region0: #{convnext_block.1}
  #allocation0 [shape = 'u32[]', space=smem, size = 0x4, offset = 0x4, fixed_abs, tag = 'smem constant byte address 0x4 - core index']
  #allocation1 [shape = 'u32[144,128]{1,0:T(1,128)}', space=vmem, size = 0x12000, scoped, tag = 'internal scratch']
  #allocation2 [shape = 'f32[32,358]{1,0:T(8,128)}', space=vmem, size = 0xc000, scoped, tag = 'scratch operand']
  %s0 = inlined_call_operand.vmem [shape: f32[2,32,256], index: 0, kind: input, shape index: {}]
  %s1 = inlined_call_operand.vmem [shape: f32[7,256], index: 1, kind: input, shape index: {}]
  %s2 = inlined_call_operand.vmem [shape: f32[32,49], index: 2, kind: input, shape index: {}]
  %s3 = inlined_call_operand.vmem [shape: f32[32,1], index: 3, kind: input, shape index: {}]
  %s4 = inlined_call_operand.vmem [shape: f32[32,1], index: 4, kind: input, shape index: {}]
  %s5 = inlined_call_operand.vmem [shape: f32[32,1], index: 5, kind: input, shape index: {}]
  %s6 = inlined_call_operand.vmem [shape: f32[128,32], index: 6, kind: input, shape index: {}]
  %s7 = inlined_call_operand.vmem [shape: f32[128,1], index: 7, kind: input, shape index: {}]
  %s8 = inlined_call_operand.vmem [shape: f32[32,128], index: 8, kind: input, shape index: {}]
  %s9 = inlined_call_operand.vmem [shape: f32[32,1], index: 9, kind: input, shape index: {}]
  %s10 = inlined_call_operand.vmem [shape: f32[32,1], index: 10, kind: input, shape index: {}]
  %s11 = inlined_call_operand.vmem [shape: f32[2,32,256], index: 11, kind: output, shape index: {}]
  %s12 = sld [smem:[#allocation0]]
  $region77: #{convnext_block.1} parent=0
    _
  %s14 = ssub.s32 1, %s12
  %s15 = scalar_select 0, %s14, %s12
  loop: start=0, step=1, limit=4
  $region2: #{convnext_block.1} parent=0 // loop_pre_header
    _
  $region3: #{convnext_block.1} parent=0 // loop_header
    %s17 = sphi 0, %s21
    %p18 = scmp.ge.s32.totalorder %s17, 4
    %s27 = sphi 0, %s29
    %s30 = sphi 0, %s27
    %s31 = sphi 0, %s30
    %s47 = sphi 0, %s31
    %s51 = sphi 0, %s51
    %s53 = sphi 0, %s51
    %s54 = sphi 0, %s53
    %s68 = sphi 0, %s54
    %s72 = sphi 0, %s72
    %s74 = sphi 0, %s72
    %s75 = sphi 0, %s74
    %s89 = sphi 0, %s75
    %s93 = sphi 0, %s93
    %s95 = sphi 0, %s93
    %s96 = sphi 0, %s95
    %s110 = sphi 0, %s96
    %s114 = sphi 0, %s114
    %s116 = sphi 0, %s114
    %s117 = sphi 0, %s116
    %s131 = sphi 0, %s117
    %s135 = sphi 0, %s135
    %s137 = sphi 0, %s135
    %s138 = sphi 0, %s137
    %s152 = sphi 0, %s138
    %s156 = sphi 0, %s156
    %s158 = sphi 0, %s156
    %s159 = sphi 0, %s158
    %s173 = sphi 0, %s159
    %s177 = sphi 0, %s177
    %s179 = sphi 0, %s177
    %s180 = sphi 0, %s179
    %s194 = sphi 0, %s180
    %s198 = sphi 0, %s198
    %s200 = sphi 0, %s198
    %s201 = sphi 0, %s200
    %s215 = sphi 0, %s201
    %s219 = sphi 0, %s219
    %s221 = sphi 0, %s219
    %s222 = sphi 0, %s221
    %s236 = sphi 0, %s222
    %s240 = sphi 0, %s240
    %s242 = sphi 0, %s240
    %s243 = sphi 0, %s242
    %s257 = sphi 0, %s243
    %s263 = sphi 0, %s265
    %s266 = sphi 0, %s263
    %s267 = sphi 0, %s266
    %s283 = sphi 0, %s267
  $region4: #{convnext_block.1} parent=0 // loop_header_branch
    %20 = sbr.rel (%p18) target = $region8
  $region5: #{convnext_block.1} parent=0 // loop_body
    %s22 = ssub.s32 %s17, 1
    %s23 = ssub.s32 %s17, 2
    %s24 = sadd.s32 %s17, 1
    %s25 = ssub.s32 %s17, %s24
    %p26 = scmp.eq.s32.totalorder %s25, 0
    %s28 = sadd.s32 %s27, 1
    %s29 = scalar_select %p26, %s27, %s28
    %p32 = pneg %p26
    %p33 = scmp.eq.s32.totalorder %s17, 1
    %p34 = por %p32, %p33
    %p35 = scmp.ne.s32.totalorder %s27, %s30
    %p36 = scmp.eq.s32.totalorder %s17, 0
    %p37 = por %p35, %p36
    %p38 = scmp.ne.s32.totalorder %s27, %s30
    %p39 = scmp.eq.s32.totalorder %s22, 1
    %p40 = por %p38, %p39
    %p41 = scmp.ne.s32.totalorder %s30, %s31
    %p42 = scmp.eq.s32.totalorder %s22, 0
    %p43 = por %p41, %p42
    %p44 = scmp.ne.s32.totalorder %s30, %s31
    %p45 = scmp.eq.s32.totalorder %s23, 1
    %p46 = por %p44, %p45
    %p48 = scmp.ne.s32.totalorder %s31, %s47
    %p49 = scmp.eq.s32.totalorder %s23, 0
    %p50 = por %p48, %p49
    %s52 = sadd.s32 %s51, 1
    %p55 = scmp.eq.s32.totalorder %s17, 1
    %p56 = scmp.ne.s32.totalorder %s51, %s53
    %p57 = scmp.eq.s32.totalorder %s17, 0
    %p58 = por %p56, %p57
    %p59 = scmp.ne.s32.totalorder %s51, %s53
    %p60 = scmp.eq.s32.totalorder %s22, 1
    %p61 = por %p59, %p60
    %p62 = scmp.ne.s32.totalorder %s53, %s54
    %p63 = scmp.eq.s32.totalorder %s22, 0
    %p64 = por %p62, %p63
    %p65 = scmp.ne.s32.totalorder %s53, %s54
    %p66 = scmp.eq.s32.totalorder %s23, 1
    %p67 = por %p65, %p66
    %p69 = scmp.ne.s32.totalorder %s54, %s68
    %p70 = scmp.eq.s32.totalorder %s23, 0
    %p71 = por %p69, %p70
    %s73 = sadd.s32 %s72, 1
    %p76 = scmp.eq.s32.totalorder %s17, 1
    %p77 = scmp.ne.s32.totalorder %s72, %s74
    %p78 = scmp.eq.s32.totalorder %s17, 0
    %p79 = por %p77, %p78
    %p80 = scmp.ne.s32.totalorder %s72, %s74
    %p81 = scmp.eq.s32.totalorder %s22, 1
    %p82 = por %p80, %p81
    %p83 = scmp.ne.s32.totalorder %s74, %s75
    %p84 = scmp.eq.s32.totalorder %s22, 0
    %p85 = por %p83, %p84
    %p86 = scmp.ne.s32.totalorder %s74, %s75
    %p87 = scmp.eq.s32.totalorder %s23, 1
    %p88 = por %p86, %p87
    %p90 = scmp.ne.s32.totalorder %s75, %s89
    %p91 = scmp.eq.s32.totalorder %s23, 0
    %p92 = por %p90, %p91
    %s94 = sadd.s32 %s93, 1
    %p97 = scmp.eq.s32.totalorder %s17, 1
    %p98 = scmp.ne.s32.totalorder %s93, %s95
    %p99 = scmp.eq.s32.totalorder %s17, 0
    %p100 = por %p98, %p99
    %p101 = scmp.ne.s32.totalorder %s93, %s95
    %p102 = scmp.eq.s32.totalorder %s22, 1
    %p103 = por %p101, %p102
    %p104 = scmp.ne.s32.totalorder %s95, %s96
    %p105 = scmp.eq.s32.totalorder %s22, 0
    %p106 = por %p104, %p105
    %p107 = scmp.ne.s32.totalorder %s95, %s96
    %p108 = scmp.eq.s32.totalorder %s23, 1
    %p109 = por %p107, %p108
    %p111 = scmp.ne.s32.totalorder %s96, %s110
    %p112 = scmp.eq.s32.totalorder %s23, 0
    %p113 = por %p111, %p112
    %s115 = sadd.s32 %s114, 1
    %p118 = scmp.eq.s32.totalorder %s17, 1
    %p119 = scmp.ne.s32.totalorder %s114, %s116
    %p120 = scmp.eq.s32.totalorder %s17, 0
    %p121 = por %p119, %p120
    %p122 = scmp.ne.s32.totalorder %s114, %s116
    %p123 = scmp.eq.s32.totalorder %s22, 1
    %p124 = por %p122, %p123
    %p125 = scmp.ne.s32.totalorder %s116, %s117
    %p126 = scmp.eq.s32.totalorder %s22, 0
    %p127 = por %p125, %p126
    %p128 = scmp.ne.s32.totalorder %s116, %s117
    %p129 = scmp.eq.s32.totalorder %s23, 1
    %p130 = por %p128, %p129
    %p132 = scmp.ne.s32.totalorder %s117, %s131
    %p133 = scmp.eq.s32.totalorder %s23, 0
    %p134 = por %p132, %p133
    %s136 = sadd.s32 %s135, 1
    %p139 = scmp.eq.s32.totalorder %s17, 1
    %p140 = scmp.ne.s32.totalorder %s135, %s137
    %p141 = scmp.eq.s32.totalorder %s17, 0
    %p142 = por %p140, %p141
    %p143 = scmp.ne.s32.totalorder %s135, %s137
    %p144 = scmp.eq.s32.totalorder %s22, 1
    %p145 = por %p143, %p144
    %p146 = scmp.ne.s32.totalorder %s137, %s138
    %p147 = scmp.eq.s32.totalorder %s22, 0
    %p148 = por %p146, %p147
    %p149 = scmp.ne.s32.totalorder %s137, %s138
    %p150 = scmp.eq.s32.totalorder %s23, 1
    %p151 = por %p149, %p150
    %p153 = scmp.ne.s32.totalorder %s138, %s152
    %p154 = scmp.eq.s32.totalorder %s23, 0
    %p155 = por %p153, %p154
    %s157 = sadd.s32 %s156, 1
    %p160 = scmp.eq.s32.totalorder %s17, 1
    %p161 = scmp.ne.s32.totalorder %s156, %s158
    %p162 = scmp.eq.s32.totalorder %s17, 0
    %p163 = por %p161, %p162
    %p164 = scmp.ne.s32.totalorder %s156, %s158
    %p165 = scmp.eq.s32.totalorder %s22, 1
    %p166 = por %p164, %p165
    %p167 = scmp.ne.s32.totalorder %s158, %s159
    %p168 = scmp.eq.s32.totalorder %s22, 0
    %p169 = por %p167, %p168
    %p170 = scmp.ne.s32.totalorder %s158, %s159
    %p171 = scmp.eq.s32.totalorder %s23, 1
    %p172 = por %p170, %p171
    %p174 = scmp.ne.s32.totalorder %s159, %s173
    %p175 = scmp.eq.s32.totalorder %s23, 0
    %p176 = por %p174, %p175
    %s178 = sadd.s32 %s177, 1
    %p181 = scmp.eq.s32.totalorder %s17, 1
    %p182 = scmp.ne.s32.totalorder %s177, %s179
    %p183 = scmp.eq.s32.totalorder %s17, 0
    %p184 = por %p182, %p183
    %p185 = scmp.ne.s32.totalorder %s177, %s179
    %p186 = scmp.eq.s32.totalorder %s22, 1
    %p187 = por %p185, %p186
    %p188 = scmp.ne.s32.totalorder %s179, %s180
    %p189 = scmp.eq.s32.totalorder %s22, 0
    %p190 = por %p188, %p189
    %p191 = scmp.ne.s32.totalorder %s179, %s180
    %p192 = scmp.eq.s32.totalorder %s23, 1
    %p193 = por %p191, %p192
    %p195 = scmp.ne.s32.totalorder %s180, %s194
    %p196 = scmp.eq.s32.totalorder %s23, 0
    %p197 = por %p195, %p196
    %s199 = sadd.s32 %s198, 1
    %p202 = scmp.eq.s32.totalorder %s17, 1
    %p203 = scmp.ne.s32.totalorder %s198, %s200
    %p204 = scmp.eq.s32.totalorder %s17, 0
    %p205 = por %p203, %p204
    %p206 = scmp.ne.s32.totalorder %s198, %s200
    %p207 = scmp.eq.s32.totalorder %s22, 1
    %p208 = por %p206, %p207
    %p209 = scmp.ne.s32.totalorder %s200, %s201
    %p210 = scmp.eq.s32.totalorder %s22, 0
    %p211 = por %p209, %p210
    %p212 = scmp.ne.s32.totalorder %s200, %s201
    %p213 = scmp.eq.s32.totalorder %s23, 1
    %p214 = por %p212, %p213
    %p216 = scmp.ne.s32.totalorder %s201, %s215
    %p217 = scmp.eq.s32.totalorder %s23, 0
    %p218 = por %p216, %p217
    %s220 = sadd.s32 %s219, 1
    %p223 = scmp.eq.s32.totalorder %s17, 1
    %p224 = scmp.ne.s32.totalorder %s219, %s221
    %p225 = scmp.eq.s32.totalorder %s17, 0
    %p226 = por %p224, %p225
    %p227 = scmp.ne.s32.totalorder %s219, %s221
    %p228 = scmp.eq.s32.totalorder %s22, 1
    %p229 = por %p227, %p228
    %p230 = scmp.ne.s32.totalorder %s221, %s222
    %p231 = scmp.eq.s32.totalorder %s22, 0
    %p232 = por %p230, %p231
    %p233 = scmp.ne.s32.totalorder %s221, %s222
    %p234 = scmp.eq.s32.totalorder %s23, 1
    %p235 = por %p233, %p234
    %p237 = scmp.ne.s32.totalorder %s222, %s236
    %p238 = scmp.eq.s32.totalorder %s23, 0
    %p239 = por %p237, %p238
    %s241 = sadd.s32 %s240, 1
    %p244 = scmp.eq.s32.totalorder %s17, 1
    %p245 = scmp.ne.s32.totalorder %s240, %s242
    %p246 = scmp.eq.s32.totalorder %s17, 0
    %p247 = por %p245, %p246
    %p248 = scmp.ne.s32.totalorder %s240, %s242
    %p249 = scmp.eq.s32.totalorder %s22, 1
    %p250 = por %p248, %p249
    %p251 = scmp.ne.s32.totalorder %s242, %s243
    %p252 = scmp.eq.s32.totalorder %s22, 0
    %p253 = por %p251, %p252
    %p254 = scmp.ne.s32.totalorder %s242, %s243
    %p255 = scmp.eq.s32.totalorder %s23, 1
    %p256 = por %p254, %p255
    %p258 = scmp.ne.s32.totalorder %s243, %s257
    %p259 = scmp.eq.s32.totalorder %s23, 0
    %p260 = por %p258, %p259
    %s261 = ssub.s32 %s17, %s24
    %p262 = scmp.eq.s32.totalorder %s261, 0
    %s264 = sadd.s32 %s263, 1
    %s265 = scalar_select %p262, %s263, %s264
    %p268 = pneg %p262
    %p269 = scmp.eq.s32.totalorder %s17, 1
    %p270 = por %p268, %p269
    %p271 = scmp.ne.s32.totalorder %s263, %s266
    %p272 = scmp.eq.s32.totalorder %s17, 0
    %p273 = por %p271, %p272
    %p274 = scmp.ne.s32.totalorder %s263, %s266
    %p275 = scmp.eq.s32.totalorder %s22, 1
    %p276 = por %p274, %p275
    %p277 = scmp.ne.s32.totalorder %s266, %s267
    %p278 = scmp.eq.s32.totalorder %s22, 0
    %p279 = por %p277, %p278
    %p280 = scmp.ne.s32.totalorder %s266, %s267
    %p281 = scmp.eq.s32.totalorder %s23, 1
    %p282 = por %p280, %p281
    %p284 = scmp.ne.s32.totalorder %s267, %s283
    %p285 = scmp.eq.s32.totalorder %s23, 0
    %p286 = por %p284, %p285
    %p287 = scmp.le.s32.totalorder 1, %s17
    %p288 = scmp.lt.s32.totalorder %s17, 3
    %p289 = pnand %p287, %p288
    %p290 = pneg %p289
    // Predicated region
    $region9: #{convnext_block.1} parent=5 // pred_check
      _
    $region10: #{convnext_block.1} parent=5 // pred_check_branch
      %292 = sbr.rel (%p289) target = $region12
    $region11: #{convnext_block.1} parent=5 // pred_region
      %s293 = ssub.s32 %s17, 1
      // Predicated region
      $region13: #{convnext_block.1} parent=11 // pred_check
        %p294 = pneg %p64
      $region14: #{convnext_block.1} parent=11 // pred_check_branch
        %296 = sbr.rel (%p294) target = $region16
      $region15: #{convnext_block.1} parent=11 // pred_region
        _
      $region16: #{convnext_block.1} parent=11 // pred_fallthru
        _
      // Predicated region
      $region17: #{convnext_block.1} parent=11 // pred_check
        %p297 = pneg %p85
      $region18: #{convnext_block.1} parent=11 // pred_check_branch
        %299 = sbr.rel (%p297) target = $region20
      $region19: #{convnext_block.1} parent=11 // pred_region
        _
      $region20: #{convnext_block.1} parent=11 // pred_fallthru
        _
      // Predicated region
      $region21: #{convnext_block.1} parent=11 // pred_check
        %p300 = pneg %p106
      $region22: #{convnext_block.1} parent=11 // pred_check_branch
        %302 = sbr.rel (%p300) target = $region24
      $region23: #{convnext_block.1} parent=11 // pred_region
        _
      $region24: #{convnext_block.1} parent=11 // pred_fallthru
        _
      // Predicated region
      $region25: #{convnext_block.1} parent=11 // pred_check
        %p303 = pneg %p127
      $region26: #{convnext_block.1} parent=11 // pred_check_branch
        %305 = sbr.rel (%p303) target = $region28
      $region27: #{convnext_block.1} parent=11 // pred_region
        _
      $region28: #{convnext_block.1} parent=11 // pred_fallthru
        _
      // Predicated region
      $region29: #{convnext_block.1} parent=11 // pred_check
        %p306 = pneg %p148
      $region30: #{convnext_block.1} parent=11 // pred_check_branch
        %308 = sbr.rel (%p306) target = $region32
      $region31: #{convnext_block.1} parent=11 // pred_region
        _
      $region32: #{convnext_block.1} parent=11 // pred_fallthru
        _
      // Predicated region
      $region33: #{convnext_block.1} parent=11 // pred_check
        %p309 = pneg %p169
      $region34: #{convnext_block.1} parent=11 // pred_check_branch
        %311 = sbr.rel (%p309) target = $region36
      $region35: #{convnext_block.1} parent=11 // pred_region
        _
      $region36: #{convnext_block.1} parent=11 // pred_fallthru
        _
      // Predicated region
      $region37: #{convnext_block.1} parent=11 // pred_check
        %p312 = pneg %p190
      $region38: #{convnext_block.1} parent=11 // pred_check_branch
        %314 = sbr.rel (%p312) target = $region40
      $region39: #{convnext_block.1} parent=11 // pred_region
        _
      $region40: #{convnext_block.1} parent=11 // pred_fallthru
        _
      // Predicated region
      $region41: #{convnext_block.1} parent=11 // pred_check
        %p315 = pneg %p211
      $region42: #{convnext_block.1} parent=11 // pred_check_branch
        %317 = sbr.rel (%p315) target = $region44
      $region43: #{convnext_block.1} parent=11 // pred_region
        _
      $region44: #{convnext_block.1} parent=11 // pred_fallthru
        _
      // Predicated region
      $region45: #{convnext_block.1} parent=11 // pred_check
        %p318 = pneg %p232
      $region46: #{convnext_block.1} parent=11 // pred_check_branch
        %320 = sbr.rel (%p318) target = $region48
      $region47: #{convnext_block.1} parent=11 // pred_region
        _
      $region48: #{convnext_block.1} parent=11 // pred_fallthru
        _
      // Predicated region
      $region49: #{convnext_block.1} parent=11 // pred_check
        %p321 = pneg %p253
      $region50: #{convnext_block.1} parent=11 // pred_check_branch
        %323 = sbr.rel (%p321) target = $region52
      $region51: #{convnext_block.1} parent=11 // pred_region
        _
      $region52: #{convnext_block.1} parent=11 // pred_fallthru
        _
    $region12: #{convnext_block.1} parent=5 // pred_fallthru
      _
    %p324 = scmp.lt.s32.totalorder %s17, 2
    // Predicated region
    $region53: #{convnext_block.1} parent=5 // pred_check
      %p325 = pneg %p324
    $region54: #{convnext_block.1} parent=5 // pred_check_branch
      %327 = sbr.rel (%p325) target = $region56
    $region55: #{convnext_block.1} parent=5 // pred_region
      // Predicated region
      $region57: #{convnext_block.1} parent=55 // pred_check
        %p328 = pneg %p37
      $region58: #{convnext_block.1} parent=55 // pred_check_branch
        %330 = sbr.rel (%p328) target = $region60
      $region59: #{convnext_block.1} parent=55 // pred_region
        %p331 = scmp.lt.s32.totalorder %s17, 1
        %s332 = scalar_select %p331, %s17, 1
        %s333 = smul.addr %s332, 8
        %s334 = smul.addr %s333, 8
        %s335 = scalar_lea.vmem %s0, %s334
      $region60: #{convnext_block.1} parent=55 // pred_fallthru
        _
    $region56: #{convnext_block.1} parent=5 // pred_fallthru
      _
    %p336 = scmp.le.s32.totalorder 1, %s17
    %p337 = scmp.lt.s32.totalorder %s17, 3
    %p338 = pnand %p336, %p337
    %p339 = pneg %p338
    // Predicated region
    $region61: #{convnext_block.1} parent=5 // pred_check
      _
    $region62: #{convnext_block.1} parent=5 // pred_check_branch
      %341 = sbr.rel (%p338) target = $region64
    $region63: #{convnext_block.1} parent=5 // pred_region
      %s342 = ssub.s32 %s17, 1
      %p343 = scmp.lt.s32.totalorder %s22, 1
      %s344 = scalar_select %p343, %s22, 1
      %s345 = smul.addr %s344, 8
      %s346 = smul.addr %s345, 8
      %s347 = scalar_lea.vmem %s0, %s346
      %p348 = pneg %p43
      %p349 = pneg %p40
      %p350 = pneg %p64
      %p351 = pneg %p61
      %p352 = pneg %p85
      %p353 = pneg %p82
      %p354 = pneg %p106
      %p355 = pneg %p103
      %p356 = pneg %p127
      %p357 = pneg %p124
      %p358 = pneg %p148
      %p359 = pneg %p145
      %p360 = pneg %p169
      %p361 = pneg %p166
      %p362 = pneg %p190
      %p363 = pneg %p187
      %p364 = pneg %p211
      %p365 = pneg %p208
      %p366 = pneg %p232
      %p367 = pneg %p229
      %p368 = pneg %p253
      %p369 = pneg %p250
      %p370 = pneg %p279
      %p371 = pneg %p276
      %p372 = scmp.lt.s32.totalorder %s22, 1
      %s373 = scalar_select %p372, %s22, 1
      %s374 = smul.addr %s373, 8
      %s375 = smul.addr %s374, 8
      %s376 = scalar_lea.vmem %s11, %s375
      %p377 = scmp.lt.s32.totalorder %s22, 1
      %s378 = scalar_select %p377, %s22, 1
      %s379 = smul.addr %s378, 8
      %s380 = smul.addr %s379, 8
      %s381 = scalar_lea.vmem %s0, %s380
      %p382 = scmp.lt.s32.totalorder %s22, 1
      %s383 = scalar_select %p382, %s22, 1
      %s384 = smul.addr %s383, 8
      %s385 = smul.addr %s384, 8
      %s386 = scalar_lea.vmem %s11, %s385
      %387 = vst [vmem:[#allocation2] sm:$0xff] 0.0
      %388 = vst [vmem:[#allocation2 + $0x8] sm:$0xff] 0.0
      %vm389 = vcmask 834560
      %390 = vst.msk [vmem:[#allocation2 + $0x10] sm:$0xff] %vm389, 0.0
      %391 = vst [vmem:[#allocation2 + $0x18] sm:$0xff] 0.0
      %392 = vst [vmem:[#allocation2 + $0x20] sm:$0xff] 0.0
      %393 = vst.msk [vmem:[#allocation2 + $0x28] sm:$0xff] %vm389, 0.0
      %394 = vst [vmem:[#allocation2 + $0x30] sm:$0xff] 0.0
      %395 = vst [vmem:[#allocation2 + $0x38] sm:$0xff] 0.0
      %396 = vst.msk [vmem:[#allocation2 + $0x40] sm:$0xff] %vm389, 0.0
      %397 = vst [vmem:[#allocation2 + $0x48] sm:$0xff] 0.0
      %398 = vst [vmem:[#allocation2 + $0x50] sm:$0xff] 0.0
      %399 = vst.msk [vmem:[#allocation2 + $0x58] sm:$0xff] %vm389, 0.0
      %v400 = vld [vmem:[%s381] sm:$0xff]
      %v401 = vld [vmem:[%s381 + $0x8] sm:$0xff]
      %v402 = vld [vmem:[%s381 + $0x10] sm:$0xff]
      %v403 = vld [vmem:[%s381 + $0x18] sm:$0xff]
      %v404 = vld [vmem:[%s381 + $0x20] sm:$0xff]
      %v405 = vld [vmem:[%s381 + $0x28] sm:$0xff]
      %v406 = vld [vmem:[%s381 + $0x30] sm:$0xff]
      %v407 = vld [vmem:[%s381 + $0x38] sm:$0xff]
      %416 = vrot.lane.b32.xlu0 %v400, 51
      %v417 = vpop.permute.xlu0 %416
      %418 = vrot.lane.b32.xlu0 %v401, 51
      %v419 = vpop.permute.xlu0 %418
      %420 = vrot.lane.b32.xlu0 %v402, 51
      %v421 = vpop.permute.xlu0 %420
      %422 = vrot.lane.b32.xlu0 %v403, 51
      %v423 = vpop.permute.xlu0 %422
      %424 = vrot.lane.b32.xlu0 %v404, 51
      %v425 = vpop.permute.xlu0 %424
      %426 = vrot.lane.b32.xlu0 %v405, 51
      %v427 = vpop.permute.xlu0 %426
      %428 = vrot.lane.b32.xlu0 %v406, 51
      %v429 = vpop.permute.xlu0 %428
      %430 = vrot.lane.b32.xlu0 %v407, 51
      %v431 = vpop.permute.xlu0 %430
      %vm432 = vcmask 416768
      %v433 = vsel %vm432, %v417, %v419
      %v434 = vsel %vm432, %v421, %v423
      %v435 = vsel %vm432, %v425, %v427
      %v436 = vsel %vm432, %v429, %v431
      %vm449 = vcmask 1047960
      %450 = vst.msk [vmem:[#allocation2] sm:$0xff] %vm449, %v417
      %451 = vst [vmem:[#allocation2 + $0x8] sm:$0xff] %v433
      %452 = vst.msk [vmem:[#allocation2 + $0x10] sm:$0xff] %vm432, %v419
      %453 = vst.msk [vmem:[#allocation2 + $0x18] sm:$0xff] %vm449, %v421
      %454 = vst [vmem:[#allocation2 + $0x20] sm:$0xff] %v434
      %455 = vst.msk [vmem:[#allocation2 + $0x28] sm:$0xff] %vm432, %v423
      %456 = vst.msk [vmem:[#allocation2 + $0x30] sm:$0xff] %vm449, %v425
      %457 = vst [vmem:[#allocation2 + $0x38] sm:$0xff] %v435
      %458 = vst.msk [vmem:[#allocation2 + $0x40] sm:$0xff] %vm432, %v427
      %459 = vst.msk [vmem:[#allocation2 + $0x48] sm:$0xff] %vm449, %v429
      %460 = vst [vmem:[#allocation2 + $0x50] sm:$0xff] %v436
      %461 = vst.msk [vmem:[#allocation2 + $0x58] sm:$0xff] %vm432, %v431
      %v462 = vld [vmem:[#allocation2] sm:$0xff]
      %v463 = vld [vmem:[#allocation2 + $0x8] sm:$0xff]
      %v464 = vld [vmem:[#allocation2 + $0x18] sm:$0xff]
      %v465 = vld [vmem:[#allocation2 + $0x20] sm:$0xff]
      %v466 = vld [vmem:[#allocation2 + $0x30] sm:$0xff]
      %v467 = vld [vmem:[#allocation2 + $0x38] sm:$0xff]
      %v468 = vld [vmem:[#allocation2 + $0x48] sm:$0xff]
      %v469 = vld [vmem:[#allocation2 + $0x50] sm:$0xff]
      %v470 = vld [vmem:[%s2] sm:$0xff]
      %v471 = vld [vmem:[%s2 + $0x8] sm:$0xff]
      %v472 = vld [vmem:[%s2 + $0x10] sm:$0xff]
      %v473 = vld [vmem:[%s2 + $0x18] sm:$0xff]
      %475 = vset.pattern.permute.xlu0 0
      %476 = vperm.xlu0 %475, %v470
      %v477 = vpop.permute.xlu0 %476
      %480 = vset.pattern.permute.xlu0 0
      %481 = vperm.xlu0 %480, %v471
      %v482 = vpop.permute.xlu0 %481
      %485 = vset.pattern.permute.xlu0 0
      %486 = vperm.xlu0 %485, %v472
      %v487 = vpop.permute.xlu0 %486
      %490 = vset.pattern.permute.xlu0 0
      %491 = vperm.xlu0 %490, %v473
      %v492 = vpop.permute.xlu0 %491
      %v494 = vmul.f32 %v462, %v477
      %v495 = vmul.f32 %v463, %v477
      %v496 = vmul.f32 %v464, %v482
      %v497 = vmul.f32 %v465, %v482
      %v498 = vmul.f32 %v466, %v487
      %v499 = vmul.f32 %v467, %v487
      %v500 = vmul.f32 %v468, %v492
      %v501 = vmul.f32 %v469, %v492
      %v502 = vld [vmem:[#allocation2] sm:$0xff]
      %v503 = vld [vmem:[#allocation2 + $0x8] sm:$0xff]
      %v504 = vld [vmem:[#allocation2 + $0x10] sm:$0xff]
      %v505 = vld [vmem:[#allocation2 + $0x18] sm:$0xff]
      %v506 = vld [vmem:[#allocation2 + $0x20] sm:$0xff]
      %v507 = vld [vmem:[#allocation2 + $0x28] sm:$0xff]
      %v508 = vld [vmem:[#allocation2 + $0x30] sm:$0xff]
      %v509 = vld [vmem:[#allocation2 + $0x38] sm:$0xff]
      %v510 = vld [vmem:[#allocation2 + $0x40] sm:$0xff]
      %v511 = vld [vmem:[#allocation2 + $0x48] sm:$0xff]
      %v512 = vld [vmem:[#allocation2 + $0x50] sm:$0xff]
      %v513 = vld [vmem:[#allocation2 + $0x58] sm:$0xff]
      %514 = vset.pattern.permute.xlu0 7
      %515 = vperm.xlu0 %514, %v470
      %v516 = vpop.permute.xlu0 %515
      %518 = vset.pattern.permute.xlu0 7
      %519 = vperm.xlu0 %518, %v471
      %v520 = vpop.permute.xlu0 %519
      %522 = vset.pattern.permute.xlu0 7
      %523 = vperm.xlu0 %522, %v472
      %v524 = vpop.permute.xlu0 %523
      %526 = vset.pattern.permute.xlu0 7
      %527 = vperm.xlu0 %526, %v473
      %v528 = vpop.permute.xlu0 %527
      %v530 = vmul.f32 %v502, %v516
      %v531 = vmul.f32 %v503, %v516
      %v532 = vmul.f32 %v504, %v516
      %v533 = vmul.f32 %v505, %v520
      %v534 = vmul.f32 %v506, %v520
      %v535 = vmul.f32 %v507, %v520
      %v536 = vmul.f32 %v508, %v524
      %v537 = vmul.f32 %v509, %v524
      %v538 = vmul.f32 %v510, %v524
      %v539 = vmul.f32 %v511, %v528
      %v540 = vmul.f32 %v512, %v528
      %v541 = vmul.f32 %v513, %v528
      %554 = vrot.lane.b32.xlu0 %v530, 112
      %v555 = vpop.permute.xlu0 %554
      %556 = vrot.lane.b32.xlu0 %v531, 112
      %v557 = vpop.permute.xlu0 %556
      %558 = vrot.lane.b32.xlu0 %v532, 112
      %v559 = vpop.permute.xlu0 %558
      %560 = vrot.lane.b32.xlu0 %v533, 112
      %v561 = vpop.permute.xlu0 %560
      %562 = vrot.lane.b32.xlu0 %v534, 112
      %v563 = vpop.permute.xlu0 %562
      %564 = vrot.lane.b32.xlu0 %v535, 112
      %v565 = vpop.permute.xlu0 %564
      %566 = vrot.lane.b32.xlu0 %v536, 112
      %v567 = vpop.permute.xlu0 %566
      %568 = vrot.lane.b32.xlu0 %v537, 112
      %v569 = vpop.permute.xlu0 %568
      %570 = vrot.lane.b32.xlu0 %v538, 112
      %v571 = vpop.permute.xlu0 %570
      %572 = vrot.lane.b32.xlu0 %v539, 112
      %v573 = vpop.permute.xlu0 %572
      %574 = vrot.lane.b32.xlu0 %v540, 112
      %v575 = vpop.permute.xlu0 %574
      %576 = vrot.lane.b32.xlu0 %v541, 112
      %v577 = vpop.permute.xlu0 %576
      %vm578 = vcmask 916480
      %v579 = vsel %vm578, %v555, %v557
      %v580 = vsel %vm578, %v557, %v559
      %v581 = vsel %vm578, %v561, %v563
      %v582 = vsel %vm578, %v563, %v565
      %v583 = vsel %vm578, %v567, %v569
      %v584 = vsel %vm578, %v569, %v571
      %v585 = vsel %vm578, %v573, %v575
      %v586 = vsel %vm578, %v575, %v577
      %v595 = vadd.f32 %v494, %v579
      %v596 = vadd.f32 %v495, %v580
      %v597 = vadd.f32 %v496, %v581
      %v598 = vadd.f32 %v497, %v582
      %v599 = vadd.f32 %v498, %v583
      %v600 = vadd.f32 %v499, %v584
      %v601 = vadd.f32 %v500, %v585
      %v602 = vadd.f32 %v501, %v586
      %603 = vset.pattern.permute.xlu0 14
      %604 = vperm.xlu0 %603, %v470
      %v605 = vpop.permute.xlu0 %604
      %607 = vset.pattern.permute.xlu0 14
      %608 = vperm.xlu0 %607, %v471
      %v609 = vpop.permute.xlu0 %608
      %611 = vset.pattern.permute.xlu0 14
      %612 = vperm.xlu0 %611, %v472
      %v613 = vpop.permute.xlu0 %612
      %615 = vset.pattern.permute.xlu0 14
      %616 = vperm.xlu0 %615, %v473
      %v617 = vpop.permute.xlu0 %616
      %v619 = vmul.f32 %v502, %v605
      %v620 = vmul.f32 %v503, %v605
      %v621 = vmul.f32 %v504, %v605
      %v622 = vmul.f32 %v505, %v609
      %v623 = vmul.f32 %v506, %v609
      %v624 = vmul.f32 %v507, %v609
      %v625 = vmul.f32 %v508, %v613
      %v626 = vmul.f32 %v509, %v613
      %v627 = vmul.f32 %v510, %v613
      %v628 = vmul.f32 %v511, %v617
      %v629 = vmul.f32 %v512, %v617
      %v630 = vmul.f32 %v513, %v617
      %643 = vrot.lane.b32.xlu0 %v619, 96
      %v644 = vpop.permute.xlu0 %643
      %645 = vrot.lane.b32.xlu0 %v620, 96
      %v646 = vpop.permute.xlu0 %645
      %647 = vrot.lane.b32.xlu0 %v621, 96
      %v648 = vpop.permute.xlu0 %647
      %649 = vrot.lane.b32.xlu0 %v622, 96
      %v650 = vpop.permute.xlu0 %649
      %651 = vrot.lane.b32.xlu0 %v623, 96
      %v652 = vpop.permute.xlu0 %651
      %653 = vrot.lane.b32.xlu0 %v624, 96
      %v654 = vpop.permute.xlu0 %653
      %655 = vrot.lane.b32.xlu0 %v625, 96
      %v656 = vpop.permute.xlu0 %655
      %657 = vrot.lane.b32.xlu0 %v626, 96
      %v658 = vpop.permute.xlu0 %657
      %659 = vrot.lane.b32.xlu0 %v627, 96
      %v660 = vpop.permute.xlu0 %659
      %661 = vrot.lane.b32.xlu0 %v628, 96
      %v662 = vpop.permute.xlu0 %661
      %663 = vrot.lane.b32.xlu0 %v629, 96
      %v664 = vpop.permute.xlu0 %663
      %665 = vrot.lane.b32.xlu0 %v630, 96
      %v666 = vpop.permute.xlu0 %665
      %vm667 = vcmask 785408
      %v668 = vsel %vm667, %v644, %v646
      %v669 = vsel %vm667, %v646, %v648
      %v670 = vsel %vm667, %v650, %v652
      %v671 = vsel %vm667, %v652, %v654
      %v672 = vsel %vm667, %v656, %v658
      %v673 = vsel %vm667, %v658, %v660
      %v674 = vsel %vm667, %v662, %v664
      %v675 = vsel %vm667, %v664, %v666
      %v684 = vadd.f32 %v595, %v668
      %v685 = vadd.f32 %v596, %v669
      %v686 = vadd.f32 %v597, %v670
      %v687 = vadd.f32 %v598, %v671
      %v688 = vadd.f32 %v599, %v672
      %v689 = vadd.f32 %v600, %v673
      %v690 = vadd.f32 %v601, %v674
      %v691 = vadd.f32 %v602, %v675
      %692 = vset.pattern.permute.xlu0 21
      %693 = vperm.xlu0 %692, %v470
      %v694 = vpop.permute.xlu0 %693
      %696 = vset.pattern.permute.xlu0 21
      %697 = vperm.xlu0 %696, %v471
      %v698 = vpop.permute.xlu0 %697
      %700 = vset.pattern.permute.xlu0 21
      %701 = vperm.xlu0 %700, %v472
      %v702 = vpop.permute.xlu0 %701
      %704 = vset.pattern.permute.xlu0 21
      %705 = vperm.xlu0 %704, %v473
      %v706 = vpop.permute.xlu0 %705
      %v708 = vmul.f32 %v502, %v694
      %v709 = vmul.f32 %v503, %v694
      %v710 = vmul.f32 %v504, %v694
      %v711 = vmul.f32 %v505, %v698
      %v712 = vmul.f32 %v506, %v698
      %v713 = vmul.f32 %v507, %v698
      %v714 = vmul.f32 %v508, %v702
      %v715 = vmul.f32 %v509, %v702
      %v716 = vmul.f32 %v510, %v702
      %v717 = vmul.f32 %v511, %v706
      %v718 = vmul.f32 %v512, %v706
      %v719 = vmul.f32 %v513, %v706
      %732 = vrot.lane.b32.xlu0 %v708, 80
      %v733 = vpop.permute.xlu0 %732
      %734 = vrot.lane.b32.xlu0 %v709, 80
      %v735 = vpop.permute.xlu0 %734
      %736 = vrot.lane.b32.xlu0 %v710, 80
      %v737 = vpop.permute.xlu0 %736
      %738 = vrot.lane.b32.xlu0 %v711, 80
      %v739 = vpop.permute.xlu0 %738
      %740 = vrot.lane.b32.xlu0 %v712, 80
      %v741 = vpop.permute.xlu0 %740
      %742 = vrot.lane.b32.xlu0 %v713, 80
      %v743 = vpop.permute.xlu0 %742
      %744 = vrot.lane.b32.xlu0 %v714, 80
      %v745 = vpop.permute.xlu0 %744
      %746 = vrot.lane.b32.xlu0 %v715, 80
      %v747 = vpop.permute.xlu0 %746
      %748 = vrot.lane.b32.xlu0 %v716, 80
      %v749 = vpop.permute.xlu0 %748
      %750 = vrot.lane.b32.xlu0 %v717, 80
      %v751 = vpop.permute.xlu0 %750
      %752 = vrot.lane.b32.xlu0 %v718, 80
      %v753 = vpop.permute.xlu0 %752
      %754 = vrot.lane.b32.xlu0 %v719, 80
      %v755 = vpop.permute.xlu0 %754
      %vm756 = vcmask 654336
      %v757 = vsel %vm756, %v733, %v735
      %v758 = vsel %vm756, %v735, %v737
      %v759 = vsel %vm756, %v739, %v741
      %v760 = vsel %vm756, %v741, %v743
      %v761 = vsel %vm756, %v745, %v747
      %v762 = vsel %vm756, %v747, %v749
      %v763 = vsel %vm756, %v751, %v753
      %v764 = vsel %vm756, %v753, %v755
      %v773 = vadd.f32 %v684, %v757
      %v774 = vadd.f32 %v685, %v758
      %v775 = vadd.f32 %v686, %v759
      %v776 = vadd.f32 %v687, %v760
      %v777 = vadd.f32 %v688, %v761
      %v778 = vadd.f32 %v689, %v762
      %v779 = vadd.f32 %v690, %v763
      %v780 = vadd.f32 %v691, %v764
      %781 = vset.pattern.permute.xlu0 28
      %782 = vperm.xlu0 %781, %v470
      %v783 = vpop.permute.xlu0 %782
      %785 = vset.pattern.permute.xlu0 28
      %786 = vperm.xlu0 %785, %v471
      %v787 = vpop.permute.xlu0 %786
      %789 = vset.pattern.permute.xlu0 28
      %790 = vperm.xlu0 %789, %v472
      %v791 = vpop.permute.xlu0 %790
      %793 = vset.pattern.permute.xlu0 28
      %794 = vperm.xlu0 %793, %v473
      %v795 = vpop.permute.xlu0 %794
      %v797 = vmul.f32 %v502, %v783
      %v798 = vmul.f32 %v503, %v783
      %v799 = vmul.f32 %v504, %v783
      %v800 = vmul.f32 %v505, %v787
      %v801 = vmul.f32 %v506, %v787
      %v802 = vmul.f32 %v507, %v787
      %v803 = vmul.f32 %v508, %v791
      %v804 = vmul.f32 %v509, %v791
      %v805 = vmul.f32 %v510, %v791
      %v806 = vmul.f32 %v511, %v795
      %v807 = vmul.f32 %v512, %v795
      %v808 = vmul.f32 %v513, %v795
      %821 = vrot.lane.b32.xlu0 %v797, 64
      %v822 = vpop.permute.xlu0 %821
      %823 = vrot.lane.b32.xlu0 %v798, 64
      %v824 = vpop.permute.xlu0 %823
      %825 = vrot.lane.b32.xlu0 %v799, 64
      %v826 = vpop.permute.xlu0 %825
      %827 = vrot.lane.b32.xlu0 %v800, 64
      %v828 = vpop.permute.xlu0 %827
      %829 = vrot.lane.b32.xlu0 %v801, 64
      %v830 = vpop.permute.xlu0 %829
      %831 = vrot.lane.b32.xlu0 %v802, 64
      %v832 = vpop.permute.xlu0 %831
      %833 = vrot.lane.b32.xlu0 %v803, 64
      %v834 = vpop.permute.xlu0 %833
      %835 = vrot.lane.b32.xlu0 %v804, 64
      %v836 = vpop.permute.xlu0 %835
      %837 = vrot.lane.b32.xlu0 %v805, 64
      %v838 = vpop.permute.xlu0 %837
      %839 = vrot.lane.b32.xlu0 %v806, 64
      %v840 = vpop.permute.xlu0 %839
      %841 = vrot.lane.b32.xlu0 %v807, 64
      %v842 = vpop.permute.xlu0 %841
      %843 = vrot.lane.b32.xlu0 %v808, 64
      %v844 = vpop.permute.xlu0 %843
      %vm845 = vcmask 523264
      %v846 = vsel %vm845, %v822, %v824
      %v847 = vsel %vm845, %v824, %v826
      %v848 = vsel %vm845, %v828, %v830
      %v849 = vsel %vm845, %v830, %v832
      %v850 = vsel %vm845, %v834, %v836
      %v851 = vsel %vm845, %v836, %v838
      %v852 = vsel %vm845, %v840, %v842
      %v853 = vsel %vm845, %v842, %v844
      %v862 = vadd.f32 %v773, %v846
      %v863 = vadd.f32 %v774, %v847
      %v864 = vadd.f32 %v775, %v848
      %v865 = vadd.f32 %v776, %v849
      %v866 = vadd.f32 %v777, %v850
      %v867 = vadd.f32 %v778, %v851
      %v868 = vadd.f32 %v779, %v852
      %v869 = vadd.f32 %v780, %v853
      %870 = vset.pattern.permute.xlu0 35
      %871 = vperm.xlu0 %870, %v470
      %v872 = vpop.permute.xlu0 %871
      %874 = vset.pattern.permute.xlu0 35
      %875 = vperm.xlu0 %874, %v471
      %v876 = vpop.permute.xlu0 %875
      %878 = vset.pattern.permute.xlu0 35
      %879 = vperm.xlu0 %878, %v472
      %v880 = vpop.permute.xlu0 %879
      %882 = vset.pattern.permute.xlu0 35
      %883 = vperm.xlu0 %882, %v473
      %v884 = vpop.permute.xlu0 %883
      %v886 = vmul.f32 %v502, %v872
      %v887 = vmul.f32 %v503, %v872
      %v888 = vmul.f32 %v504, %v872
      %v889 = vmul.f32 %v505, %v876
      %v890 = vmul.f32 %v506, %v876
      %v891 = vmul.f32 %v507, %v876
      %v892 = vmul.f32 %v508, %v880
      %v893 = vmul.f32 %v509, %v880
      %v894 = vmul.f32 %v510, %v880
      %v895 = vmul.f32 %v511, %v884
      %v896 = vmul.f32 %v512, %v884
      %v897 = vmul.f32 %v513, %v884
      %910 = vrot.lane.b32.xlu0 %v886, 48
      %v911 = vpop.permute.xlu0 %910
      %912 = vrot.lane.b32.xlu0 %v887, 48
      %v913 = vpop.permute.xlu0 %912
      %914 = vrot.lane.b32.xlu0 %v888, 48
      %v915 = vpop.permute.xlu0 %914
      %916 = vrot.lane.b32.xlu0 %v889, 48
      %v917 = vpop.permute.xlu0 %916
      %918 = vrot.lane.b32.xlu0 %v890, 48
      %v919 = vpop.permute.xlu0 %918
      %920 = vrot.lane.b32.xlu0 %v891, 48
      %v921 = vpop.permute.xlu0 %920
      %922 = vrot.lane.b32.xlu0 %v892, 48
      %v923 = vpop.permute.xlu0 %922
      %924 = vrot.lane.b32.xlu0 %v893, 48
      %v925 = vpop.permute.xlu0 %924
      %926 = vrot.lane.b32.xlu0 %v894, 48
      %v927 = vpop.permute.xlu0 %926
      %928 = vrot.lane.b32.xlu0 %v895, 48
      %v929 = vpop.permute.xlu0 %928
      %930 = vrot.lane.b32.xlu0 %v896, 48
      %v931 = vpop.permute.xlu0 %930
      %932 = vrot.lane.b32.xlu0 %v897, 48
      %v933 = vpop.permute.xlu0 %932
      %vm934 = vcmask 392192
      %v935 = vsel %vm934, %v911, %v913
      %v936 = vsel %vm934, %v913, %v915
      %v937 = vsel %vm934, %v917, %v919
      %v938 = vsel %vm934, %v919, %v921
      %v939 = vsel %vm934, %v923, %v925
      %v940 = vsel %vm934, %v925, %v927
      %v941 = vsel %vm934, %v929, %v931
      %v942 = vsel %vm934, %v931, %v933
      %v951 = vadd.f32 %v862, %v935
      %v952 = vadd.f32 %v863, %v936
      %v953 = vadd.f32 %v864, %v937
      %v954 = vadd.f32 %v865, %v938
      %v955 = vadd.f32 %v866, %v939
      %v956 = vadd.f32 %v867, %v940
      %v957 = vadd.f32 %v868, %v941
      %v958 = vadd.f32 %v869, %v942
      %959 = vset.pattern.permute.xlu0 42
      %960 = vperm.xlu0 %959, %v470
      %v961 = vpop.permute.xlu0 %960
      %963 = vset.pattern.permute.xlu0 42
      %964 = vperm.xlu0 %963, %v471
      %v965 = vpop.permute.xlu0 %964
      %967 = vset.pattern.permute.xlu0 42
      %968 = vperm.xlu0 %967, %v472
      %v969 = vpop.permute.xlu0 %968
      %971 = vset.pattern.permute.xlu0 42
      %972 = vperm.xlu0 %971, %v473
      %v973 = vpop.permute.xlu0 %972
      %v975 = vmul.f32 %v502, %v961
      %v976 = vmul.f32 %v503, %v961
      %v977 = vmul.f32 %v504, %v961
      %v978 = vmul.f32 %v505, %v965
      %v979 = vmul.f32 %v506, %v965
      %v980 = vmul.f32 %v507, %v965
      %v981 = vmul.f32 %v508, %v969
      %v982 = vmul.f32 %v509, %v969
      %v983 = vmul.f32 %v510, %v969
      %v984 = vmul.f32 %v511, %v973
      %v985 = vmul.f32 %v512, %v973
      %v986 = vmul.f32 %v513, %v973
      %999 = vrot.lane.b32.xlu0 %v975, 32
      %v1000 = vpop.permute.xlu0 %999
      %1001 = vrot.lane.b32.xlu0 %v976, 32
      %v1002 = vpop.permute.xlu0 %1001
      %1003 = vrot.lane.b32.xlu0 %v977, 32
      %v1004 = vpop.permute.xlu0 %1003
      %1005 = vrot.lane.b32.xlu0 %v978, 32
      %v1006 = vpop.permute.xlu0 %1005
      %1007 = vrot.lane.b32.xlu0 %v979, 32
      %v1008 = vpop.permute.xlu0 %1007
      %1009 = vrot.lane.b32.xlu0 %v980, 32
      %v1010 = vpop.permute.xlu0 %1009
      %1011 = vrot.lane.b32.xlu0 %v981, 32
      %v1012 = vpop.permute.xlu0 %1011
      %1013 = vrot.lane.b32.xlu0 %v982, 32
      %v1014 = vpop.permute.xlu0 %1013
      %1015 = vrot.lane.b32.xlu0 %v983, 32
      %v1016 = vpop.permute.xlu0 %1015
      %1017 = vrot.lane.b32.xlu0 %v984, 32
      %v1018 = vpop.permute.xlu0 %1017
      %1019 = vrot.lane.b32.xlu0 %v985, 32
      %v1020 = vpop.permute.xlu0 %1019
      %1021 = vrot.lane.b32.xlu0 %v986, 32
      %v1022 = vpop.permute.xlu0 %1021
      %vm1023 = vcmask 261120
      %v1024 = vsel %vm1023, %v1000, %v1002
      %v1025 = vsel %vm1023, %v1002, %v1004
      %v1026 = vsel %vm1023, %v1006, %v1008
      %v1027 = vsel %vm1023, %v1008, %v1010
      %v1028 = vsel %vm1023, %v1012, %v1014
      %v1029 = vsel %vm1023, %v1014, %v1016
      %v1030 = vsel %vm1023, %v1018, %v1020
      %v1031 = vsel %vm1023, %v1020, %v1022
      %v1040 = vadd.f32 %v951, %v1024
      %v1041 = vadd.f32 %v952, %v1025
      %v1042 = vadd.f32 %v953, %v1026
      %v1043 = vadd.f32 %v954, %v1027
      %v1044 = vadd.f32 %v955, %v1028
      %v1045 = vadd.f32 %v956, %v1029
      %v1046 = vadd.f32 %v957, %v1030
      %v1047 = vadd.f32 %v958, %v1031
      %v1048 = vld [vmem:[%s1] ss:$8 sm:$0x3]
      %v1050 = vlaneseq
      %v1051 = vshrl.u32 %v1050, 7
      %v1052 = vsub.s32 0, %v1051
      %v1053 = vrot.slane %v1048, %v1052
      %v1054 = vlaneseq
      %v1055 = vshrl.u32 %v1054, 7
      %v1056 = vsub.s32 1, %v1055
      %v1057 = vrot.slane %v1048, %v1056
      %v1060 = vmul.f32 %v1040, %v1053
      %v1061 = vmul.f32 %v1041, %v1057
      %v1062 = vmul.f32 %v1042, %v1053
      %v1063 = vmul.f32 %v1043, %v1057
      %v1064 = vmul.f32 %v1044, %v1053
      %v1065 = vmul.f32 %v1045, %v1057
      %v1066 = vmul.f32 %v1046, %v1053
      %v1067 = vmul.f32 %v1047, %v1057
      %1068 = vset.pattern.permute.xlu0 1
      %1069 = vperm.xlu0 %1068, %v470
      %v1070 = vpop.permute.xlu0 %1069
      %1072 = vset.pattern.permute.xlu0 1
      %1073 = vperm.xlu0 %1072, %v471
      %v1074 = vpop.permute.xlu0 %1073
      %1076 = vset.pattern.permute.xlu0 1
      %1077 = vperm.xlu0 %1076, %v472
      %v1078 = vpop.permute.xlu0 %1077
      %1080 = vset.pattern.permute.xlu0 1
      %1081 = vperm.xlu0 %1080, %v473
      %v1082 = vpop.permute.xlu0 %1081
      %v1084 = vmul.f32 %v502, %v1070
      %v1085 = vmul.f32 %v503, %v1070
      %v1086 = vmul.f32 %v504, %v1070
      %v1087 = vmul.f32 %v505, %v1074
      %v1088 = vmul.f32 %v506, %v1074
      %v1089 = vmul.f32 %v507, %v1074
      %v1090 = vmul.f32 %v508, %v1078
      %v1091 = vmul.f32 %v509, %v1078
      %v1092 = vmul.f32 %v510, %v1078
      %v1093 = vmul.f32 %v511, %v1082
      %v1094 = vmul.f32 %v512, %v1082
      %v1095 = vmul.f32 %v513, %v1082
      %1096 = vset.pattern.permute.xlu0 8
      %1097 = vperm.xlu0 %1096, %v470
      %v1098 = vpop.permute.xlu0 %1097
      %1100 = vset.pattern.permute.xlu0 8
      %1101 = vperm.xlu0 %1100, %v471
      %v1102 = vpop.permute.xlu0 %1101
      %1104 = vset.pattern.permute.xlu0 8
      %1105 = vperm.xlu0 %1104, %v472
      %v1106 = vpop.permute.xlu0 %1105
      %1108 = vset.pattern.permute.xlu0 8
      %1109 = vperm.xlu0 %1108, %v473
      %v1110 = vpop.permute.xlu0 %1109
      %v1112 = vmul.f32 %v502, %v1098
      %v1113 = vmul.f32 %v503, %v1098
      %v1114 = vmul.f32 %v504, %v1098
      %v1115 = vmul.f32 %v505, %v1102
      %v1116 = vmul.f32 %v506, %v1102
      %v1117 = vmul.f32 %v507, %v1102
      %v1118 = vmul.f32 %v508, %v1106
      %v1119 = vmul.f32 %v509, %v1106
      %v1120 = vmul.f32 %v510, %v1106
      %v1121 = vmul.f32 %v511, %v1110
      %v1122 = vmul.f32 %v512, %v1110
      %v1123 = vmul.f32 %v513, %v1110
      %1136 = vrot.lane.b32.xlu0 %v1112, 112
      %v1137 = vpop.permute.xlu0 %1136
      %1138 = vrot.lane.b32.xlu0 %v1113, 112
      %v1139 = vpop.permute.xlu0 %1138
      %1140 = vrot.lane.b32.xlu0 %v1114, 112
      %v1141 = vpop.permute.xlu0 %1140
      %1142 = vrot.lane.b32.xlu0 %v1115, 112
      %v1143 = vpop.permute.xlu0 %1142
      %1144 = vrot.lane.b32.xlu0 %v1116, 112
      %v1145 = vpop.permute.xlu0 %1144
      %1146 = vrot.lane.b32.xlu0 %v1117, 112
      %v1147 = vpop.permute.xlu0 %1146
      %1148 = vrot.lane.b32.xlu0 %v1118, 112
      %v1149 = vpop.permute.xlu0 %1148
      %1150 = vrot.lane.b32.xlu0 %v1119, 112
      %v1151 = vpop.permute.xlu0 %1150
      %1152 = vrot.lane.b32.xlu0 %v1120, 112
      %v1153 = vpop.permute.xlu0 %1152
      %1154 = vrot.lane.b32.xlu0 %v1121, 112
      %v1155 = vpop.permute.xlu0 %1154
      %1156 = vrot.lane.b32.xlu0 %v1122, 112
      %v1157 = vpop.permute.xlu0 %1156
      %1158 = vrot.lane.b32.xlu0 %v1123, 112
      %v1159 = vpop.permute.xlu0 %1158
      %v1160 = vsel %vm578, %v1137, %v1139
      %v1161 = vsel %vm578, %v1139, %v1141
      %v1162 = vsel %vm578, %v1143, %v1145
      %v1163 = vsel %vm578, %v1145, %v1147
      %v1164 = vsel %vm578, %v1149, %v1151
      %v1165 = vsel %vm578, %v1151, %v1153
      %v1166 = vsel %vm578, %v1155, %v1157
      %v1167 = vsel %vm578, %v1157, %v1159
      %v1180 = vadd.f32 %v1084, %v1160
      %v1181 = vadd.f32 %v1085, %v1161
      %v1182 = vadd.f32 %v1086, %v1141
      %v1183 = vadd.f32 %v1087, %v1162
      %v1184 = vadd.f32 %v1088, %v1163
      %v1185 = vadd.f32 %v1089, %v1147
      %v1186 = vadd.f32 %v1090, %v1164
      %v1187 = vadd.f32 %v1091, %v1165
      %v1188 = vadd.f32 %v1092, %v1153
      %v1189 = vadd.f32 %v1093, %v1166
      %v1190 = vadd.f32 %v1094, %v1167
      %v1191 = vadd.f32 %v1095, %v1159
      %1192 = vset.pattern.permute.xlu0 15
      %1193 = vperm.xlu0 %1192, %v470
      %v1194 = vpop.permute.xlu0 %1193
      %1196 = vset.pattern.permute.xlu0 15
      %1197 = vperm.xlu0 %1196, %v471
      %v1198 = vpop.permute.xlu0 %1197
      %1200 = vset.pattern.permute.xlu0 15
      %1201 = vperm.xlu0 %1200, %v472
      %v1202 = vpop.permute.xlu0 %1201
      %1204 = vset.pattern.permute.xlu0 15
      %1205 = vperm.xlu0 %1204, %v473
      %v1206 = vpop.permute.xlu0 %1205
      %v1208 = vmul.f32 %v502, %v1194
      %v1209 = vmul.f32 %v503, %v1194
      %v1210 = vmul.f32 %v504, %v1194
      %v1211 = vmul.f32 %v505, %v1198
      %v1212 = vmul.f32 %v506, %v1198
      %v1213 = vmul.f32 %v507, %v1198
      %v1214 = vmul.f32 %v508, %v1202
      %v1215 = vmul.f32 %v509, %v1202
      %v1216 = vmul.f32 %v510, %v1202
      %v1217 = vmul.f32 %v511, %v1206
      %v1218 = vmul.f32 %v512, %v1206
      %v1219 = vmul.f32 %v513, %v1206
      %1232 = vrot.lane.b32.xlu0 %v1208, 96
      %v1233 = vpop.permute.xlu0 %1232
      %1234 = vrot.lane.b32.xlu0 %v1209, 96
      %v1235 = vpop.permute.xlu0 %1234
      %1236 = vrot.lane.b32.xlu0 %v1210, 96
      %v1237 = vpop.permute.xlu0 %1236
      %1238 = vrot.lane.b32.xlu0 %v1211, 96
      %v1239 = vpop.permute.xlu0 %1238
      %1240 = vrot.lane.b32.xlu0 %v1212, 96
      %v1241 = vpop.permute.xlu0 %1240
      %1242 = vrot.lane.b32.xlu0 %v1213, 96
      %v1243 = vpop.permute.xlu0 %1242
      %1244 = vrot.lane.b32.xlu0 %v1214, 96
      %v1245 = vpop.permute.xlu0 %1244
      %1246 = vrot.lane.b32.xlu0 %v1215, 96
      %v1247 = vpop.permute.xlu0 %1246
      %1248 = vrot.lane.b32.xlu0 %v1216, 96
      %v1249 = vpop.permute.xlu0 %1248
      %1250 = vrot.lane.b32.xlu0 %v1217, 96
      %v1251 = vpop.permute.xlu0 %1250
      %1252 = vrot.lane.b32.xlu0 %v1218, 96
      %v1253 = vpop.permute.xlu0 %1252
      %1254 = vrot.lane.b32.xlu0 %v1219, 96
      %v1255 = vpop.permute.xlu0 %1254
      %v1256 = vsel %vm667, %v1233, %v1235
      %v1257 = vsel %vm667, %v1235, %v1237
      %v1258 = vsel %vm667, %v1239, %v1241
      %v1259 = vsel %vm667, %v1241, %v1243
      %v1260 = vsel %vm667, %v1245, %v1247
      %v1261 = vsel %vm667, %v1247, %v1249
      %v1262 = vsel %vm667, %v1251, %v1253
      %v1263 = vsel %vm667, %v1253, %v1255
      %v1276 = vadd.f32 %v1180, %v1256
      %v1277 = vadd.f32 %v1181, %v1257
      %v1278 = vadd.f32 %v1182, %v1237
      %v1279 = vadd.f32 %v1183, %v1258
      %v1280 = vadd.f32 %v1184, %v1259
      %v1281 = vadd.f32 %v1185, %v1243
      %v1282 = vadd.f32 %v1186, %v1260
      %v1283 = vadd.f32 %v1187, %v1261
      %v1284 = vadd.f32 %v1188, %v1249
      %v1285 = vadd.f32 %v1189, %v1262
      %v1286 = vadd.f32 %v1190, %v1263
      %v1287 = vadd.f32 %v1191, %v1255
      %1288 = vset.pattern.permute.xlu0 22
      %1289 = vperm.xlu0 %1288, %v470
      %v1290 = vpop.permute.xlu0 %1289
      %1292 = vset.pattern.permute.xlu0 22
      %1293 = vperm.xlu0 %1292, %v471
      %v1294 = vpop.permute.xlu0 %1293
      %1296 = vset.pattern.permute.xlu0 22
      %1297 = vperm.xlu0 %1296, %v472
      %v1298 = vpop.permute.xlu0 %1297
      %1300 = vset.pattern.permute.xlu0 22
      %1301 = vperm.xlu0 %1300, %v473
      %v1302 = vpop.permute.xlu0 %1301
      %v1304 = vmul.f32 %v502, %v1290
      %v1305 = vmul.f32 %v503, %v1290
      %v1306 = vmul.f32 %v504, %v1290
      %v1307 = vmul.f32 %v505, %v1294
      %v1308 = vmul.f32 %v506, %v1294
      %v1309 = vmul.f32 %v507, %v1294
      %v1310 = vmul.f32 %v508, %v1298
      %v1311 = vmul.f32 %v509, %v1298
      %v1312 = vmul.f32 %v510, %v1298
      %v1313 = vmul.f32 %v511, %v1302
      %v1314 = vmul.f32 %v512, %v1302
      %v1315 = vmul.f32 %v513, %v1302
      %1328 = vrot.lane.b32.xlu0 %v1304, 80
      %v1329 = vpop.permute.xlu0 %1328
      %1330 = vrot.lane.b32.xlu0 %v1305, 80
      %v1331 = vpop.permute.xlu0 %1330
      %1332 = vrot.lane.b32.xlu0 %v1306, 80
      %v1333 = vpop.permute.xlu0 %1332
      %1334 = vrot.lane.b32.xlu0 %v1307, 80
      %v1335 = vpop.permute.xlu0 %1334
      %1336 = vrot.lane.b32.xlu0 %v1308, 80
      %v1337 = vpop.permute.xlu0 %1336
      %1338 = vrot.lane.b32.xlu0 %v1309, 80
      %v1339 = vpop.permute.xlu0 %1338
      %1340 = vrot.lane.b32.xlu0 %v1310, 80
      %v1341 = vpop.permute.xlu0 %1340
      %1342 = vrot.lane.b32.xlu0 %v1311, 80
      %v1343 = vpop.permute.xlu0 %1342
      %1344 = vrot.lane.b32.xlu0 %v1312, 80
      %v1345 = vpop.permute.xlu0 %1344
      %1346 = vrot.lane.b32.xlu0 %v1313, 80
      %v1347 = vpop.permute.xlu0 %1346
      %1348 = vrot.lane.b32.xlu0 %v1314, 80
      %v1349 = vpop.permute.xlu0 %1348
      %1350 = vrot.lane.b32.xlu0 %v1315, 80
      %v1351 = vpop.permute.xlu0 %1350
      %v1352 = vsel %vm756, %v1329, %v1331
      %v1353 = vsel %vm756, %v1331, %v1333
      %v1354 = vsel %vm756, %v1335, %v1337
      %v1355 = vsel %vm756, %v1337, %v1339
      %v1356 = vsel %vm756, %v1341, %v1343
      %v1357 = vsel %vm756, %v1343, %v1345
      %v1358 = vsel %vm756, %v1347, %v1349
      %v1359 = vsel %vm756, %v1349, %v1351
      %v1372 = vadd.f32 %v1276, %v1352
      %v1373 = vadd.f32 %v1277, %v1353
      %v1374 = vadd.f32 %v1278, %v1333
      %v1375 = vadd.f32 %v1279, %v1354
      %v1376 = vadd.f32 %v1280, %v1355
      %v1377 = vadd.f32 %v1281, %v1339
      %v1378 = vadd.f32 %v1282, %v1356
      %v1379 = vadd.f32 %v1283, %v1357
      %v1380 = vadd.f32 %v1284, %v1345
      %v1381 = vadd.f32 %v1285, %v1358
      %v1382 = vadd.f32 %v1286, %v1359
      %v1383 = vadd.f32 %v1287, %v1351
      %1384 = vset.pattern.permute.xlu0 29
      %1385 = vperm.xlu0 %1384, %v470
      %v1386 = vpop.permute.xlu0 %1385
      %1388 = vset.pattern.permute.xlu0 29
      %1389 = vperm.xlu0 %1388, %v471
      %v1390 = vpop.permute.xlu0 %1389
      %1392 = vset.pattern.permute.xlu0 29
      %1393 = vperm.xlu0 %1392, %v472
      %v1394 = vpop.permute.xlu0 %1393
      %1396 = vset.pattern.permute.xlu0 29
      %1397 = vperm.xlu0 %1396, %v473
      %v1398 = vpop.permute.xlu0 %1397
      %v1400 = vmul.f32 %v502, %v1386
      %v1401 = vmul.f32 %v503, %v1386
      %v1402 = vmul.f32 %v504, %v1386
      %v1403 = vmul.f32 %v505, %v1390
      %v1404 = vmul.f32 %v506, %v1390
      %v1405 = vmul.f32 %v507, %v1390
      %v1406 = vmul.f32 %v508, %v1394
      %v1407 = vmul.f32 %v509, %v1394
      %v1408 = vmul.f32 %v510, %v1394
      %v1409 = vmul.f32 %v511, %v1398
      %v1410 = vmul.f32 %v512, %v1398
      %v1411 = vmul.f32 %v513, %v1398
      %1424 = vrot.lane.b32.xlu0 %v1400, 64
      %v1425 = vpop.permute.xlu0 %1424
      %1426 = vrot.lane.b32.xlu0 %v1401, 64
      %v1427 = vpop.permute.xlu0 %1426
      %1428 = vrot.lane.b32.xlu0 %v1402, 64
      %v1429 = vpop.permute.xlu0 %1428
      %1430 = vrot.lane.b32.xlu0 %v1403, 64
      %v1431 = vpop.permute.xlu0 %1430
      %1432 = vrot.lane.b32.xlu0 %v1404, 64
      %v1433 = vpop.permute.xlu0 %1432
      %1434 = vrot.lane.b32.xlu0 %v1405, 64
      %v1435 = vpop.permute.xlu0 %1434
      %1436 = vrot.lane.b32.xlu0 %v1406, 64
      %v1437 = vpop.permute.xlu0 %1436
      %1438 = vrot.lane.b32.xlu0 %v1407, 64
      %v1439 = vpop.permute.xlu0 %1438
      %1440 = vrot.lane.b32.xlu0 %v1408, 64
      %v1441 = vpop.permute.xlu0 %1440
      %1442 = vrot.lane.b32.xlu0 %v1409, 64
      %v1443 = vpop.permute.xlu0 %1442
      %1444 = vrot.lane.b32.xlu0 %v1410, 64
      %v1445 = vpop.permute.xlu0 %1444
      %1446 = vrot.lane.b32.xlu0 %v1411, 64
      %v1447 = vpop.permute.xlu0 %1446
      %v1448 = vsel %vm845, %v1425, %v1427
      %v1449 = vsel %vm845, %v1427, %v1429
      %v1450 = vsel %vm845, %v1431, %v1433
      %v1451 = vsel %vm845, %v1433, %v1435
      %v1452 = vsel %vm845, %v1437, %v1439
      %v1453 = vsel %vm845, %v1439, %v1441
      %v1454 = vsel %vm845, %v1443, %v1445
      %v1455 = vsel %vm845, %v1445, %v1447
      %v1468 = vadd.f32 %v1372, %v1448
      %v1469 = vadd.f32 %v1373, %v1449
      %v1470 = vadd.f32 %v1374, %v1429
      %v1471 = vadd.f32 %v1375, %v1450
      %v1472 = vadd.f32 %v1376, %v1451
      %v1473 = vadd.f32 %v1377, %v1435
      %v1474 = vadd.f32 %v1378, %v1452
      %v1475 = vadd.f32 %v1379, %v1453
      %v1476 = vadd.f32 %v1380, %v1441
      %v1477 = vadd.f32 %v1381, %v1454
      %v1478 = vadd.f32 %v1382, %v1455
      %v1479 = vadd.f32 %v1383, %v1447
      %1480 = vset.pattern.permute.xlu0 36
      %1481 = vperm.xlu0 %1480, %v470
      %v1482 = vpop.permute.xlu0 %1481
      %1484 = vset.pattern.permute.xlu0 36
      %1485 = vperm.xlu0 %1484, %v471
      %v1486 = vpop.permute.xlu0 %1485
      %1488 = vset.pattern.permute.xlu0 36
      %1489 = vperm.xlu0 %1488, %v472
      %v1490 = vpop.permute.xlu0 %1489
      %1492 = vset.pattern.permute.xlu0 36
      %1493 = vperm.xlu0 %1492, %v473
      %v1494 = vpop.permute.xlu0 %1493
      %v1496 = vmul.f32 %v502, %v1482
      %v1497 = vmul.f32 %v503, %v1482
      %v1498 = vmul.f32 %v504, %v1482
      %v1499 = vmul.f32 %v505, %v1486
      %v1500 = vmul.f32 %v506, %v1486
      %v1501 = vmul.f32 %v507, %v1486
      %v1502 = vmul.f32 %v508, %v1490
      %v1503 = vmul.f32 %v509, %v1490
      %v1504 = vmul.f32 %v510, %v1490
      %v1505 = vmul.f32 %v511, %v1494
      %v1506 = vmul.f32 %v512, %v1494
      %v1507 = vmul.f32 %v513, %v1494
      %1520 = vrot.lane.b32.xlu0 %v1496, 48
      %v1521 = vpop.permute.xlu0 %1520
      %1522 = vrot.lane.b32.xlu0 %v1497, 48
      %v1523 = vpop.permute.xlu0 %1522
      %1524 = vrot.lane.b32.xlu0 %v1498, 48
      %v1525 = vpop.permute.xlu0 %1524
      %1526 = vrot.lane.b32.xlu0 %v1499, 48
      %v1527 = vpop.permute.xlu0 %1526
      %1528 = vrot.lane.b32.xlu0 %v1500, 48
      %v1529 = vpop.permute.xlu0 %1528
      %1530 = vrot.lane.b32.xlu0 %v1501, 48
      %v1531 = vpop.permute.xlu0 %1530
      %1532 = vrot.lane.b32.xlu0 %v1502, 48
      %v1533 = vpop.permute.xlu0 %1532
      %1534 = vrot.lane.b32.xlu0 %v1503, 48
      %v1535 = vpop.permute.xlu0 %1534
      %1536 = vrot.lane.b32.xlu0 %v1504, 48
      %v1537 = vpop.permute.xlu0 %1536
      %1538 = vrot.lane.b32.xlu0 %v1505, 48
      %v1539 = vpop.permute.xlu0 %1538
      %1540 = vrot.lane.b32.xlu0 %v1506, 48
      %v1541 = vpop.permute.xlu0 %1540
      %1542 = vrot.lane.b32.xlu0 %v1507, 48
      %v1543 = vpop.permute.xlu0 %1542
      %v1544 = vsel %vm934, %v1521, %v1523
      %v1545 = vsel %vm934, %v1523, %v1525
      %v1546 = vsel %vm934, %v1527, %v1529
      %v1547 = vsel %vm934, %v1529, %v1531
      %v1548 = vsel %vm934, %v1533, %v1535
      %v1549 = vsel %vm934, %v1535, %v1537
      %v1550 = vsel %vm934, %v1539, %v1541
      %v1551 = vsel %vm934, %v1541, %v1543
      %v1564 = vadd.f32 %v1468, %v1544
      %v1565 = vadd.f32 %v1469, %v1545
      %v1566 = vadd.f32 %v1470, %v1525
      %v1567 = vadd.f32 %v1471, %v1546
      %v1568 = vadd.f32 %v1472, %v1547
      %v1569 = vadd.f32 %v1473, %v1531
      %v1570 = vadd.f32 %v1474, %v1548
      %v1571 = vadd.f32 %v1475, %v1549
      %v1572 = vadd.f32 %v1476, %v1537
      %v1573 = vadd.f32 %v1477, %v1550
      %v1574 = vadd.f32 %v1478, %v1551
      %v1575 = vadd.f32 %v1479, %v1543
      %1576 = vset.pattern.permute.xlu0 43
      %1577 = vperm.xlu0 %1576, %v470
      %v1578 = vpop.permute.xlu0 %1577
      %1580 = vset.pattern.permute.xlu0 43
      %1581 = vperm.xlu0 %1580, %v471
      %v1582 = vpop.permute.xlu0 %1581
      %1584 = vset.pattern.permute.xlu0 43
      %1585 = vperm.xlu0 %1584, %v472
      %v1586 = vpop.permute.xlu0 %1585
      %1588 = vset.pattern.permute.xlu0 43
      %1589 = vperm.xlu0 %1588, %v473
      %v1590 = vpop.permute.xlu0 %1589
      %v1592 = vmul.f32 %v502, %v1578
      %v1593 = vmul.f32 %v503, %v1578
      %v1594 = vmul.f32 %v504, %v1578
      %v1595 = vmul.f32 %v505, %v1582
      %v1596 = vmul.f32 %v506, %v1582
      %v1597 = vmul.f32 %v507, %v1582
      %v1598 = vmul.f32 %v508, %v1586
      %v1599 = vmul.f32 %v509, %v1586
      %v1600 = vmul.f32 %v510, %v1586
      %v1601 = vmul.f32 %v511, %v1590
      %v1602 = vmul.f32 %v512, %v1590
      %v1603 = vmul.f32 %v513, %v1590
      %1616 = vrot.lane.b32.xlu0 %v1592, 32
      %v1617 = vpop.permute.xlu0 %1616
      %1618 = vrot.lane.b32.xlu0 %v1593, 32
      %v1619 = vpop.permute.xlu0 %1618
      %1620 = vrot.lane.b32.xlu0 %v1594, 32
      %v1621 = vpop.permute.xlu0 %1620
      %1622 = vrot.lane.b32.xlu0 %v1595, 32
      %v1623 = vpop.permute.xlu0 %1622
      %1624 = vrot.lane.b32.xlu0 %v1596, 32
      %v1625 = vpop.permute.xlu0 %1624
      %1626 = vrot.lane.b32.xlu0 %v1597, 32
      %v1627 = vpop.permute.xlu0 %1626
      %1628 = vrot.lane.b32.xlu0 %v1598, 32
      %v1629 = vpop.permute.xlu0 %1628
      %1630 = vrot.lane.b32.xlu0 %v1599, 32
      %v1631 = vpop.permute.xlu0 %1630
      %1632 = vrot.lane.b32.xlu0 %v1600, 32
      %v1633 = vpop.permute.xlu0 %1632
      %1634 = vrot.lane.b32.xlu0 %v1601, 32
      %v1635 = vpop.permute.xlu0 %1634
      %1636 = vrot.lane.b32.xlu0 %v1602, 32
      %v1637 = vpop.permute.xlu0 %1636
      %1638 = vrot.lane.b32.xlu0 %v1603, 32
      %v1639 = vpop.permute.xlu0 %1638
      %v1640 = vsel %vm1023, %v1617, %v1619
      %v1641 = vsel %vm1023, %v1619, %v1621
      %v1642 = vsel %vm1023, %v1623, %v1625
      %v1643 = vsel %vm1023, %v1625, %v1627
      %v1644 = vsel %vm1023, %v1629, %v1631
      %v1645 = vsel %vm1023, %v1631, %v1633
      %v1646 = vsel %vm1023, %v1635, %v1637
      %v1647 = vsel %vm1023, %v1637, %v1639
      %v1660 = vadd.f32 %v1564, %v1640
      %v1661 = vadd.f32 %v1565, %v1641
      %v1662 = vadd.f32 %v1566, %v1621
      %v1663 = vadd.f32 %v1567, %v1642
      %v1664 = vadd.f32 %v1568, %v1643
      %v1665 = vadd.f32 %v1569, %v1627
      %v1666 = vadd.f32 %v1570, %v1644
      %v1667 = vadd.f32 %v1571, %v1645
      %v1668 = vadd.f32 %v1572, %v1633
      %v1669 = vadd.f32 %v1573, %v1646
      %v1670 = vadd.f32 %v1574, %v1647
      %v1671 = vadd.f32 %v1575, %v1639
      %s1672 = scalar_lea.vmem %s1, 1
      %v1673 = vld [vmem:[%s1672] ss:$8 sm:$0x3]
      %v1675 = vlaneseq
      %v1676 = vshrl.u32 %v1675, 7
      %v1677 = vsub.s32 0, %v1676
      %v1678 = vrot.slane %v1673, %v1677
      %v1679 = vlaneseq
      %v1680 = vshrl.u32 %v1679, 7
      %v1681 = vsub.s32 1, %v1680
      %v1682 = vrot.slane %v1673, %v1681
      %1683 = vrot.lane.b32.xlu0 %v1678, 1
      %v1684 = vpop.permute.xlu0 %1683
      %1685 = vrot.lane.b32.xlu0 %v1682, 1
      %v1686 = vpop.permute.xlu0 %1685
      %vm1687 = vcmask 7168
      %v1688 = vsel %vm1687, %v1684, %v1686
      %v1692 = vmul.f32 %v1660, %v1684
      %v1693 = vmul.f32 %v1661, %v1688
      %v1694 = vmul.f32 %v1662, %v1686
      %v1695 = vmul.f32 %v1663, %v1684
      %v1696 = vmul.f32 %v1664, %v1688
      %v1697 = vmul.f32 %v1665, %v1686
      %v1698 = vmul.f32 %v1666, %v1684
      %v1699 = vmul.f32 %v1667, %v1688
      %v1700 = vmul.f32 %v1668, %v1686
      %v1701 = vmul.f32 %v1669, %v1684
      %v1702 = vmul.f32 %v1670, %v1688
      %v1703 = vmul.f32 %v1671, %v1686
      %1716 = vrot.lane.b32.xlu0 %v1692, 127
      %v1717 = vpop.permute.xlu0 %1716
      %1718 = vrot.lane.b32.xlu0 %v1693, 127
      %v1719 = vpop.permute.xlu0 %1718
      %1720 = vrot.lane.b32.xlu0 %v1694, 127
      %v1721 = vpop.permute.xlu0 %1720
      %1722 = vrot.lane.b32.xlu0 %v1695, 127
      %v1723 = vpop.permute.xlu0 %1722
      %1724 = vrot.lane.b32.xlu0 %v1696, 127
      %v1725 = vpop.permute.xlu0 %1724
      %1726 = vrot.lane.b32.xlu0 %v1697, 127
      %v1727 = vpop.permute.xlu0 %1726
      %1728 = vrot.lane.b32.xlu0 %v1698, 127
      %v1729 = vpop.permute.xlu0 %1728
      %1730 = vrot.lane.b32.xlu0 %v1699, 127
      %v1731 = vpop.permute.xlu0 %1730
      %1732 = vrot.lane.b32.xlu0 %v1700, 127
      %v1733 = vpop.permute.xlu0 %1732
      %1734 = vrot.lane.b32.xlu0 %v1701, 127
      %v1735 = vpop.permute.xlu0 %1734
      %1736 = vrot.lane.b32.xlu0 %v1702, 127
      %v1737 = vpop.permute.xlu0 %1736
      %1738 = vrot.lane.b32.xlu0 %v1703, 127
      %v1739 = vpop.permute.xlu0 %1738
      %vm1740 = vcmask 1039360
      %v1741 = vsel %vm1740, %v1717, %v1719
      %v1742 = vsel %vm1740, %v1719, %v1721
      %v1743 = vsel %vm1740, %v1723, %v1725
      %v1744 = vsel %vm1740, %v1725, %v1727
      %v1745 = vsel %vm1740, %v1729, %v1731
      %v1746 = vsel %vm1740, %v1731, %v1733
      %v1747 = vsel %vm1740, %v1735, %v1737
      %v1748 = vsel %vm1740, %v1737, %v1739
      %v1757 = vadd.f32 %v1060, %v1741
      %v1758 = vadd.f32 %v1061, %v1742
      %v1759 = vadd.f32 %v1062, %v1743
      %v1760 = vadd.f32 %v1063, %v1744
      %v1761 = vadd.f32 %v1064, %v1745
      %v1762 = vadd.f32 %v1065, %v1746
      %v1763 = vadd.f32 %v1066, %v1747
      %v1764 = vadd.f32 %v1067, %v1748
      %1765 = vset.pattern.permute.xlu0 2
      %1766 = vperm.xlu0 %1765, %v470
      %v1767 = vpop.permute.xlu0 %1766
      %1769 = vset.pattern.permute.xlu0 2
      %1770 = vperm.xlu0 %1769, %v471
      %v1771 = vpop.permute.xlu0 %1770
      %1773 = vset.pattern.permute.xlu0 2
      %1774 = vperm.xlu0 %1773, %v472
      %v1775 = vpop.permute.xlu0 %1774
      %1777 = vset.pattern.permute.xlu0 2
      %1778 = vperm.xlu0 %1777, %v473
      %v1779 = vpop.permute.xlu0 %1778
      %v1781 = vmul.f32 %v502, %v1767
      %v1782 = vmul.f32 %v503, %v1767
      %v1783 = vmul.f32 %v504, %v1767
      %v1784 = vmul.f32 %v505, %v1771
      %v1785 = vmul.f32 %v506, %v1771
      %v1786 = vmul.f32 %v507, %v1771
      %v1787 = vmul.f32 %v508, %v1775
      %v1788 = vmul.f32 %v509, %v1775
      %v1789 = vmul.f32 %v510, %v1775
      %v1790 = vmul.f32 %v511, %v1779
      %v1791 = vmul.f32 %v512, %v1779
      %v1792 = vmul.f32 %v513, %v1779
      %1793 = vset.pattern.permute.xlu0 9
      %1794 = vperm.xlu0 %1793, %v470
      %v1795 = vpop.permute.xlu0 %1794
      %1797 = vset.pattern.permute.xlu0 9
      %1798 = vperm.xlu0 %1797, %v471
      %v1799 = vpop.permute.xlu0 %1798
      %1801 = vset.pattern.permute.xlu0 9
      %1802 = vperm.xlu0 %1801, %v472
      %v1803 = vpop.permute.xlu0 %1802
      %1805 = vset.pattern.permute.xlu0 9
      %1806 = vperm.xlu0 %1805, %v473
      %v1807 = vpop.permute.xlu0 %1806
      %v1809 = vmul.f32 %v502, %v1795
      %v1810 = vmul.f32 %v503, %v1795
      %v1811 = vmul.f32 %v504, %v1795
      %v1812 = vmul.f32 %v505, %v1799
      %v1813 = vmul.f32 %v506, %v1799
      %v1814 = vmul.f32 %v507, %v1799
      %v1815 = vmul.f32 %v508, %v1803
      %v1816 = vmul.f32 %v509, %v1803
      %v1817 = vmul.f32 %v510, %v1803
      %v1818 = vmul.f32 %v511, %v1807
      %v1819 = vmul.f32 %v512, %v1807
      %v1820 = vmul.f32 %v513, %v1807
      %1833 = vrot.lane.b32.xlu0 %v1809, 112
      %v1834 = vpop.permute.xlu0 %1833
      %1835 = vrot.lane.b32.xlu0 %v1810, 112
      %v1836 = vpop.permute.xlu0 %1835
      %1837 = vrot.lane.b32.xlu0 %v1811, 112
      %v1838 = vpop.permute.xlu0 %1837
      %1839 = vrot.lane.b32.xlu0 %v1812, 112
      %v1840 = vpop.permute.xlu0 %1839
      %1841 = vrot.lane.b32.xlu0 %v1813, 112
      %v1842 = vpop.permute.xlu0 %1841
      %1843 = vrot.lane.b32.xlu0 %v1814, 112
      %v1844 = vpop.permute.xlu0 %1843
      %1845 = vrot.lane.b32.xlu0 %v1815, 112
      %v1846 = vpop.permute.xlu0 %1845
      %1847 = vrot.lane.b32.xlu0 %v1816, 112
      %v1848 = vpop.permute.xlu0 %1847
      %1849 = vrot.lane.b32.xlu0 %v1817, 112
      %v1850 = vpop.permute.xlu0 %1849
      %1851 = vrot.lane.b32.xlu0 %v1818, 112
      %v1852 = vpop.permute.xlu0 %1851
      %1853 = vrot.lane.b32.xlu0 %v1819, 112
      %v1854 = vpop.permute.xlu0 %1853
      %1855 = vrot.lane.b32.xlu0 %v1820, 112
      %v1856 = vpop.permute.xlu0 %1855
      %v1857 = vsel %vm578, %v1834, %v1836
      %v1858 = vsel %vm578, %v1836, %v1838
      %v1859 = vsel %vm578, %v1840, %v1842
      %v1860 = vsel %vm578, %v1842, %v1844
      %v1861 = vsel %vm578, %v1846, %v1848
      %v1862 = vsel %vm578, %v1848, %v1850
      %v1863 = vsel %vm578, %v1852, %v1854
      %v1864 = vsel %vm578, %v1854, %v1856
      %v1877 = vadd.f32 %v1781, %v1857
      %v1878 = vadd.f32 %v1782, %v1858
      %v1879 = vadd.f32 %v1783, %v1838
      %v1880 = vadd.f32 %v1784, %v1859
      %v1881 = vadd.f32 %v1785, %v1860
      %v1882 = vadd.f32 %v1786, %v1844
      %v1883 = vadd.f32 %v1787, %v1861
      %v1884 = vadd.f32 %v1788, %v1862
      %v1885 = vadd.f32 %v1789, %v1850
      %v1886 = vadd.f32 %v1790, %v1863
      %v1887 = vadd.f32 %v1791, %v1864
      %v1888 = vadd.f32 %v1792, %v1856
      %1889 = vset.pattern.permute.xlu0 16
      %1890 = vperm.xlu0 %1889, %v470
      %v1891 = vpop.permute.xlu0 %1890
      %1893 = vset.pattern.permute.xlu0 16
      %1894 = vperm.xlu0 %1893, %v471
      %v1895 = vpop.permute.xlu0 %1894
      %1897 = vset.pattern.permute.xlu0 16
      %1898 = vperm.xlu0 %1897, %v472
      %v1899 = vpop.permute.xlu0 %1898
      %1901 = vset.pattern.permute.xlu0 16
      %1902 = vperm.xlu0 %1901, %v473
      %v1903 = vpop.permute.xlu0 %1902
      %v1905 = vmul.f32 %v502, %v1891
      %v1906 = vmul.f32 %v503, %v1891
      %v1907 = vmul.f32 %v504, %v1891
      %v1908 = vmul.f32 %v505, %v1895
      %v1909 = vmul.f32 %v506, %v1895
      %v1910 = vmul.f32 %v507, %v1895
      %v1911 = vmul.f32 %v508, %v1899
      %v1912 = vmul.f32 %v509, %v1899
      %v1913 = vmul.f32 %v510, %v1899
      %v1914 = vmul.f32 %v511, %v1903
      %v1915 = vmul.f32 %v512, %v1903
      %v1916 = vmul.f32 %v513, %v1903
      %1929 = vrot.lane.b32.xlu0 %v1905, 96
      %v1930 = vpop.permute.xlu0 %1929
      %1931 = vrot.lane.b32.xlu0 %v1906, 96
      %v1932 = vpop.permute.xlu0 %1931
      %1933 = vrot.lane.b32.xlu0 %v1907, 96
      %v1934 = vpop.permute.xlu0 %1933
      %1935 = vrot.lane.b32.xlu0 %v1908, 96
      %v1936 = vpop.permute.xlu0 %1935
      %1937 = vrot.lane.b32.xlu0 %v1909, 96
      %v1938 = vpop.permute.xlu0 %1937
      %1939 = vrot.lane.b32.xlu0 %v1910, 96
      %v1940 = vpop.permute.xlu0 %1939
      %1941 = vrot.lane.b32.xlu0 %v1911, 96
      %v1942 = vpop.permute.xlu0 %1941
      %1943 = vrot.lane.b32.xlu0 %v1912, 96
      %v1944 = vpop.permute.xlu0 %1943
      %1945 = vrot.lane.b32.xlu0 %v1913, 96
      %v1946 = vpop.permute.xlu0 %1945
      %1947 = vrot.lane.b32.xlu0 %v1914, 96
      %v1948 = vpop.permute.xlu0 %1947
      %1949 = vrot.lane.b32.xlu0 %v1915, 96
      %v1950 = vpop.permute.xlu0 %1949
      %1951 = vrot.lane.b32.xlu0 %v1916, 96
      %v1952 = vpop.permute.xlu0 %1951
      %v1953 = vsel %vm667, %v1930, %v1932
      %v1954 = vsel %vm667, %v1932, %v1934
      %v1955 = vsel %vm667, %v1936, %v1938
      %v1956 = vsel %vm667, %v1938, %v1940
      %v1957 = vsel %vm667, %v1942, %v1944
      %v1958 = vsel %vm667, %v1944, %v1946
      %v1959 = vsel %vm667, %v1948, %v1950
      %v1960 = vsel %vm667, %v1950, %v1952
      %v1973 = vadd.f32 %v1877, %v1953
      %v1974 = vadd.f32 %v1878, %v1954
      %v1975 = vadd.f32 %v1879, %v1934
      %v1976 = vadd.f32 %v1880, %v1955
      %v1977 = vadd.f32 %v1881, %v1956
      %v1978 = vadd.f32 %v1882, %v1940
      %v1979 = vadd.f32 %v1883, %v1957
      %v1980 = vadd.f32 %v1884, %v1958
      %v1981 = vadd.f32 %v1885, %v1946
      %v1982 = vadd.f32 %v1886, %v1959
      %v1983 = vadd.f32 %v1887, %v1960
      %v1984 = vadd.f32 %v1888, %v1952
      %1985 = vset.pattern.permute.xlu0 23
      %1986 = vperm.xlu0 %1985, %v470
      %v1987 = vpop.permute.xlu0 %1986
      %1989 = vset.pattern.permute.xlu0 23
      %1990 = vperm.xlu0 %1989, %v471
      %v1991 = vpop.permute.xlu0 %1990
      %1993 = vset.pattern.permute.xlu0 23
      %1994 = vperm.xlu0 %1993, %v472
      %v1995 = vpop.permute.xlu0 %1994
      %1997 = vset.pattern.permute.xlu0 23
      %1998 = vperm.xlu0 %1997, %v473
      %v1999 = vpop.permute.xlu0 %1998
      %v2001 = vmul.f32 %v502, %v1987
      %v2002 = vmul.f32 %v503, %v1987
      %v2003 = vmul.f32 %v504, %v1987
      %v2004 = vmul.f32 %v505, %v1991
      %v2005 = vmul.f32 %v506, %v1991
      %v2006 = vmul.f32 %v507, %v1991
      %v2007 = vmul.f32 %v508, %v1995
      %v2008 = vmul.f32 %v509, %v1995
      %v2009 = vmul.f32 %v510, %v1995
      %v2010 = vmul.f32 %v511, %v1999
      %v2011 = vmul.f32 %v512, %v1999
      %v2012 = vmul.f32 %v513, %v1999
      %2025 = vrot.lane.b32.xlu0 %v2001, 80
      %v2026 = vpop.permute.xlu0 %2025
      %2027 = vrot.lane.b32.xlu0 %v2002, 80
      %v2028 = vpop.permute.xlu0 %2027
      %2029 = vrot.lane.b32.xlu0 %v2003, 80
      %v2030 = vpop.permute.xlu0 %2029
      %2031 = vrot.lane.b32.xlu0 %v2004, 80
      %v2032 = vpop.permute.xlu0 %2031
      %2033 = vrot.lane.b32.xlu0 %v2005, 80
      %v2034 = vpop.permute.xlu0 %2033
      %2035 = vrot.lane.b32.xlu0 %v2006, 80
      %v2036 = vpop.permute.xlu0 %2035
      %2037 = vrot.lane.b32.xlu0 %v2007, 80
      %v2038 = vpop.permute.xlu0 %2037
      %2039 = vrot.lane.b32.xlu0 %v2008, 80
      %v2040 = vpop.permute.xlu0 %2039
      %2041 = vrot.lane.b32.xlu0 %v2009, 80
      %v2042 = vpop.permute.xlu0 %2041
      %2043 = vrot.lane.b32.xlu0 %v2010, 80
      %v2044 = vpop.permute.xlu0 %2043
      %2045 = vrot.lane.b32.xlu0 %v2011, 80
      %v2046 = vpop.permute.xlu0 %2045
      %2047 = vrot.lane.b32.xlu0 %v2012, 80
      %v2048 = vpop.permute.xlu0 %2047
      %v2049 = vsel %vm756, %v2026, %v2028
      %v2050 = vsel %vm756, %v2028, %v2030
      %v2051 = vsel %vm756, %v2032, %v2034
      %v2052 = vsel %vm756, %v2034, %v2036
      %v2053 = vsel %vm756, %v2038, %v2040
      %v2054 = vsel %vm756, %v2040, %v2042
      %v2055 = vsel %vm756, %v2044, %v2046
      %v2056 = vsel %vm756, %v2046, %v2048
      %v2069 = vadd.f32 %v1973, %v2049
      %v2070 = vadd.f32 %v1974, %v2050
      %v2071 = vadd.f32 %v1975, %v2030
      %v2072 = vadd.f32 %v1976, %v2051
      %v2073 = vadd.f32 %v1977, %v2052
      %v2074 = vadd.f32 %v1978, %v2036
      %v2075 = vadd.f32 %v1979, %v2053
      %v2076 = vadd.f32 %v1980, %v2054
      %v2077 = vadd.f32 %v1981, %v2042
      %v2078 = vadd.f32 %v1982, %v2055
      %v2079 = vadd.f32 %v1983, %v2056
      %v2080 = vadd.f32 %v1984, %v2048
      %2081 = vset.pattern.permute.xlu0 30
      %2082 = vperm.xlu0 %2081, %v470
      %v2083 = vpop.permute.xlu0 %2082
      %2085 = vset.pattern.permute.xlu0 30
      %2086 = vperm.xlu0 %2085, %v471
      %v2087 = vpop.permute.xlu0 %2086
      %2089 = vset.pattern.permute.xlu0 30
      %2090 = vperm.xlu0 %2089, %v472
      %v2091 = vpop.permute.xlu0 %2090
      %2093 = vset.pattern.permute.xlu0 30
      %2094 = vperm.xlu0 %2093, %v473
      %v2095 = vpop.permute.xlu0 %2094
      %v2097 = vmul.f32 %v502, %v2083
      %v2098 = vmul.f32 %v503, %v2083
      %v2099 = vmul.f32 %v504, %v2083
      %v2100 = vmul.f32 %v505, %v2087
      %v2101 = vmul.f32 %v506, %v2087
      %v2102 = vmul.f32 %v507, %v2087
      %v2103 = vmul.f32 %v508, %v2091
      %v2104 = vmul.f32 %v509, %v2091
      %v2105 = vmul.f32 %v510, %v2091
      %v2106 = vmul.f32 %v511, %v2095
      %v2107 = vmul.f32 %v512, %v2095
      %v2108 = vmul.f32 %v513, %v2095
      %2121 = vrot.lane.b32.xlu0 %v2097, 64
      %v2122 = vpop.permute.xlu0 %2121
      %2123 = vrot.lane.b32.xlu0 %v2098, 64
      %v2124 = vpop.permute.xlu0 %2123
      %2125 = vrot.lane.b32.xlu0 %v2099, 64
      %v2126 = vpop.permute.xlu0 %2125
      %2127 = vrot.lane.b32.xlu0 %v2100, 64
      %v2128 = vpop.permute.xlu0 %2127
      %2129 = vrot.lane.b32.xlu0 %v2101, 64
      %v2130 = vpop.permute.xlu0 %2129
      %2131 = vrot.lane.b32.xlu0 %v2102, 64
      %v2132 = vpop.permute.xlu0 %2131
      %2133 = vrot.lane.b32.xlu0 %v2103, 64
      %v2134 = vpop.permute.xlu0 %2133
      %2135 = vrot.lane.b32.xlu0 %v2104, 64
      %v2136 = vpop.permute.xlu0 %2135
      %2137 = vrot.lane.b32.xlu0 %v2105, 64
      %v2138 = vpop.permute.xlu0 %2137
      %2139 = vrot.lane.b32.xlu0 %v2106, 64
      %v2140 = vpop.permute.xlu0 %2139
      %2141 = vrot.lane.b32.xlu0 %v2107, 64
      %v2142 = vpop.permute.xlu0 %2141
      %2143 = vrot.lane.b32.xlu0 %v2108, 64
      %v2144 = vpop.permute.xlu0 %2143
      %v2145 = vsel %vm845, %v2122, %v2124
      %v2146 = vsel %vm845, %v2124, %v2126
      %v2147 = vsel %vm845, %v2128, %v2130
      %v2148 = vsel %vm845, %v2130, %v2132
      %v2149 = vsel %vm845, %v2134, %v2136
      %v2150 = vsel %vm845, %v2136, %v2138
      %v2151 = vsel %vm845, %v2140, %v2142
      %v2152 = vsel %vm845, %v2142, %v2144
      %v2165 = vadd.f32 %v2069, %v2145
      %v2166 = vadd.f32 %v2070, %v2146
      %v2167 = vadd.f32 %v2071, %v2126
      %v2168 = vadd.f32 %v2072, %v2147
      %v2169 = vadd.f32 %v2073, %v2148
      %v2170 = vadd.f32 %v2074, %v2132
      %v2171 = vadd.f32 %v2075, %v2149
      %v2172 = vadd.f32 %v2076, %v2150
      %v2173 = vadd.f32 %v2077, %v2138
      %v2174 = vadd.f32 %v2078, %v2151
      %v2175 = vadd.f32 %v2079, %v2152
      %v2176 = vadd.f32 %v2080, %v2144
      %2177 = vset.pattern.permute.xlu0 37
      %2178 = vperm.xlu0 %2177, %v470
      %v2179 = vpop.permute.xlu0 %2178
      %2181 = vset.pattern.permute.xlu0 37
      %2182 = vperm.xlu0 %2181, %v471
      %v2183 = vpop.permute.xlu0 %2182
      %2185 = vset.pattern.permute.xlu0 37
      %2186 = vperm.xlu0 %2185, %v472
      %v2187 = vpop.permute.xlu0 %2186
      %2189 = vset.pattern.permute.xlu0 37
      %2190 = vperm.xlu0 %2189, %v473
      %v2191 = vpop.permute.xlu0 %2190
      %v2193 = vmul.f32 %v502, %v2179
      %v2194 = vmul.f32 %v503, %v2179
      %v2195 = vmul.f32 %v504, %v2179
      %v2196 = vmul.f32 %v505, %v2183
      %v2197 = vmul.f32 %v506, %v2183
      %v2198 = vmul.f32 %v507, %v2183
      %v2199 = vmul.f32 %v508, %v2187
      %v2200 = vmul.f32 %v509, %v2187
      %v2201 = vmul.f32 %v510, %v2187
      %v2202 = vmul.f32 %v511, %v2191
      %v2203 = vmul.f32 %v512, %v2191
      %v2204 = vmul.f32 %v513, %v2191
      %2217 = vrot.lane.b32.xlu0 %v2193, 48
      %v2218 = vpop.permute.xlu0 %2217
      %2219 = vrot.lane.b32.xlu0 %v2194, 48
      %v2220 = vpop.permute.xlu0 %2219
      %2221 = vrot.lane.b32.xlu0 %v2195, 48
      %v2222 = vpop.permute.xlu0 %2221
      %2223 = vrot.lane.b32.xlu0 %v2196, 48
      %v2224 = vpop.permute.xlu0 %2223
      %2225 = vrot.lane.b32.xlu0 %v2197, 48
      %v2226 = vpop.permute.xlu0 %2225
      %2227 = vrot.lane.b32.xlu0 %v2198, 48
      %v2228 = vpop.permute.xlu0 %2227
      %2229 = vrot.lane.b32.xlu0 %v2199, 48
      %v2230 = vpop.permute.xlu0 %2229
      %2231 = vrot.lane.b32.xlu0 %v2200, 48
      %v2232 = vpop.permute.xlu0 %2231
      %2233 = vrot.lane.b32.xlu0 %v2201, 48
      %v2234 = vpop.permute.xlu0 %2233
      %2235 = vrot.lane.b32.xlu0 %v2202, 48
      %v2236 = vpop.permute.xlu0 %2235
      %2237 = vrot.lane.b32.xlu0 %v2203, 48
      %v2238 = vpop.permute.xlu0 %2237
      %2239 = vrot.lane.b32.xlu0 %v2204, 48
      %v2240 = vpop.permute.xlu0 %2239
      %v2241 = vsel %vm934, %v2218, %v2220
      %v2242 = vsel %vm934, %v2220, %v2222
      %v2243 = vsel %vm934, %v2224, %v2226
      %v2244 = vsel %vm934, %v2226, %v2228
      %v2245 = vsel %vm934, %v2230, %v2232
      %v2246 = vsel %vm934, %v2232, %v2234
      %v2247 = vsel %vm934, %v2236, %v2238
      %v2248 = vsel %vm934, %v2238, %v2240
      %v2261 = vadd.f32 %v2165, %v2241
      %v2262 = vadd.f32 %v2166, %v2242
      %v2263 = vadd.f32 %v2167, %v2222
      %v2264 = vadd.f32 %v2168, %v2243
      %v2265 = vadd.f32 %v2169, %v2244
      %v2266 = vadd.f32 %v2170, %v2228
      %v2267 = vadd.f32 %v2171, %v2245
      %v2268 = vadd.f32 %v2172, %v2246
      %v2269 = vadd.f32 %v2173, %v2234
      %v2270 = vadd.f32 %v2174, %v2247
      %v2271 = vadd.f32 %v2175, %v2248
      %v2272 = vadd.f32 %v2176, %v2240
      %2273 = vset.pattern.permute.xlu0 44
      %2274 = vperm.xlu0 %2273, %v470
      %v2275 = vpop.permute.xlu0 %2274
      %2277 = vset.pattern.permute.xlu0 44
      %2278 = vperm.xlu0 %2277, %v471
      %v2279 = vpop.permute.xlu0 %2278
      %2281 = vset.pattern.permute.xlu0 44
      %2282 = vperm.xlu0 %2281, %v472
      %v2283 = vpop.permute.xlu0 %2282
      %2285 = vset.pattern.permute.xlu0 44
      %2286 = vperm.xlu0 %2285, %v473
      %v2287 = vpop.permute.xlu0 %2286
      %v2289 = vmul.f32 %v502, %v2275
      %v2290 = vmul.f32 %v503, %v2275
      %v2291 = vmul.f32 %v504, %v2275
      %v2292 = vmul.f32 %v505, %v2279
      %v2293 = vmul.f32 %v506, %v2279
      %v2294 = vmul.f32 %v507, %v2279
      %v2295 = vmul.f32 %v508, %v2283
      %v2296 = vmul.f32 %v509, %v2283
      %v2297 = vmul.f32 %v510, %v2283
      %v2298 = vmul.f32 %v511, %v2287
      %v2299 = vmul.f32 %v512, %v2287
      %v2300 = vmul.f32 %v513, %v2287
      %2313 = vrot.lane.b32.xlu0 %v2289, 32
      %v2314 = vpop.permute.xlu0 %2313
      %2315 = vrot.lane.b32.xlu0 %v2290, 32
      %v2316 = vpop.permute.xlu0 %2315
      %2317 = vrot.lane.b32.xlu0 %v2291, 32
      %v2318 = vpop.permute.xlu0 %2317
      %2319 = vrot.lane.b32.xlu0 %v2292, 32
      %v2320 = vpop.permute.xlu0 %2319
      %2321 = vrot.lane.b32.xlu0 %v2293, 32
      %v2322 = vpop.permute.xlu0 %2321
      %2323 = vrot.lane.b32.xlu0 %v2294, 32
      %v2324 = vpop.permute.xlu0 %2323
      %2325 = vrot.lane.b32.xlu0 %v2295, 32
      %v2326 = vpop.permute.xlu0 %2325
      %2327 = vrot.lane.b32.xlu0 %v2296, 32
      %v2328 = vpop.permute.xlu0 %2327
      %2329 = vrot.lane.b32.xlu0 %v2297, 32
      %v2330 = vpop.permute.xlu0 %2329
      %2331 = vrot.lane.b32.xlu0 %v2298, 32
      %v2332 = vpop.permute.xlu0 %2331
      %2333 = vrot.lane.b32.xlu0 %v2299, 32
      %v2334 = vpop.permute.xlu0 %2333
      %2335 = vrot.lane.b32.xlu0 %v2300, 32
      %v2336 = vpop.permute.xlu0 %2335
      %v2337 = vsel %vm1023, %v2314, %v2316
      %v2338 = vsel %vm1023, %v2316, %v2318
      %v2339 = vsel %vm1023, %v2320, %v2322
      %v2340 = vsel %vm1023, %v2322, %v2324
      %v2341 = vsel %vm1023, %v2326, %v2328
      %v2342 = vsel %vm1023, %v2328, %v2330
      %v2343 = vsel %vm1023, %v2332, %v2334
      %v2344 = vsel %vm1023, %v2334, %v2336
      %v2357 = vadd.f32 %v2261, %v2337
      %v2358 = vadd.f32 %v2262, %v2338
      %v2359 = vadd.f32 %v2263, %v2318
      %v2360 = vadd.f32 %v2264, %v2339
      %v2361 = vadd.f32 %v2265, %v2340
      %v2362 = vadd.f32 %v2266, %v2324
      %v2363 = vadd.f32 %v2267, %v2341
      %v2364 = vadd.f32 %v2268, %v2342
      %v2365 = vadd.f32 %v2269, %v2330
      %v2366 = vadd.f32 %v2270, %v2343
      %v2367 = vadd.f32 %v2271, %v2344
      %v2368 = vadd.f32 %v2272, %v2336
      %s2369 = scalar_lea.vmem %s1, 2
      %v2370 = vld [vmem:[%s2369] ss:$8 sm:$0x3]
      %v2372 = vlaneseq
      %v2373 = vshrl.u32 %v2372, 7
      %v2374 = vsub.s32 0, %v2373
      %v2375 = vrot.slane %v2370, %v2374
      %v2376 = vlaneseq
      %v2377 = vshrl.u32 %v2376, 7
      %v2378 = vsub.s32 1, %v2377
      %v2379 = vrot.slane %v2370, %v2378
      %2380 = vrot.lane.b32.xlu0 %v2375, 2
      %v2381 = vpop.permute.xlu0 %2380
      %2382 = vrot.lane.b32.xlu0 %v2379, 2
      %v2383 = vpop.permute.xlu0 %2382
      %vm2384 = vcmask 15360
      %v2385 = vsel %vm2384, %v2381, %v2383
      %v2389 = vmul.f32 %v2357, %v2381
      %v2390 = vmul.f32 %v2358, %v2385
      %v2391 = vmul.f32 %v2359, %v2383
      %v2392 = vmul.f32 %v2360, %v2381
      %v2393 = vmul.f32 %v2361, %v2385
      %v2394 = vmul.f32 %v2362, %v2383
      %v2395 = vmul.f32 %v2363, %v2381
      %v2396 = vmul.f32 %v2364, %v2385
      %v2397 = vmul.f32 %v2365, %v2383
      %v2398 = vmul.f32 %v2366, %v2381
      %v2399 = vmul.f32 %v2367, %v2385
      %v2400 = vmul.f32 %v2368, %v2383
      %2413 = vrot.lane.b32.xlu0 %v2389, 126
      %v2414 = vpop.permute.xlu0 %2413
      %2415 = vrot.lane.b32.xlu0 %v2390, 126
      %v2416 = vpop.permute.xlu0 %2415
      %2417 = vrot.lane.b32.xlu0 %v2391, 126
      %v2418 = vpop.permute.xlu0 %2417
      %2419 = vrot.lane.b32.xlu0 %v2392, 126
      %v2420 = vpop.permute.xlu0 %2419
      %2421 = vrot.lane.b32.xlu0 %v2393, 126
      %v2422 = vpop.permute.xlu0 %2421
      %2423 = vrot.lane.b32.xlu0 %v2394, 126
      %v2424 = vpop.permute.xlu0 %2423
      %2425 = vrot.lane.b32.xlu0 %v2395, 126
      %v2426 = vpop.permute.xlu0 %2425
      %2427 = vrot.lane.b32.xlu0 %v2396, 126
      %v2428 = vpop.permute.xlu0 %2427
      %2429 = vrot.lane.b32.xlu0 %v2397, 126
      %v2430 = vpop.permute.xlu0 %2429
      %2431 = vrot.lane.b32.xlu0 %v2398, 126
      %v2432 = vpop.permute.xlu0 %2431
      %2433 = vrot.lane.b32.xlu0 %v2399, 126
      %v2434 = vpop.permute.xlu0 %2433
      %2435 = vrot.lane.b32.xlu0 %v2400, 126
      %v2436 = vpop.permute.xlu0 %2435
      %vm2437 = vcmask 1031168
      %v2438 = vsel %vm2437, %v2414, %v2416
      %v2439 = vsel %vm2437, %v2416, %v2418
      %v2440 = vsel %vm2437, %v2420, %v2422
      %v2441 = vsel %vm2437, %v2422, %v2424
      %v2442 = vsel %vm2437, %v2426, %v2428
      %v2443 = vsel %vm2437, %v2428, %v2430
      %v2444 = vsel %vm2437, %v2432, %v2434
      %v2445 = vsel %vm2437, %v2434, %v2436
      %v2454 = vadd.f32 %v1757, %v2438
      %v2455 = vadd.f32 %v1758, %v2439
      %v2456 = vadd.f32 %v1759, %v2440
      %v2457 = vadd.f32 %v1760, %v2441
      %v2458 = vadd.f32 %v1761, %v2442
      %v2459 = vadd.f32 %v1762, %v2443
      %v2460 = vadd.f32 %v1763, %v2444
      %v2461 = vadd.f32 %v1764, %v2445
      %2462 = vset.pattern.permute.xlu0 3
      %2463 = vperm.xlu0 %2462, %v470
      %v2464 = vpop.permute.xlu0 %2463
      %2466 = vset.pattern.permute.xlu0 3
      %2467 = vperm.xlu0 %2466, %v471
      %v2468 = vpop.permute.xlu0 %2467
      %2470 = vset.pattern.permute.xlu0 3
      %2471 = vperm.xlu0 %2470, %v472
      %v2472 = vpop.permute.xlu0 %2471
      %2474 = vset.pattern.permute.xlu0 3
      %2475 = vperm.xlu0 %2474, %v473
      %v2476 = vpop.permute.xlu0 %2475
      %v2478 = vmul.f32 %v502, %v2464
      %v2479 = vmul.f32 %v503, %v2464
      %v2480 = vmul.f32 %v504, %v2464
      %v2481 = vmul.f32 %v505, %v2468
      %v2482 = vmul.f32 %v506, %v2468
      %v2483 = vmul.f32 %v507, %v2468
      %v2484 = vmul.f32 %v508, %v2472
      %v2485 = vmul.f32 %v509, %v2472
      %v2486 = vmul.f32 %v510, %v2472
      %v2487 = vmul.f32 %v511, %v2476
      %v2488 = vmul.f32 %v512, %v2476
      %v2489 = vmul.f32 %v513, %v2476
      %2490 = vset.pattern.permute.xlu0 10
      %2491 = vperm.xlu0 %2490, %v470
      %v2492 = vpop.permute.xlu0 %2491
      %2494 = vset.pattern.permute.xlu0 10
      %2495 = vperm.xlu0 %2494, %v471
      %v2496 = vpop.permute.xlu0 %2495
      %2498 = vset.pattern.permute.xlu0 10
      %2499 = vperm.xlu0 %2498, %v472
      %v2500 = vpop.permute.xlu0 %2499
      %2502 = vset.pattern.permute.xlu0 10
      %2503 = vperm.xlu0 %2502, %v473
      %v2504 = vpop.permute.xlu0 %2503
      %v2506 = vmul.f32 %v502, %v2492
      %v2507 = vmul.f32 %v503, %v2492
      %v2508 = vmul.f32 %v504, %v2492
      %v2509 = vmul.f32 %v505, %v2496
      %v2510 = vmul.f32 %v506, %v2496
      %v2511 = vmul.f32 %v507, %v2496
      %v2512 = vmul.f32 %v508, %v2500
      %v2513 = vmul.f32 %v509, %v2500
      %v2514 = vmul.f32 %v510, %v2500
      %v2515 = vmul.f32 %v511, %v2504
      %v2516 = vmul.f32 %v512, %v2504
      %v2517 = vmul.f32 %v513, %v2504
      %2530 = vrot.lane.b32.xlu0 %v2506, 112
      %v2531 = vpop.permute.xlu0 %2530
      %2532 = vrot.lane.b32.xlu0 %v2507, 112
      %v2533 = vpop.permute.xlu0 %2532
      %2534 = vrot.lane.b32.xlu0 %v2508, 112
      %v2535 = vpop.permute.xlu0 %2534
      %2536 = vrot.lane.b32.xlu0 %v2509, 112
      %v2537 = vpop.permute.xlu0 %2536
      %2538 = vrot.lane.b32.xlu0 %v2510, 112
      %v2539 = vpop.permute.xlu0 %2538
      %2540 = vrot.lane.b32.xlu0 %v2511, 112
      %v2541 = vpop.permute.xlu0 %2540
      %2542 = vrot.lane.b32.xlu0 %v2512, 112
      %v2543 = vpop.permute.xlu0 %2542
      %2544 = vrot.lane.b32.xlu0 %v2513, 112
      %v2545 = vpop.permute.xlu0 %2544
      %2546 = vrot.lane.b32.xlu0 %v2514, 112
      %v2547 = vpop.permute.xlu0 %2546
      %2548 = vrot.lane.b32.xlu0 %v2515, 112
      %v2549 = vpop.permute.xlu0 %2548
      %2550 = vrot.lane.b32.xlu0 %v2516, 112
      %v2551 = vpop.permute.xlu0 %2550
      %2552 = vrot.lane.b32.xlu0 %v2517, 112
      %v2553 = vpop.permute.xlu0 %2552
      %v2554 = vsel %vm578, %v2531, %v2533
      %v2555 = vsel %vm578, %v2533, %v2535
      %v2556 = vsel %vm578, %v2537, %v2539
      %v2557 = vsel %vm578, %v2539, %v2541
      %v2558 = vsel %vm578, %v2543, %v2545
      %v2559 = vsel %vm578, %v2545, %v2547
      %v2560 = vsel %vm578, %v2549, %v2551
      %v2561 = vsel %vm578, %v2551, %v2553
      %v2574 = vadd.f32 %v2478, %v2554
      %v2575 = vadd.f32 %v2479, %v2555
      %v2576 = vadd.f32 %v2480, %v2535
      %v2577 = vadd.f32 %v2481, %v2556
      %v2578 = vadd.f32 %v2482, %v2557
      %v2579 = vadd.f32 %v2483, %v2541
      %v2580 = vadd.f32 %v2484, %v2558
      %v2581 = vadd.f32 %v2485, %v2559
      %v2582 = vadd.f32 %v2486, %v2547
      %v2583 = vadd.f32 %v2487, %v2560
      %v2584 = vadd.f32 %v2488, %v2561
      %v2585 = vadd.f32 %v2489, %v2553
      %2586 = vset.pattern.permute.xlu0 17
      %2587 = vperm.xlu0 %2586, %v470
      %v2588 = vpop.permute.xlu0 %2587
      %2590 = vset.pattern.permute.xlu0 17
      %2591 = vperm.xlu0 %2590, %v471
      %v2592 = vpop.permute.xlu0 %2591
      %2594 = vset.pattern.permute.xlu0 17
      %2595 = vperm.xlu0 %2594, %v472
      %v2596 = vpop.permute.xlu0 %2595
      %2598 = vset.pattern.permute.xlu0 17
      %2599 = vperm.xlu0 %2598, %v473
      %v2600 = vpop.permute.xlu0 %2599
      %v2602 = vmul.f32 %v502, %v2588
      %v2603 = vmul.f32 %v503, %v2588
      %v2604 = vmul.f32 %v504, %v2588
      %v2605 = vmul.f32 %v505, %v2592
      %v2606 = vmul.f32 %v506, %v2592
      %v2607 = vmul.f32 %v507, %v2592
      %v2608 = vmul.f32 %v508, %v2596
      %v2609 = vmul.f32 %v509, %v2596
      %v2610 = vmul.f32 %v510, %v2596
      %v2611 = vmul.f32 %v511, %v2600
      %v2612 = vmul.f32 %v512, %v2600
      %v2613 = vmul.f32 %v513, %v2600
      %2626 = vrot.lane.b32.xlu0 %v2602, 96
      %v2627 = vpop.permute.xlu0 %2626
      %2628 = vrot.lane.b32.xlu0 %v2603, 96
      %v2629 = vpop.permute.xlu0 %2628
      %2630 = vrot.lane.b32.xlu0 %v2604, 96
      %v2631 = vpop.permute.xlu0 %2630
      %2632 = vrot.lane.b32.xlu0 %v2605, 96
      %v2633 = vpop.permute.xlu0 %2632
      %2634 = vrot.lane.b32.xlu0 %v2606, 96
      %v2635 = vpop.permute.xlu0 %2634
      %2636 = vrot.lane.b32.xlu0 %v2607, 96
      %v2637 = vpop.permute.xlu0 %2636
      %2638 = vrot.lane.b32.xlu0 %v2608, 96
      %v2639 = vpop.permute.xlu0 %2638
      %2640 = vrot.lane.b32.xlu0 %v2609, 96
      %v2641 = vpop.permute.xlu0 %2640
      %2642 = vrot.lane.b32.xlu0 %v2610, 96
      %v2643 = vpop.permute.xlu0 %2642
      %2644 = vrot.lane.b32.xlu0 %v2611, 96
      %v2645 = vpop.permute.xlu0 %2644
      %2646 = vrot.lane.b32.xlu0 %v2612, 96
      %v2647 = vpop.permute.xlu0 %2646
      %2648 = vrot.lane.b32.xlu0 %v2613, 96
      %v2649 = vpop.permute.xlu0 %2648
      %v2650 = vsel %vm667, %v2627, %v2629
      %v2651 = vsel %vm667, %v2629, %v2631
      %v2652 = vsel %vm667, %v2633, %v2635
      %v2653 = vsel %vm667, %v2635, %v2637
      %v2654 = vsel %vm667, %v2639, %v2641
      %v2655 = vsel %vm667, %v2641, %v2643
      %v2656 = vsel %vm667, %v2645, %v2647
      %v2657 = vsel %vm667, %v2647, %v2649
      %v2670 = vadd.f32 %v2574, %v2650
      %v2671 = vadd.f32 %v2575, %v2651
      %v2672 = vadd.f32 %v2576, %v2631
      %v2673 = vadd.f32 %v2577, %v2652
      %v2674 = vadd.f32 %v2578, %v2653
      %v2675 = vadd.f32 %v2579, %v2637
      %v2676 = vadd.f32 %v2580, %v2654
      %v2677 = vadd.f32 %v2581, %v2655
      %v2678 = vadd.f32 %v2582, %v2643
      %v2679 = vadd.f32 %v2583, %v2656
      %v2680 = vadd.f32 %v2584, %v2657
      %v2681 = vadd.f32 %v2585, %v2649
      %2682 = vset.pattern.permute.xlu0 24
      %2683 = vperm.xlu0 %2682, %v470
      %v2684 = vpop.permute.xlu0 %2683
      %2686 = vset.pattern.permute.xlu0 24
      %2687 = vperm.xlu0 %2686, %v471
      %v2688 = vpop.permute.xlu0 %2687
      %2690 = vset.pattern.permute.xlu0 24
      %2691 = vperm.xlu0 %2690, %v472
      %v2692 = vpop.permute.xlu0 %2691
      %2694 = vset.pattern.permute.xlu0 24
      %2695 = vperm.xlu0 %2694, %v473
      %v2696 = vpop.permute.xlu0 %2695
      %v2698 = vmul.f32 %v502, %v2684
      %v2699 = vmul.f32 %v503, %v2684
      %v2700 = vmul.f32 %v504, %v2684
      %v2701 = vmul.f32 %v505, %v2688
      %v2702 = vmul.f32 %v506, %v2688
      %v2703 = vmul.f32 %v507, %v2688
      %v2704 = vmul.f32 %v508, %v2692
      %v2705 = vmul.f32 %v509, %v2692
      %v2706 = vmul.f32 %v510, %v2692
      %v2707 = vmul.f32 %v511, %v2696
      %v2708 = vmul.f32 %v512, %v2696
      %v2709 = vmul.f32 %v513, %v2696
      %2722 = vrot.lane.b32.xlu0 %v2698, 80
      %v2723 = vpop.permute.xlu0 %2722
      %2724 = vrot.lane.b32.xlu0 %v2699, 80
      %v2725 = vpop.permute.xlu0 %2724
      %2726 = vrot.lane.b32.xlu0 %v2700, 80
      %v2727 = vpop.permute.xlu0 %2726
      %2728 = vrot.lane.b32.xlu0 %v2701, 80
      %v2729 = vpop.permute.xlu0 %2728
      %2730 = vrot.lane.b32.xlu0 %v2702, 80
      %v2731 = vpop.permute.xlu0 %2730
      %2732 = vrot.lane.b32.xlu0 %v2703, 80
      %v2733 = vpop.permute.xlu0 %2732
      %2734 = vrot.lane.b32.xlu0 %v2704, 80
      %v2735 = vpop.permute.xlu0 %2734
      %2736 = vrot.lane.b32.xlu0 %v2705, 80
      %v2737 = vpop.permute.xlu0 %2736
      %2738 = vrot.lane.b32.xlu0 %v2706, 80
      %v2739 = vpop.permute.xlu0 %2738
      %2740 = vrot.lane.b32.xlu0 %v2707, 80
      %v2741 = vpop.permute.xlu0 %2740
      %2742 = vrot.lane.b32.xlu0 %v2708, 80
      %v2743 = vpop.permute.xlu0 %2742
      %2744 = vrot.lane.b32.xlu0 %v2709, 80
      %v2745 = vpop.permute.xlu0 %2744
      %v2746 = vsel %vm756, %v2723, %v2725
      %v2747 = vsel %vm756, %v2725, %v2727
      %v2748 = vsel %vm756, %v2729, %v2731
      %v2749 = vsel %vm756, %v2731, %v2733
      %v2750 = vsel %vm756, %v2735, %v2737
      %v2751 = vsel %vm756, %v2737, %v2739
      %v2752 = vsel %vm756, %v2741, %v2743
      %v2753 = vsel %vm756, %v2743, %v2745
      %v2766 = vadd.f32 %v2670, %v2746
      %v2767 = vadd.f32 %v2671, %v2747
      %v2768 = vadd.f32 %v2672, %v2727
      %v2769 = vadd.f32 %v2673, %v2748
      %v2770 = vadd.f32 %v2674, %v2749
      %v2771 = vadd.f32 %v2675, %v2733
      %v2772 = vadd.f32 %v2676, %v2750
      %v2773 = vadd.f32 %v2677, %v2751
      %v2774 = vadd.f32 %v2678, %v2739
      %v2775 = vadd.f32 %v2679, %v2752
      %v2776 = vadd.f32 %v2680, %v2753
      %v2777 = vadd.f32 %v2681, %v2745
      %2778 = vset.pattern.permute.xlu0 31
      %2779 = vperm.xlu0 %2778, %v470
      %v2780 = vpop.permute.xlu0 %2779
      %2782 = vset.pattern.permute.xlu0 31
      %2783 = vperm.xlu0 %2782, %v471
      %v2784 = vpop.permute.xlu0 %2783
      %2786 = vset.pattern.permute.xlu0 31
      %2787 = vperm.xlu0 %2786, %v472
      %v2788 = vpop.permute.xlu0 %2787
      %2790 = vset.pattern.permute.xlu0 31
      %2791 = vperm.xlu0 %2790, %v473
      %v2792 = vpop.permute.xlu0 %2791
      %v2794 = vmul.f32 %v502, %v2780
      %v2795 = vmul.f32 %v503, %v2780
      %v2796 = vmul.f32 %v504, %v2780
      %v2797 = vmul.f32 %v505, %v2784
      %v2798 = vmul.f32 %v506, %v2784
      %v2799 = vmul.f32 %v507, %v2784
      %v2800 = vmul.f32 %v508, %v2788
      %v2801 = vmul.f32 %v509, %v2788
      %v2802 = vmul.f32 %v510, %v2788
      %v2803 = vmul.f32 %v511, %v2792
      %v2804 = vmul.f32 %v512, %v2792
      %v2805 = vmul.f32 %v513, %v2792
      %2818 = vrot.lane.b32.xlu0 %v2794, 64
      %v2819 = vpop.permute.xlu0 %2818
      %2820 = vrot.lane.b32.xlu0 %v2795, 64
      %v2821 = vpop.permute.xlu0 %2820
      %2822 = vrot.lane.b32.xlu0 %v2796, 64
      %v2823 = vpop.permute.xlu0 %2822
      %2824 = vrot.lane.b32.xlu0 %v2797, 64
      %v2825 = vpop.permute.xlu0 %2824
      %2826 = vrot.lane.b32.xlu0 %v2798, 64
      %v2827 = vpop.permute.xlu0 %2826
      %2828 = vrot.lane.b32.xlu0 %v2799, 64
      %v2829 = vpop.permute.xlu0 %2828
      %2830 = vrot.lane.b32.xlu0 %v2800, 64
      %v2831 = vpop.permute.xlu0 %2830
      %2832 = vrot.lane.b32.xlu0 %v2801, 64
      %v2833 = vpop.permute.xlu0 %2832
      %2834 = vrot.lane.b32.xlu0 %v2802, 64
      %v2835 = vpop.permute.xlu0 %2834
      %2836 = vrot.lane.b32.xlu0 %v2803, 64
      %v2837 = vpop.permute.xlu0 %2836
      %2838 = vrot.lane.b32.xlu0 %v2804, 64
      %v2839 = vpop.permute.xlu0 %2838
      %2840 = vrot.lane.b32.xlu0 %v2805, 64
      %v2841 = vpop.permute.xlu0 %2840
      %v2842 = vsel %vm845, %v2819, %v2821
      %v2843 = vsel %vm845, %v2821, %v2823
      %v2844 = vsel %vm845, %v2825, %v2827
      %v2845 = vsel %vm845, %v2827, %v2829
      %v2846 = vsel %vm845, %v2831, %v2833
      %v2847 = vsel %vm845, %v2833, %v2835
      %v2848 = vsel %vm845, %v2837, %v2839
      %v2849 = vsel %vm845, %v2839, %v2841
      %v2862 = vadd.f32 %v2766, %v2842
      %v2863 = vadd.f32 %v2767, %v2843
      %v2864 = vadd.f32 %v2768, %v2823
      %v2865 = vadd.f32 %v2769, %v2844
      %v2866 = vadd.f32 %v2770, %v2845
      %v2867 = vadd.f32 %v2771, %v2829
      %v2868 = vadd.f32 %v2772, %v2846
      %v2869 = vadd.f32 %v2773, %v2847
      %v2870 = vadd.f32 %v2774, %v2835
      %v2871 = vadd.f32 %v2775, %v2848
      %v2872 = vadd.f32 %v2776, %v2849
      %v2873 = vadd.f32 %v2777, %v2841
      %2874 = vset.pattern.permute.xlu0 38
      %2875 = vperm.xlu0 %2874, %v470
      %v2876 = vpop.permute.xlu0 %2875
      %2878 = vset.pattern.permute.xlu0 38
      %2879 = vperm.xlu0 %2878, %v471
      %v2880 = vpop.permute.xlu0 %2879
      %2882 = vset.pattern.permute.xlu0 38
      %2883 = vperm.xlu0 %2882, %v472
      %v2884 = vpop.permute.xlu0 %2883
      %2886 = vset.pattern.permute.xlu0 38
      %2887 = vperm.xlu0 %2886, %v473
      %v2888 = vpop.permute.xlu0 %2887
      %v2890 = vmul.f32 %v502, %v2876
      %v2891 = vmul.f32 %v503, %v2876
      %v2892 = vmul.f32 %v504, %v2876
      %v2893 = vmul.f32 %v505, %v2880
      %v2894 = vmul.f32 %v506, %v2880
      %v2895 = vmul.f32 %v507, %v2880
      %v2896 = vmul.f32 %v508, %v2884
      %v2897 = vmul.f32 %v509, %v2884
      %v2898 = vmul.f32 %v510, %v2884
      %v2899 = vmul.f32 %v511, %v2888
      %v2900 = vmul.f32 %v512, %v2888
      %v2901 = vmul.f32 %v513, %v2888
      %2914 = vrot.lane.b32.xlu0 %v2890, 48
      %v2915 = vpop.permute.xlu0 %2914
      %2916 = vrot.lane.b32.xlu0 %v2891, 48
      %v2917 = vpop.permute.xlu0 %2916
      %2918 = vrot.lane.b32.xlu0 %v2892, 48
      %v2919 = vpop.permute.xlu0 %2918
      %2920 = vrot.lane.b32.xlu0 %v2893, 48
      %v2921 = vpop.permute.xlu0 %2920
      %2922 = vrot.lane.b32.xlu0 %v2894, 48
      %v2923 = vpop.permute.xlu0 %2922
      %2924 = vrot.lane.b32.xlu0 %v2895, 48
      %v2925 = vpop.permute.xlu0 %2924
      %2926 = vrot.lane.b32.xlu0 %v2896, 48
      %v2927 = vpop.permute.xlu0 %2926
      %2928 = vrot.lane.b32.xlu0 %v2897, 48
      %v2929 = vpop.permute.xlu0 %2928
      %2930 = vrot.lane.b32.xlu0 %v2898, 48
      %v2931 = vpop.permute.xlu0 %2930
      %2932 = vrot.lane.b32.xlu0 %v2899, 48
      %v2933 = vpop.permute.xlu0 %2932
      %2934 = vrot.lane.b32.xlu0 %v2900, 48
      %v2935 = vpop.permute.xlu0 %2934
      %2936 = vrot.lane.b32.xlu0 %v2901, 48
      %v2937 = vpop.permute.xlu0 %2936
      %v2938 = vsel %vm934, %v2915, %v2917
      %v2939 = vsel %vm934, %v2917, %v2919
      %v2940 = vsel %vm934, %v2921, %v2923
      %v2941 = vsel %vm934, %v2923, %v2925
      %v2942 = vsel %vm934, %v2927, %v2929
      %v2943 = vsel %vm934, %v2929, %v2931
      %v2944 = vsel %vm934, %v2933, %v2935
      %v2945 = vsel %vm934, %v2935, %v2937
      %v2958 = vadd.f32 %v2862, %v2938
      %v2959 = vadd.f32 %v2863, %v2939
      %v2960 = vadd.f32 %v2864, %v2919
      %v2961 = vadd.f32 %v2865, %v2940
      %v2962 = vadd.f32 %v2866, %v2941
      %v2963 = vadd.f32 %v2867, %v2925
      %v2964 = vadd.f32 %v2868, %v2942
      %v2965 = vadd.f32 %v2869, %v2943
      %v2966 = vadd.f32 %v2870, %v2931
      %v2967 = vadd.f32 %v2871, %v2944
      %v2968 = vadd.f32 %v2872, %v2945
      %v2969 = vadd.f32 %v2873, %v2937
      %2970 = vset.pattern.permute.xlu0 45
      %2971 = vperm.xlu0 %2970, %v470
      %v2972 = vpop.permute.xlu0 %2971
      %2974 = vset.pattern.permute.xlu0 45
      %2975 = vperm.xlu0 %2974, %v471
      %v2976 = vpop.permute.xlu0 %2975
      %2978 = vset.pattern.permute.xlu0 45
      %2979 = vperm.xlu0 %2978, %v472
      %v2980 = vpop.permute.xlu0 %2979
      %2982 = vset.pattern.permute.xlu0 45
      %2983 = vperm.xlu0 %2982, %v473
      %v2984 = vpop.permute.xlu0 %2983
      %v2986 = vmul.f32 %v502, %v2972
      %v2987 = vmul.f32 %v503, %v2972
      %v2988 = vmul.f32 %v504, %v2972
      %v2989 = vmul.f32 %v505, %v2976
      %v2990 = vmul.f32 %v506, %v2976
      %v2991 = vmul.f32 %v507, %v2976
      %v2992 = vmul.f32 %v508, %v2980
      %v2993 = vmul.f32 %v509, %v2980
      %v2994 = vmul.f32 %v510, %v2980
      %v2995 = vmul.f32 %v511, %v2984
      %v2996 = vmul.f32 %v512, %v2984
      %v2997 = vmul.f32 %v513, %v2984
      %3010 = vrot.lane.b32.xlu0 %v2986, 32
      %v3011 = vpop.permute.xlu0 %3010
      %3012 = vrot.lane.b32.xlu0 %v2987, 32
      %v3013 = vpop.permute.xlu0 %3012
      %3014 = vrot.lane.b32.xlu0 %v2988, 32
      %v3015 = vpop.permute.xlu0 %3014
      %3016 = vrot.lane.b32.xlu0 %v2989, 32
      %v3017 = vpop.permute.xlu0 %3016
      %3018 = vrot.lane.b32.xlu0 %v2990, 32
      %v3019 = vpop.permute.xlu0 %3018
      %3020 = vrot.lane.b32.xlu0 %v2991, 32
      %v3021 = vpop.permute.xlu0 %3020
      %3022 = vrot.lane.b32.xlu0 %v2992, 32
      %v3023 = vpop.permute.xlu0 %3022
      %3024 = vrot.lane.b32.xlu0 %v2993, 32
      %v3025 = vpop.permute.xlu0 %3024
      %3026 = vrot.lane.b32.xlu0 %v2994, 32
      %v3027 = vpop.permute.xlu0 %3026
      %3028 = vrot.lane.b32.xlu0 %v2995, 32
      %v3029 = vpop.permute.xlu0 %3028
      %3030 = vrot.lane.b32.xlu0 %v2996, 32
      %v3031 = vpop.permute.xlu0 %3030
      %3032 = vrot.lane.b32.xlu0 %v2997, 32
      %v3033 = vpop.permute.xlu0 %3032
      %v3034 = vsel %vm1023, %v3011, %v3013
      %v3035 = vsel %vm1023, %v3013, %v3015
      %v3036 = vsel %vm1023, %v3017, %v3019
      %v3037 = vsel %vm1023, %v3019, %v3021
      %v3038 = vsel %vm1023, %v3023, %v3025
      %v3039 = vsel %vm1023, %v3025, %v3027
      %v3040 = vsel %vm1023, %v3029, %v3031
      %v3041 = vsel %vm1023, %v3031, %v3033
      %v3054 = vadd.f32 %v2958, %v3034
      %v3055 = vadd.f32 %v2959, %v3035
      %v3056 = vadd.f32 %v2960, %v3015
      %v3057 = vadd.f32 %v2961, %v3036
      %v3058 = vadd.f32 %v2962, %v3037
      %v3059 = vadd.f32 %v2963, %v3021
      %v3060 = vadd.f32 %v2964, %v3038
      %v3061 = vadd.f32 %v2965, %v3039
      %v3062 = vadd.f32 %v2966, %v3027
      %v3063 = vadd.f32 %v2967, %v3040
      %v3064 = vadd.f32 %v2968, %v3041
      %v3065 = vadd.f32 %v2969, %v3033
      %3078 = vrot.lane.b32.xlu0 %v3054, 125
      %v3079 = vpop.permute.xlu0 %3078
      %3080 = vrot.lane.b32.xlu0 %v3055, 125
      %v3081 = vpop.permute.xlu0 %3080
      %3082 = vrot.lane.b32.xlu0 %v3056, 125
      %v3083 = vpop.permute.xlu0 %3082
      %3084 = vrot.lane.b32.xlu0 %v3057, 125
      %v3085 = vpop.permute.xlu0 %3084
      %3086 = vrot.lane.b32.xlu0 %v3058, 125
      %v3087 = vpop.permute.xlu0 %3086
      %3088 = vrot.lane.b32.xlu0 %v3059, 125
      %v3089 = vpop.permute.xlu0 %3088
      %3090 = vrot.lane.b32.xlu0 %v3060, 125
      %v3091 = vpop.permute.xlu0 %3090
      %3092 = vrot.lane.b32.xlu0 %v3061, 125
      %v3093 = vpop.permute.xlu0 %3092
      %3094 = vrot.lane.b32.xlu0 %v3062, 125
      %v3095 = vpop.permute.xlu0 %3094
      %3096 = vrot.lane.b32.xlu0 %v3063, 125
      %v3097 = vpop.permute.xlu0 %3096
      %3098 = vrot.lane.b32.xlu0 %v3064, 125
      %v3099 = vpop.permute.xlu0 %3098
      %3100 = vrot.lane.b32.xlu0 %v3065, 125
      %v3101 = vpop.permute.xlu0 %3100
      %vm3102 = vcmask 1022976
      %v3103 = vsel %vm3102, %v3079, %v3081
      %v3104 = vsel %vm3102, %v3081, %v3083
      %v3105 = vsel %vm3102, %v3085, %v3087
      %v3106 = vsel %vm3102, %v3087, %v3089
      %v3107 = vsel %vm3102, %v3091, %v3093
      %v3108 = vsel %vm3102, %v3093, %v3095
      %v3109 = vsel %vm3102, %v3097, %v3099
      %v3110 = vsel %vm3102, %v3099, %v3101
      %v3119 = vadd.f32 %v2454, %v3103
      %v3120 = vadd.f32 %v2455, %v3104
      %v3121 = vadd.f32 %v2456, %v3105
      %v3122 = vadd.f32 %v2457, %v3106
      %v3123 = vadd.f32 %v2458, %v3107
      %v3124 = vadd.f32 %v2459, %v3108
      %v3125 = vadd.f32 %v2460, %v3109
      %v3126 = vadd.f32 %v2461, %v3110
      %3127 = vset.pattern.permute.xlu0 4
      %3128 = vperm.xlu0 %3127, %v470
      %v3129 = vpop.permute.xlu0 %3128
      %3131 = vset.pattern.permute.xlu0 4
      %3132 = vperm.xlu0 %3131, %v471
      %v3133 = vpop.permute.xlu0 %3132
      %3135 = vset.pattern.permute.xlu0 4
      %3136 = vperm.xlu0 %3135, %v472
      %v3137 = vpop.permute.xlu0 %3136
      %3139 = vset.pattern.permute.xlu0 4
      %3140 = vperm.xlu0 %3139, %v473
      %v3141 = vpop.permute.xlu0 %3140
      %v3143 = vmul.f32 %v502, %v3129
      %v3144 = vmul.f32 %v503, %v3129
      %v3145 = vmul.f32 %v504, %v3129
      %v3146 = vmul.f32 %v505, %v3133
      %v3147 = vmul.f32 %v506, %v3133
      %v3148 = vmul.f32 %v507, %v3133
      %v3149 = vmul.f32 %v508, %v3137
      %v3150 = vmul.f32 %v509, %v3137
      %v3151 = vmul.f32 %v510, %v3137
      %v3152 = vmul.f32 %v511, %v3141
      %v3153 = vmul.f32 %v512, %v3141
      %v3154 = vmul.f32 %v513, %v3141
      %3155 = vset.pattern.permute.xlu0 11
      %3156 = vperm.xlu0 %3155, %v470
      %v3157 = vpop.permute.xlu0 %3156
      %3159 = vset.pattern.permute.xlu0 11
      %3160 = vperm.xlu0 %3159, %v471
      %v3161 = vpop.permute.xlu0 %3160
      %3163 = vset.pattern.permute.xlu0 11
      %3164 = vperm.xlu0 %3163, %v472
      %v3165 = vpop.permute.xlu0 %3164
      %3167 = vset.pattern.permute.xlu0 11
      %3168 = vperm.xlu0 %3167, %v473
      %v3169 = vpop.permute.xlu0 %3168
      %v3171 = vmul.f32 %v502, %v3157
      %v3172 = vmul.f32 %v503, %v3157
      %v3173 = vmul.f32 %v504, %v3157
      %v3174 = vmul.f32 %v505, %v3161
      %v3175 = vmul.f32 %v506, %v3161
      %v3176 = vmul.f32 %v507, %v3161
      %v3177 = vmul.f32 %v508, %v3165
      %v3178 = vmul.f32 %v509, %v3165
      %v3179 = vmul.f32 %v510, %v3165
      %v3180 = vmul.f32 %v511, %v3169
      %v3181 = vmul.f32 %v512, %v3169
      %v3182 = vmul.f32 %v513, %v3169
      %3195 = vrot.lane.b32.xlu0 %v3171, 112
      %v3196 = vpop.permute.xlu0 %3195
      %3197 = vrot.lane.b32.xlu0 %v3172, 112
      %v3198 = vpop.permute.xlu0 %3197
      %3199 = vrot.lane.b32.xlu0 %v3173, 112
      %v3200 = vpop.permute.xlu0 %3199
      %3201 = vrot.lane.b32.xlu0 %v3174, 112
      %v3202 = vpop.permute.xlu0 %3201
      %3203 = vrot.lane.b32.xlu0 %v3175, 112
      %v3204 = vpop.permute.xlu0 %3203
      %3205 = vrot.lane.b32.xlu0 %v3176, 112
      %v3206 = vpop.permute.xlu0 %3205
      %3207 = vrot.lane.b32.xlu0 %v3177, 112
      %v3208 = vpop.permute.xlu0 %3207
      %3209 = vrot.lane.b32.xlu0 %v3178, 112
      %v3210 = vpop.permute.xlu0 %3209
      %3211 = vrot.lane.b32.xlu0 %v3179, 112
      %v3212 = vpop.permute.xlu0 %3211
      %3213 = vrot.lane.b32.xlu0 %v3180, 112
      %v3214 = vpop.permute.xlu0 %3213
      %3215 = vrot.lane.b32.xlu0 %v3181, 112
      %v3216 = vpop.permute.xlu0 %3215
      %3217 = vrot.lane.b32.xlu0 %v3182, 112
      %v3218 = vpop.permute.xlu0 %3217
      %v3219 = vsel %vm578, %v3196, %v3198
      %v3220 = vsel %vm578, %v3198, %v3200
      %v3221 = vsel %vm578, %v3202, %v3204
      %v3222 = vsel %vm578, %v3204, %v3206
      %v3223 = vsel %vm578, %v3208, %v3210
      %v3224 = vsel %vm578, %v3210, %v3212
      %v3225 = vsel %vm578, %v3214, %v3216
      %v3226 = vsel %vm578, %v3216, %v3218
      %v3239 = vadd.f32 %v3143, %v3219
      %v3240 = vadd.f32 %v3144, %v3220
      %v3241 = vadd.f32 %v3145, %v3200
      %v3242 = vadd.f32 %v3146, %v3221
      %v3243 = vadd.f32 %v3147, %v3222
      %v3244 = vadd.f32 %v3148, %v3206
      %v3245 = vadd.f32 %v3149, %v3223
      %v3246 = vadd.f32 %v3150, %v3224
      %v3247 = vadd.f32 %v3151, %v3212
      %v3248 = vadd.f32 %v3152, %v3225
      %v3249 = vadd.f32 %v3153, %v3226
      %v3250 = vadd.f32 %v3154, %v3218
      %3251 = vset.pattern.permute.xlu0 18
      %3252 = vperm.xlu0 %3251, %v470
      %v3253 = vpop.permute.xlu0 %3252
      %3255 = vset.pattern.permute.xlu0 18
      %3256 = vperm.xlu0 %3255, %v471
      %v3257 = vpop.permute.xlu0 %3256
      %3259 = vset.pattern.permute.xlu0 18
      %3260 = vperm.xlu0 %3259, %v472
      %v3261 = vpop.permute.xlu0 %3260
      %3263 = vset.pattern.permute.xlu0 18
      %3264 = vperm.xlu0 %3263, %v473
      %v3265 = vpop.permute.xlu0 %3264
      %v3267 = vmul.f32 %v502, %v3253
      %v3268 = vmul.f32 %v503, %v3253
      %v3269 = vmul.f32 %v504, %v3253
      %v3270 = vmul.f32 %v505, %v3257
      %v3271 = vmul.f32 %v506, %v3257
      %v3272 = vmul.f32 %v507, %v3257
      %v3273 = vmul.f32 %v508, %v3261
      %v3274 = vmul.f32 %v509, %v3261
      %v3275 = vmul.f32 %v510, %v3261
      %v3276 = vmul.f32 %v511, %v3265
      %v3277 = vmul.f32 %v512, %v3265
      %v3278 = vmul.f32 %v513, %v3265
      %3291 = vrot.lane.b32.xlu0 %v3267, 96
      %v3292 = vpop.permute.xlu0 %3291
      %3293 = vrot.lane.b32.xlu0 %v3268, 96
      %v3294 = vpop.permute.xlu0 %3293
      %3295 = vrot.lane.b32.xlu0 %v3269, 96
      %v3296 = vpop.permute.xlu0 %3295
      %3297 = vrot.lane.b32.xlu0 %v3270, 96
      %v3298 = vpop.permute.xlu0 %3297
      %3299 = vrot.lane.b32.xlu0 %v3271, 96
      %v3300 = vpop.permute.xlu0 %3299
      %3301 = vrot.lane.b32.xlu0 %v3272, 96
      %v3302 = vpop.permute.xlu0 %3301
      %3303 = vrot.lane.b32.xlu0 %v3273, 96
      %v3304 = vpop.permute.xlu0 %3303
      %3305 = vrot.lane.b32.xlu0 %v3274, 96
      %v3306 = vpop.permute.xlu0 %3305
      %3307 = vrot.lane.b32.xlu0 %v3275, 96
      %v3308 = vpop.permute.xlu0 %3307
      %3309 = vrot.lane.b32.xlu0 %v3276, 96
      %v3310 = vpop.permute.xlu0 %3309
      %3311 = vrot.lane.b32.xlu0 %v3277, 96
      %v3312 = vpop.permute.xlu0 %3311
      %3313 = vrot.lane.b32.xlu0 %v3278, 96
      %v3314 = vpop.permute.xlu0 %3313
      %v3315 = vsel %vm667, %v3292, %v3294
      %v3316 = vsel %vm667, %v3294, %v3296
      %v3317 = vsel %vm667, %v3298, %v3300
      %v3318 = vsel %vm667, %v3300, %v3302
      %v3319 = vsel %vm667, %v3304, %v3306
      %v3320 = vsel %vm667, %v3306, %v3308
      %v3321 = vsel %vm667, %v3310, %v3312
      %v3322 = vsel %vm667, %v3312, %v3314
      %v3335 = vadd.f32 %v3239, %v3315
      %v3336 = vadd.f32 %v3240, %v3316
      %v3337 = vadd.f32 %v3241, %v3296
      %v3338 = vadd.f32 %v3242, %v3317
      %v3339 = vadd.f32 %v3243, %v3318
      %v3340 = vadd.f32 %v3244, %v3302
      %v3341 = vadd.f32 %v3245, %v3319
      %v3342 = vadd.f32 %v3246, %v3320
      %v3343 = vadd.f32 %v3247, %v3308
      %v3344 = vadd.f32 %v3248, %v3321
      %v3345 = vadd.f32 %v3249, %v3322
      %v3346 = vadd.f32 %v3250, %v3314
      %3347 = vset.pattern.permute.xlu0 25
      %3348 = vperm.xlu0 %3347, %v470
      %v3349 = vpop.permute.xlu0 %3348
      %3351 = vset.pattern.permute.xlu0 25
      %3352 = vperm.xlu0 %3351, %v471
      %v3353 = vpop.permute.xlu0 %3352
      %3355 = vset.pattern.permute.xlu0 25
      %3356 = vperm.xlu0 %3355, %v472
      %v3357 = vpop.permute.xlu0 %3356
      %3359 = vset.pattern.permute.xlu0 25
      %3360 = vperm.xlu0 %3359, %v473
      %v3361 = vpop.permute.xlu0 %3360
      %v3363 = vmul.f32 %v502, %v3349
      %v3364 = vmul.f32 %v503, %v3349
      %v3365 = vmul.f32 %v504, %v3349
      %v3366 = vmul.f32 %v505, %v3353
      %v3367 = vmul.f32 %v506, %v3353
      %v3368 = vmul.f32 %v507, %v3353
      %v3369 = vmul.f32 %v508, %v3357
      %v3370 = vmul.f32 %v509, %v3357
      %v3371 = vmul.f32 %v510, %v3357
      %v3372 = vmul.f32 %v511, %v3361
      %v3373 = vmul.f32 %v512, %v3361
      %v3374 = vmul.f32 %v513, %v3361
      %3387 = vrot.lane.b32.xlu0 %v3363, 80
      %v3388 = vpop.permute.xlu0 %3387
      %3389 = vrot.lane.b32.xlu0 %v3364, 80
      %v3390 = vpop.permute.xlu0 %3389
      %3391 = vrot.lane.b32.xlu0 %v3365, 80
      %v3392 = vpop.permute.xlu0 %3391
      %3393 = vrot.lane.b32.xlu0 %v3366, 80
      %v3394 = vpop.permute.xlu0 %3393
      %3395 = vrot.lane.b32.xlu0 %v3367, 80
      %v3396 = vpop.permute.xlu0 %3395
      %3397 = vrot.lane.b32.xlu0 %v3368, 80
      %v3398 = vpop.permute.xlu0 %3397
      %3399 = vrot.lane.b32.xlu0 %v3369, 80
      %v3400 = vpop.permute.xlu0 %3399
      %3401 = vrot.lane.b32.xlu0 %v3370, 80
      %v3402 = vpop.permute.xlu0 %3401
      %3403 = vrot.lane.b32.xlu0 %v3371, 80
      %v3404 = vpop.permute.xlu0 %3403
      %3405 = vrot.lane.b32.xlu0 %v3372, 80
      %v3406 = vpop.permute.xlu0 %3405
      %3407 = vrot.lane.b32.xlu0 %v3373, 80
      %v3408 = vpop.permute.xlu0 %3407
      %3409 = vrot.lane.b32.xlu0 %v3374, 80
      %v3410 = vpop.permute.xlu0 %3409
      %v3411 = vsel %vm756, %v3388, %v3390
      %v3412 = vsel %vm756, %v3390, %v3392
      %v3413 = vsel %vm756, %v3394, %v3396
      %v3414 = vsel %vm756, %v3396, %v3398
      %v3415 = vsel %vm756, %v3400, %v3402
      %v3416 = vsel %vm756, %v3402, %v3404
      %v3417 = vsel %vm756, %v3406, %v3408
      %v3418 = vsel %vm756, %v3408, %v3410
      %v3431 = vadd.f32 %v3335, %v3411
      %v3432 = vadd.f32 %v3336, %v3412
      %v3433 = vadd.f32 %v3337, %v3392
      %v3434 = vadd.f32 %v3338, %v3413
      %v3435 = vadd.f32 %v3339, %v3414
      %v3436 = vadd.f32 %v3340, %v3398
      %v3437 = vadd.f32 %v3341, %v3415
      %v3438 = vadd.f32 %v3342, %v3416
      %v3439 = vadd.f32 %v3343, %v3404
      %v3440 = vadd.f32 %v3344, %v3417
      %v3441 = vadd.f32 %v3345, %v3418
      %v3442 = vadd.f32 %v3346, %v3410
      %3443 = vset.pattern.permute.xlu0 32
      %3444 = vperm.xlu0 %3443, %v470
      %v3445 = vpop.permute.xlu0 %3444
      %3447 = vset.pattern.permute.xlu0 32
      %3448 = vperm.xlu0 %3447, %v471
      %v3449 = vpop.permute.xlu0 %3448
      %3451 = vset.pattern.permute.xlu0 32
      %3452 = vperm.xlu0 %3451, %v472
      %v3453 = vpop.permute.xlu0 %3452
      %3455 = vset.pattern.permute.xlu0 32
      %3456 = vperm.xlu0 %3455, %v473
      %v3457 = vpop.permute.xlu0 %3456
      %v3459 = vmul.f32 %v502, %v3445
      %v3460 = vmul.f32 %v503, %v3445
      %v3461 = vmul.f32 %v504, %v3445
      %v3462 = vmul.f32 %v505, %v3449
      %v3463 = vmul.f32 %v506, %v3449
      %v3464 = vmul.f32 %v507, %v3449
      %v3465 = vmul.f32 %v508, %v3453
      %v3466 = vmul.f32 %v509, %v3453
      %v3467 = vmul.f32 %v510, %v3453
      %v3468 = vmul.f32 %v511, %v3457
      %v3469 = vmul.f32 %v512, %v3457
      %v3470 = vmul.f32 %v513, %v3457
      %3483 = vrot.lane.b32.xlu0 %v3459, 64
      %v3484 = vpop.permute.xlu0 %3483
      %3485 = vrot.lane.b32.xlu0 %v3460, 64
      %v3486 = vpop.permute.xlu0 %3485
      %3487 = vrot.lane.b32.xlu0 %v3461, 64
      %v3488 = vpop.permute.xlu0 %3487
      %3489 = vrot.lane.b32.xlu0 %v3462, 64
      %v3490 = vpop.permute.xlu0 %3489
      %3491 = vrot.lane.b32.xlu0 %v3463, 64
      %v3492 = vpop.permute.xlu0 %3491
      %3493 = vrot.lane.b32.xlu0 %v3464, 64
      %v3494 = vpop.permute.xlu0 %3493
      %3495 = vrot.lane.b32.xlu0 %v3465, 64
      %v3496 = vpop.permute.xlu0 %3495
      %3497 = vrot.lane.b32.xlu0 %v3466, 64
      %v3498 = vpop.permute.xlu0 %3497
      %3499 = vrot.lane.b32.xlu0 %v3467, 64
      %v3500 = vpop.permute.xlu0 %3499
      %3501 = vrot.lane.b32.xlu0 %v3468, 64
      %v3502 = vpop.permute.xlu0 %3501
      %3503 = vrot.lane.b32.xlu0 %v3469, 64
      %v3504 = vpop.permute.xlu0 %3503
      %3505 = vrot.lane.b32.xlu0 %v3470, 64
      %v3506 = vpop.permute.xlu0 %3505
      %v3507 = vsel %vm845, %v3484, %v3486
      %v3508 = vsel %vm845, %v3486, %v3488
      %v3509 = vsel %vm845, %v3490, %v3492
      %v3510 = vsel %vm845, %v3492, %v3494
      %v3511 = vsel %vm845, %v3496, %v3498
      %v3512 = vsel %vm845, %v3498, %v3500
      %v3513 = vsel %vm845, %v3502, %v3504
      %v3514 = vsel %vm845, %v3504, %v3506
      %v3527 = vadd.f32 %v3431, %v3507
      %v3528 = vadd.f32 %v3432, %v3508
      %v3529 = vadd.f32 %v3433, %v3488
      %v3530 = vadd.f32 %v3434, %v3509
      %v3531 = vadd.f32 %v3435, %v3510
      %v3532 = vadd.f32 %v3436, %v3494
      %v3533 = vadd.f32 %v3437, %v3511
      %v3534 = vadd.f32 %v3438, %v3512
      %v3535 = vadd.f32 %v3439, %v3500
      %v3536 = vadd.f32 %v3440, %v3513
      %v3537 = vadd.f32 %v3441, %v3514
      %v3538 = vadd.f32 %v3442, %v3506
      %3539 = vset.pattern.permute.xlu0 39
      %3540 = vperm.xlu0 %3539, %v470
      %v3541 = vpop.permute.xlu0 %3540
      %3543 = vset.pattern.permute.xlu0 39
      %3544 = vperm.xlu0 %3543, %v471
      %v3545 = vpop.permute.xlu0 %3544
      %3547 = vset.pattern.permute.xlu0 39
      %3548 = vperm.xlu0 %3547, %v472
      %v3549 = vpop.permute.xlu0 %3548
      %3551 = vset.pattern.permute.xlu0 39
      %3552 = vperm.xlu0 %3551, %v473
      %v3553 = vpop.permute.xlu0 %3552
      %v3555 = vmul.f32 %v502, %v3541
      %v3556 = vmul.f32 %v503, %v3541
      %v3557 = vmul.f32 %v504, %v3541
      %v3558 = vmul.f32 %v505, %v3545
      %v3559 = vmul.f32 %v506, %v3545
      %v3560 = vmul.f32 %v507, %v3545
      %v3561 = vmul.f32 %v508, %v3549
      %v3562 = vmul.f32 %v509, %v3549
      %v3563 = vmul.f32 %v510, %v3549
      %v3564 = vmul.f32 %v511, %v3553
      %v3565 = vmul.f32 %v512, %v3553
      %v3566 = vmul.f32 %v513, %v3553
      %3579 = vrot.lane.b32.xlu0 %v3555, 48
      %v3580 = vpop.permute.xlu0 %3579
      %3581 = vrot.lane.b32.xlu0 %v3556, 48
      %v3582 = vpop.permute.xlu0 %3581
      %3583 = vrot.lane.b32.xlu0 %v3557, 48
      %v3584 = vpop.permute.xlu0 %3583
      %3585 = vrot.lane.b32.xlu0 %v3558, 48
      %v3586 = vpop.permute.xlu0 %3585
      %3587 = vrot.lane.b32.xlu0 %v3559, 48
      %v3588 = vpop.permute.xlu0 %3587
      %3589 = vrot.lane.b32.xlu0 %v3560, 48
      %v3590 = vpop.permute.xlu0 %3589
      %3591 = vrot.lane.b32.xlu0 %v3561, 48
      %v3592 = vpop.permute.xlu0 %3591
      %3593 = vrot.lane.b32.xlu0 %v3562, 48
      %v3594 = vpop.permute.xlu0 %3593
      %3595 = vrot.lane.b32.xlu0 %v3563, 48
      %v3596 = vpop.permute.xlu0 %3595
      %3597 = vrot.lane.b32.xlu0 %v3564, 48
      %v3598 = vpop.permute.xlu0 %3597
      %3599 = vrot.lane.b32.xlu0 %v3565, 48
      %v3600 = vpop.permute.xlu0 %3599
      %3601 = vrot.lane.b32.xlu0 %v3566, 48
      %v3602 = vpop.permute.xlu0 %3601
      %v3603 = vsel %vm934, %v3580, %v3582
      %v3604 = vsel %vm934, %v3582, %v3584
      %v3605 = vsel %vm934, %v3586, %v3588
      %v3606 = vsel %vm934, %v3588, %v3590
      %v3607 = vsel %vm934, %v3592, %v3594
      %v3608 = vsel %vm934, %v3594, %v3596
      %v3609 = vsel %vm934, %v3598, %v3600
      %v3610 = vsel %vm934, %v3600, %v3602
      %v3623 = vadd.f32 %v3527, %v3603
      %v3624 = vadd.f32 %v3528, %v3604
      %v3625 = vadd.f32 %v3529, %v3584
      %v3626 = vadd.f32 %v3530, %v3605
      %v3627 = vadd.f32 %v3531, %v3606
      %v3628 = vadd.f32 %v3532, %v3590
      %v3629 = vadd.f32 %v3533, %v3607
      %v3630 = vadd.f32 %v3534, %v3608
      %v3631 = vadd.f32 %v3535, %v3596
      %v3632 = vadd.f32 %v3536, %v3609
      %v3633 = vadd.f32 %v3537, %v3610
      %v3634 = vadd.f32 %v3538, %v3602
      %3635 = vset.pattern.permute.xlu0 46
      %3636 = vperm.xlu0 %3635, %v470
      %v3637 = vpop.permute.xlu0 %3636
      %3639 = vset.pattern.permute.xlu0 46
      %3640 = vperm.xlu0 %3639, %v471
      %v3641 = vpop.permute.xlu0 %3640
      %3643 = vset.pattern.permute.xlu0 46
      %3644 = vperm.xlu0 %3643, %v472
      %v3645 = vpop.permute.xlu0 %3644
      %3647 = vset.pattern.permute.xlu0 46
      %3648 = vperm.xlu0 %3647, %v473
      %v3649 = vpop.permute.xlu0 %3648
      %v3651 = vmul.f32 %v502, %v3637
      %v3652 = vmul.f32 %v503, %v3637
      %v3653 = vmul.f32 %v504, %v3637
      %v3654 = vmul.f32 %v505, %v3641
      %v3655 = vmul.f32 %v506, %v3641
      %v3656 = vmul.f32 %v507, %v3641
      %v3657 = vmul.f32 %v508, %v3645
      %v3658 = vmul.f32 %v509, %v3645
      %v3659 = vmul.f32 %v510, %v3645
      %v3660 = vmul.f32 %v511, %v3649
      %v3661 = vmul.f32 %v512, %v3649
      %v3662 = vmul.f32 %v513, %v3649
      %3675 = vrot.lane.b32.xlu0 %v3651, 32
      %v3676 = vpop.permute.xlu0 %3675
      %3677 = vrot.lane.b32.xlu0 %v3652, 32
      %v3678 = vpop.permute.xlu0 %3677
      %3679 = vrot.lane.b32.xlu0 %v3653, 32
      %v3680 = vpop.permute.xlu0 %3679
      %3681 = vrot.lane.b32.xlu0 %v3654, 32
      %v3682 = vpop.permute.xlu0 %3681
      %3683 = vrot.lane.b32.xlu0 %v3655, 32
      %v3684 = vpop.permute.xlu0 %3683
      %3685 = vrot.lane.b32.xlu0 %v3656, 32
      %v3686 = vpop.permute.xlu0 %3685
      %3687 = vrot.lane.b32.xlu0 %v3657, 32
      %v3688 = vpop.permute.xlu0 %3687
      %3689 = vrot.lane.b32.xlu0 %v3658, 32
      %v3690 = vpop.permute.xlu0 %3689
      %3691 = vrot.lane.b32.xlu0 %v3659, 32
      %v3692 = vpop.permute.xlu0 %3691
      %3693 = vrot.lane.b32.xlu0 %v3660, 32
      %v3694 = vpop.permute.xlu0 %3693
      %3695 = vrot.lane.b32.xlu0 %v3661, 32
      %v3696 = vpop.permute.xlu0 %3695
      %3697 = vrot.lane.b32.xlu0 %v3662, 32
      %v3698 = vpop.permute.xlu0 %3697
      %v3699 = vsel %vm1023, %v3676, %v3678
      %v3700 = vsel %vm1023, %v3678, %v3680
      %v3701 = vsel %vm1023, %v3682, %v3684
      %v3702 = vsel %vm1023, %v3684, %v3686
      %v3703 = vsel %vm1023, %v3688, %v3690
      %v3704 = vsel %vm1023, %v3690, %v3692
      %v3705 = vsel %vm1023, %v3694, %v3696
      %v3706 = vsel %vm1023, %v3696, %v3698
      %v3719 = vadd.f32 %v3623, %v3699
      %v3720 = vadd.f32 %v3624, %v3700
      %v3721 = vadd.f32 %v3625, %v3680
      %v3722 = vadd.f32 %v3626, %v3701
      %v3723 = vadd.f32 %v3627, %v3702
      %v3724 = vadd.f32 %v3628, %v3686
      %v3725 = vadd.f32 %v3629, %v3703
      %v3726 = vadd.f32 %v3630, %v3704
      %v3727 = vadd.f32 %v3631, %v3692
      %v3728 = vadd.f32 %v3632, %v3705
      %v3729 = vadd.f32 %v3633, %v3706
      %v3730 = vadd.f32 %v3634, %v3698
      %s3731 = scalar_lea.vmem %s1, 4
      %v3732 = vld [vmem:[%s3731] ss:$8 sm:$0x3]
      %v3734 = vlaneseq
      %v3735 = vshrl.u32 %v3734, 7
      %v3736 = vsub.s32 0, %v3735
      %v3737 = vrot.slane %v3732, %v3736
      %v3738 = vlaneseq
      %v3739 = vshrl.u32 %v3738, 7
      %v3740 = vsub.s32 1, %v3739
      %v3741 = vrot.slane %v3732, %v3740
      %3742 = vrot.lane.b32.xlu0 %v3737, 4
      %v3743 = vpop.permute.xlu0 %3742
      %3744 = vrot.lane.b32.xlu0 %v3741, 4
      %v3745 = vpop.permute.xlu0 %3744
      %vm3746 = vcmask 31744
      %v3747 = vsel %vm3746, %v3743, %v3745
      %v3751 = vmul.f32 %v3719, %v3743
      %v3752 = vmul.f32 %v3720, %v3747
      %v3753 = vmul.f32 %v3721, %v3745
      %v3754 = vmul.f32 %v3722, %v3743
      %v3755 = vmul.f32 %v3723, %v3747
      %v3756 = vmul.f32 %v3724, %v3745
      %v3757 = vmul.f32 %v3725, %v3743
      %v3758 = vmul.f32 %v3726, %v3747
      %v3759 = vmul.f32 %v3727, %v3745
      %v3760 = vmul.f32 %v3728, %v3743
      %v3761 = vmul.f32 %v3729, %v3747
      %v3762 = vmul.f32 %v3730, %v3745
      %3775 = vrot.lane.b32.xlu0 %v3751, 124
      %v3776 = vpop.permute.xlu0 %3775
      %3777 = vrot.lane.b32.xlu0 %v3752, 124
      %v3778 = vpop.permute.xlu0 %3777
      %3779 = vrot.lane.b32.xlu0 %v3753, 124
      %v3780 = vpop.permute.xlu0 %3779
      %3781 = vrot.lane.b32.xlu0 %v3754, 124
      %v3782 = vpop.permute.xlu0 %3781
      %3783 = vrot.lane.b32.xlu0 %v3755, 124
      %v3784 = vpop.permute.xlu0 %3783
      %3785 = vrot.lane.b32.xlu0 %v3756, 124
      %v3786 = vpop.permute.xlu0 %3785
      %3787 = vrot.lane.b32.xlu0 %v3757, 124
      %v3788 = vpop.permute.xlu0 %3787
      %3789 = vrot.lane.b32.xlu0 %v3758, 124
      %v3790 = vpop.permute.xlu0 %3789
      %3791 = vrot.lane.b32.xlu0 %v3759, 124
      %v3792 = vpop.permute.xlu0 %3791
      %3793 = vrot.lane.b32.xlu0 %v3760, 124
      %v3794 = vpop.permute.xlu0 %3793
      %3795 = vrot.lane.b32.xlu0 %v3761, 124
      %v3796 = vpop.permute.xlu0 %3795
      %3797 = vrot.lane.b32.xlu0 %v3762, 124
      %v3798 = vpop.permute.xlu0 %3797
      %vm3799 = vcmask 1014784
      %v3800 = vsel %vm3799, %v3776, %v3778
      %v3801 = vsel %vm3799, %v3778, %v3780
      %v3802 = vsel %vm3799, %v3782, %v3784
      %v3803 = vsel %vm3799, %v3784, %v3786
      %v3804 = vsel %vm3799, %v3788, %v3790
      %v3805 = vsel %vm3799, %v3790, %v3792
      %v3806 = vsel %vm3799, %v3794, %v3796
      %v3807 = vsel %vm3799, %v3796, %v3798
      %v3816 = vadd.f32 %v3119, %v3800
      %v3817 = vadd.f32 %v3120, %v3801
      %v3818 = vadd.f32 %v3121, %v3802
      %v3819 = vadd.f32 %v3122, %v3803
      %v3820 = vadd.f32 %v3123, %v3804
      %v3821 = vadd.f32 %v3124, %v3805
      %v3822 = vadd.f32 %v3125, %v3806
      %v3823 = vadd.f32 %v3126, %v3807
      %3824 = vset.pattern.permute.xlu0 5
      %3825 = vperm.xlu0 %3824, %v470
      %v3826 = vpop.permute.xlu0 %3825
      %3828 = vset.pattern.permute.xlu0 5
      %3829 = vperm.xlu0 %3828, %v471
      %v3830 = vpop.permute.xlu0 %3829
      %3832 = vset.pattern.permute.xlu0 5
      %3833 = vperm.xlu0 %3832, %v472
      %v3834 = vpop.permute.xlu0 %3833
      %3836 = vset.pattern.permute.xlu0 5
      %3837 = vperm.xlu0 %3836, %v473
      %v3838 = vpop.permute.xlu0 %3837
      %v3840 = vmul.f32 %v502, %v3826
      %v3841 = vmul.f32 %v503, %v3826
      %v3842 = vmul.f32 %v504, %v3826
      %v3843 = vmul.f32 %v505, %v3830
      %v3844 = vmul.f32 %v506, %v3830
      %v3845 = vmul.f32 %v507, %v3830
      %v3846 = vmul.f32 %v508, %v3834
      %v3847 = vmul.f32 %v509, %v3834
      %v3848 = vmul.f32 %v510, %v3834
      %v3849 = vmul.f32 %v511, %v3838
      %v3850 = vmul.f32 %v512, %v3838
      %v3851 = vmul.f32 %v513, %v3838
      %3852 = vset.pattern.permute.xlu0 12
      %3853 = vperm.xlu0 %3852, %v470
      %v3854 = vpop.permute.xlu0 %3853
      %3856 = vset.pattern.permute.xlu0 12
      %3857 = vperm.xlu0 %3856, %v471
      %v3858 = vpop.permute.xlu0 %3857
      %3860 = vset.pattern.permute.xlu0 12
      %3861 = vperm.xlu0 %3860, %v472
      %v3862 = vpop.permute.xlu0 %3861
      %3864 = vset.pattern.permute.xlu0 12
      %3865 = vperm.xlu0 %3864, %v473
      %v3866 = vpop.permute.xlu0 %3865
      %v3868 = vmul.f32 %v502, %v3854
      %v3869 = vmul.f32 %v503, %v3854
      %v3870 = vmul.f32 %v504, %v3854
      %v3871 = vmul.f32 %v505, %v3858
      %v3872 = vmul.f32 %v506, %v3858
      %v3873 = vmul.f32 %v507, %v3858
      %v3874 = vmul.f32 %v508, %v3862
      %v3875 = vmul.f32 %v509, %v3862
      %v3876 = vmul.f32 %v510, %v3862
      %v3877 = vmul.f32 %v511, %v3866
      %v3878 = vmul.f32 %v512, %v3866
      %v3879 = vmul.f32 %v513, %v3866
      %3892 = vrot.lane.b32.xlu0 %v3868, 112
      %v3893 = vpop.permute.xlu0 %3892
      %3894 = vrot.lane.b32.xlu0 %v3869, 112
      %v3895 = vpop.permute.xlu0 %3894
      %3896 = vrot.lane.b32.xlu0 %v3870, 112
      %v3897 = vpop.permute.xlu0 %3896
      %3898 = vrot.lane.b32.xlu0 %v3871, 112
      %v3899 = vpop.permute.xlu0 %3898
      %3900 = vrot.lane.b32.xlu0 %v3872, 112
      %v3901 = vpop.permute.xlu0 %3900
      %3902 = vrot.lane.b32.xlu0 %v3873, 112
      %v3903 = vpop.permute.xlu0 %3902
      %3904 = vrot.lane.b32.xlu0 %v3874, 112
      %v3905 = vpop.permute.xlu0 %3904
      %3906 = vrot.lane.b32.xlu0 %v3875, 112
      %v3907 = vpop.permute.xlu0 %3906
      %3908 = vrot.lane.b32.xlu0 %v3876, 112
      %v3909 = vpop.permute.xlu0 %3908
      %3910 = vrot.lane.b32.xlu0 %v3877, 112
      %v3911 = vpop.permute.xlu0 %3910
      %3912 = vrot.lane.b32.xlu0 %v3878, 112
      %v3913 = vpop.permute.xlu0 %3912
      %3914 = vrot.lane.b32.xlu0 %v3879, 112
      %v3915 = vpop.permute.xlu0 %3914
      %v3916 = vsel %vm578, %v3893, %v3895
      %v3917 = vsel %vm578, %v3895, %v3897
      %v3918 = vsel %vm578, %v3899, %v3901
      %v3919 = vsel %vm578, %v3901, %v3903
      %v3920 = vsel %vm578, %v3905, %v3907
      %v3921 = vsel %vm578, %v3907, %v3909
      %v3922 = vsel %vm578, %v3911, %v3913
      %v3923 = vsel %vm578, %v3913, %v3915
      %v3936 = vadd.f32 %v3840, %v3916
      %v3937 = vadd.f32 %v3841, %v3917
      %v3938 = vadd.f32 %v3842, %v3897
      %v3939 = vadd.f32 %v3843, %v3918
      %v3940 = vadd.f32 %v3844, %v3919
      %v3941 = vadd.f32 %v3845, %v3903
      %v3942 = vadd.f32 %v3846, %v3920
      %v3943 = vadd.f32 %v3847, %v3921
      %v3944 = vadd.f32 %v3848, %v3909
      %v3945 = vadd.f32 %v3849, %v3922
      %v3946 = vadd.f32 %v3850, %v3923
      %v3947 = vadd.f32 %v3851, %v3915
      %3948 = vset.pattern.permute.xlu0 19
      %3949 = vperm.xlu0 %3948, %v470
      %v3950 = vpop.permute.xlu0 %3949
      %3952 = vset.pattern.permute.xlu0 19
      %3953 = vperm.xlu0 %3952, %v471
      %v3954 = vpop.permute.xlu0 %3953
      %3956 = vset.pattern.permute.xlu0 19
      %3957 = vperm.xlu0 %3956, %v472
      %v3958 = vpop.permute.xlu0 %3957
      %3960 = vset.pattern.permute.xlu0 19
      %3961 = vperm.xlu0 %3960, %v473
      %v3962 = vpop.permute.xlu0 %3961
      %v3964 = vmul.f32 %v502, %v3950
      %v3965 = vmul.f32 %v503, %v3950
      %v3966 = vmul.f32 %v504, %v3950
      %v3967 = vmul.f32 %v505, %v3954
      %v3968 = vmul.f32 %v506, %v3954
      %v3969 = vmul.f32 %v507, %v3954
      %v3970 = vmul.f32 %v508, %v3958
      %v3971 = vmul.f32 %v509, %v3958
      %v3972 = vmul.f32 %v510, %v3958
      %v3973 = vmul.f32 %v511, %v3962
      %v3974 = vmul.f32 %v512, %v3962
      %v3975 = vmul.f32 %v513, %v3962
      %3988 = vrot.lane.b32.xlu0 %v3964, 96
      %v3989 = vpop.permute.xlu0 %3988
      %3990 = vrot.lane.b32.xlu0 %v3965, 96
      %v3991 = vpop.permute.xlu0 %3990
      %3992 = vrot.lane.b32.xlu0 %v3966, 96
      %v3993 = vpop.permute.xlu0 %3992
      %3994 = vrot.lane.b32.xlu0 %v3967, 96
      %v3995 = vpop.permute.xlu0 %3994
      %3996 = vrot.lane.b32.xlu0 %v3968, 96
      %v3997 = vpop.permute.xlu0 %3996
      %3998 = vrot.lane.b32.xlu0 %v3969, 96
      %v3999 = vpop.permute.xlu0 %3998
      %4000 = vrot.lane.b32.xlu0 %v3970, 96
      %v4001 = vpop.permute.xlu0 %4000
      %4002 = vrot.lane.b32.xlu0 %v3971, 96
      %v4003 = vpop.permute.xlu0 %4002
      %4004 = vrot.lane.b32.xlu0 %v3972, 96
      %v4005 = vpop.permute.xlu0 %4004
      %4006 = vrot.lane.b32.xlu0 %v3973, 96
      %v4007 = vpop.permute.xlu0 %4006
      %4008 = vrot.lane.b32.xlu0 %v3974, 96
      %v4009 = vpop.permute.xlu0 %4008
      %4010 = vrot.lane.b32.xlu0 %v3975, 96
      %v4011 = vpop.permute.xlu0 %4010
      %v4012 = vsel %vm667, %v3989, %v3991
      %v4013 = vsel %vm667, %v3991, %v3993
      %v4014 = vsel %vm667, %v3995, %v3997
      %v4015 = vsel %vm667, %v3997, %v3999
      %v4016 = vsel %vm667, %v4001, %v4003
      %v4017 = vsel %vm667, %v4003, %v4005
      %v4018 = vsel %vm667, %v4007, %v4009
      %v4019 = vsel %vm667, %v4009, %v4011
      %v4032 = vadd.f32 %v3936, %v4012
      %v4033 = vadd.f32 %v3937, %v4013
      %v4034 = vadd.f32 %v3938, %v3993
      %v4035 = vadd.f32 %v3939, %v4014
      %v4036 = vadd.f32 %v3940, %v4015
      %v4037 = vadd.f32 %v3941, %v3999
      %v4038 = vadd.f32 %v3942, %v4016
      %v4039 = vadd.f32 %v3943, %v4017
      %v4040 = vadd.f32 %v3944, %v4005
      %v4041 = vadd.f32 %v3945, %v4018
      %v4042 = vadd.f32 %v3946, %v4019
      %v4043 = vadd.f32 %v3947, %v4011
      %4044 = vset.pattern.permute.xlu0 26
      %4045 = vperm.xlu0 %4044, %v470
      %v4046 = vpop.permute.xlu0 %4045
      %4048 = vset.pattern.permute.xlu0 26
      %4049 = vperm.xlu0 %4048, %v471
      %v4050 = vpop.permute.xlu0 %4049
      %4052 = vset.pattern.permute.xlu0 26
      %4053 = vperm.xlu0 %4052, %v472
      %v4054 = vpop.permute.xlu0 %4053
      %4056 = vset.pattern.permute.xlu0 26
      %4057 = vperm.xlu0 %4056, %v473
      %v4058 = vpop.permute.xlu0 %4057
      %v4060 = vmul.f32 %v502, %v4046
      %v4061 = vmul.f32 %v503, %v4046
      %v4062 = vmul.f32 %v504, %v4046
      %v4063 = vmul.f32 %v505, %v4050
      %v4064 = vmul.f32 %v506, %v4050
      %v4065 = vmul.f32 %v507, %v4050
      %v4066 = vmul.f32 %v508, %v4054
      %v4067 = vmul.f32 %v509, %v4054
      %v4068 = vmul.f32 %v510, %v4054
      %v4069 = vmul.f32 %v511, %v4058
      %v4070 = vmul.f32 %v512, %v4058
      %v4071 = vmul.f32 %v513, %v4058
      %4084 = vrot.lane.b32.xlu0 %v4060, 80
      %v4085 = vpop.permute.xlu0 %4084
      %4086 = vrot.lane.b32.xlu0 %v4061, 80
      %v4087 = vpop.permute.xlu0 %4086
      %4088 = vrot.lane.b32.xlu0 %v4062, 80
      %v4089 = vpop.permute.xlu0 %4088
      %4090 = vrot.lane.b32.xlu0 %v4063, 80
      %v4091 = vpop.permute.xlu0 %4090
      %4092 = vrot.lane.b32.xlu0 %v4064, 80
      %v4093 = vpop.permute.xlu0 %4092
      %4094 = vrot.lane.b32.xlu0 %v4065, 80
      %v4095 = vpop.permute.xlu0 %4094
      %4096 = vrot.lane.b32.xlu0 %v4066, 80
      %v4097 = vpop.permute.xlu0 %4096
      %4098 = vrot.lane.b32.xlu0 %v4067, 80
      %v4099 = vpop.permute.xlu0 %4098
      %4100 = vrot.lane.b32.xlu0 %v4068, 80
      %v4101 = vpop.permute.xlu0 %4100
      %4102 = vrot.lane.b32.xlu0 %v4069, 80
      %v4103 = vpop.permute.xlu0 %4102
      %4104 = vrot.lane.b32.xlu0 %v4070, 80
      %v4105 = vpop.permute.xlu0 %4104
      %4106 = vrot.lane.b32.xlu0 %v4071, 80
      %v4107 = vpop.permute.xlu0 %4106
      %v4108 = vsel %vm756, %v4085, %v4087
      %v4109 = vsel %vm756, %v4087, %v4089
      %v4110 = vsel %vm756, %v4091, %v4093
      %v4111 = vsel %vm756, %v4093, %v4095
      %v4112 = vsel %vm756, %v4097, %v4099
      %v4113 = vsel %vm756, %v4099, %v4101
      %v4114 = vsel %vm756, %v4103, %v4105
      %v4115 = vsel %vm756, %v4105, %v4107
      %v4128 = vadd.f32 %v4032, %v4108
      %v4129 = vadd.f32 %v4033, %v4109
      %v4130 = vadd.f32 %v4034, %v4089
      %v4131 = vadd.f32 %v4035, %v4110
      %v4132 = vadd.f32 %v4036, %v4111
      %v4133 = vadd.f32 %v4037, %v4095
      %v4134 = vadd.f32 %v4038, %v4112
      %v4135 = vadd.f32 %v4039, %v4113
      %v4136 = vadd.f32 %v4040, %v4101
      %v4137 = vadd.f32 %v4041, %v4114
      %v4138 = vadd.f32 %v4042, %v4115
      %v4139 = vadd.f32 %v4043, %v4107
      %4140 = vset.pattern.permute.xlu0 33
      %4141 = vperm.xlu0 %4140, %v470
      %v4142 = vpop.permute.xlu0 %4141
      %4144 = vset.pattern.permute.xlu0 33
      %4145 = vperm.xlu0 %4144, %v471
      %v4146 = vpop.permute.xlu0 %4145
      %4148 = vset.pattern.permute.xlu0 33
      %4149 = vperm.xlu0 %4148, %v472
      %v4150 = vpop.permute.xlu0 %4149
      %4152 = vset.pattern.permute.xlu0 33
      %4153 = vperm.xlu0 %4152, %v473
      %v4154 = vpop.permute.xlu0 %4153
      %v4156 = vmul.f32 %v502, %v4142
      %v4157 = vmul.f32 %v503, %v4142
      %v4158 = vmul.f32 %v504, %v4142
      %v4159 = vmul.f32 %v505, %v4146
      %v4160 = vmul.f32 %v506, %v4146
      %v4161 = vmul.f32 %v507, %v4146
      %v4162 = vmul.f32 %v508, %v4150
      %v4163 = vmul.f32 %v509, %v4150
      %v4164 = vmul.f32 %v510, %v4150
      %v4165 = vmul.f32 %v511, %v4154
      %v4166 = vmul.f32 %v512, %v4154
      %v4167 = vmul.f32 %v513, %v4154
      %4180 = vrot.lane.b32.xlu0 %v4156, 64
      %v4181 = vpop.permute.xlu0 %4180
      %4182 = vrot.lane.b32.xlu0 %v4157, 64
      %v4183 = vpop.permute.xlu0 %4182
      %4184 = vrot.lane.b32.xlu0 %v4158, 64
      %v4185 = vpop.permute.xlu0 %4184
      %4186 = vrot.lane.b32.xlu0 %v4159, 64
      %v4187 = vpop.permute.xlu0 %4186
      %4188 = vrot.lane.b32.xlu0 %v4160, 64
      %v4189 = vpop.permute.xlu0 %4188
      %4190 = vrot.lane.b32.xlu0 %v4161, 64
      %v4191 = vpop.permute.xlu0 %4190
      %4192 = vrot.lane.b32.xlu0 %v4162, 64
      %v4193 = vpop.permute.xlu0 %4192
      %4194 = vrot.lane.b32.xlu0 %v4163, 64
      %v4195 = vpop.permute.xlu0 %4194
      %4196 = vrot.lane.b32.xlu0 %v4164, 64
      %v4197 = vpop.permute.xlu0 %4196
      %4198 = vrot.lane.b32.xlu0 %v4165, 64
      %v4199 = vpop.permute.xlu0 %4198
      %4200 = vrot.lane.b32.xlu0 %v4166, 64
      %v4201 = vpop.permute.xlu0 %4200
      %4202 = vrot.lane.b32.xlu0 %v4167, 64
      %v4203 = vpop.permute.xlu0 %4202
      %v4204 = vsel %vm845, %v4181, %v4183
      %v4205 = vsel %vm845, %v4183, %v4185
      %v4206 = vsel %vm845, %v4187, %v4189
      %v4207 = vsel %vm845, %v4189, %v4191
      %v4208 = vsel %vm845, %v4193, %v4195
      %v4209 = vsel %vm845, %v4195, %v4197
      %v4210 = vsel %vm845, %v4199, %v4201
      %v4211 = vsel %vm845, %v4201, %v4203
      %v4224 = vadd.f32 %v4128, %v4204
      %v4225 = vadd.f32 %v4129, %v4205
      %v4226 = vadd.f32 %v4130, %v4185
      %v4227 = vadd.f32 %v4131, %v4206
      %v4228 = vadd.f32 %v4132, %v4207
      %v4229 = vadd.f32 %v4133, %v4191
      %v4230 = vadd.f32 %v4134, %v4208
      %v4231 = vadd.f32 %v4135, %v4209
      %v4232 = vadd.f32 %v4136, %v4197
      %v4233 = vadd.f32 %v4137, %v4210
      %v4234 = vadd.f32 %v4138, %v4211
      %v4235 = vadd.f32 %v4139, %v4203
      %4236 = vset.pattern.permute.xlu0 40
      %4237 = vperm.xlu0 %4236, %v470
      %v4238 = vpop.permute.xlu0 %4237
      %4240 = vset.pattern.permute.xlu0 40
      %4241 = vperm.xlu0 %4240, %v471
      %v4242 = vpop.permute.xlu0 %4241
      %4244 = vset.pattern.permute.xlu0 40
      %4245 = vperm.xlu0 %4244, %v472
      %v4246 = vpop.permute.xlu0 %4245
      %4248 = vset.pattern.permute.xlu0 40
      %4249 = vperm.xlu0 %4248, %v473
      %v4250 = vpop.permute.xlu0 %4249
      %v4252 = vmul.f32 %v502, %v4238
      %v4253 = vmul.f32 %v503, %v4238
      %v4254 = vmul.f32 %v504, %v4238
      %v4255 = vmul.f32 %v505, %v4242
      %v4256 = vmul.f32 %v506, %v4242
      %v4257 = vmul.f32 %v507, %v4242
      %v4258 = vmul.f32 %v508, %v4246
      %v4259 = vmul.f32 %v509, %v4246
      %v4260 = vmul.f32 %v510, %v4246
      %v4261 = vmul.f32 %v511, %v4250
      %v4262 = vmul.f32 %v512, %v4250
      %v4263 = vmul.f32 %v513, %v4250
      %4276 = vrot.lane.b32.xlu0 %v4252, 48
      %v4277 = vpop.permute.xlu0 %4276
      %4278 = vrot.lane.b32.xlu0 %v4253, 48
      %v4279 = vpop.permute.xlu0 %4278
      %4280 = vrot.lane.b32.xlu0 %v4254, 48
      %v4281 = vpop.permute.xlu0 %4280
      %4282 = vrot.lane.b32.xlu0 %v4255, 48
      %v4283 = vpop.permute.xlu0 %4282
      %4284 = vrot.lane.b32.xlu0 %v4256, 48
      %v4285 = vpop.permute.xlu0 %4284
      %4286 = vrot.lane.b32.xlu0 %v4257, 48
      %v4287 = vpop.permute.xlu0 %4286
      %4288 = vrot.lane.b32.xlu0 %v4258, 48
      %v4289 = vpop.permute.xlu0 %4288
      %4290 = vrot.lane.b32.xlu0 %v4259, 48
      %v4291 = vpop.permute.xlu0 %4290
      %4292 = vrot.lane.b32.xlu0 %v4260, 48
      %v4293 = vpop.permute.xlu0 %4292
      %4294 = vrot.lane.b32.xlu0 %v4261, 48
      %v4295 = vpop.permute.xlu0 %4294
      %4296 = vrot.lane.b32.xlu0 %v4262, 48
      %v4297 = vpop.permute.xlu0 %4296
      %4298 = vrot.lane.b32.xlu0 %v4263, 48
      %v4299 = vpop.permute.xlu0 %4298
      %v4300 = vsel %vm934, %v4277, %v4279
      %v4301 = vsel %vm934, %v4279, %v4281
      %v4302 = vsel %vm934, %v4283, %v4285
      %v4303 = vsel %vm934, %v4285, %v4287
      %v4304 = vsel %vm934, %v4289, %v4291
      %v4305 = vsel %vm934, %v4291, %v4293
      %v4306 = vsel %vm934, %v4295, %v4297
      %v4307 = vsel %vm934, %v4297, %v4299
      %v4320 = vadd.f32 %v4224, %v4300
      %v4321 = vadd.f32 %v4225, %v4301
      %v4322 = vadd.f32 %v4226, %v4281
      %v4323 = vadd.f32 %v4227, %v4302
      %v4324 = vadd.f32 %v4228, %v4303
      %v4325 = vadd.f32 %v4229, %v4287
      %v4326 = vadd.f32 %v4230, %v4304
      %v4327 = vadd.f32 %v4231, %v4305
      %v4328 = vadd.f32 %v4232, %v4293
      %v4329 = vadd.f32 %v4233, %v4306
      %v4330 = vadd.f32 %v4234, %v4307
      %v4331 = vadd.f32 %v4235, %v4299
      %4332 = vset.pattern.permute.xlu0 47
      %4333 = vperm.xlu0 %4332, %v470
      %v4334 = vpop.permute.xlu0 %4333
      %4336 = vset.pattern.permute.xlu0 47
      %4337 = vperm.xlu0 %4336, %v471
      %v4338 = vpop.permute.xlu0 %4337
      %4340 = vset.pattern.permute.xlu0 47
      %4341 = vperm.xlu0 %4340, %v472
      %v4342 = vpop.permute.xlu0 %4341
      %4344 = vset.pattern.permute.xlu0 47
      %4345 = vperm.xlu0 %4344, %v473
      %v4346 = vpop.permute.xlu0 %4345
      %v4348 = vmul.f32 %v502, %v4334
      %v4349 = vmul.f32 %v503, %v4334
      %v4350 = vmul.f32 %v504, %v4334
      %v4351 = vmul.f32 %v505, %v4338
      %v4352 = vmul.f32 %v506, %v4338
      %v4353 = vmul.f32 %v507, %v4338
      %v4354 = vmul.f32 %v508, %v4342
      %v4355 = vmul.f32 %v509, %v4342
      %v4356 = vmul.f32 %v510, %v4342
      %v4357 = vmul.f32 %v511, %v4346
      %v4358 = vmul.f32 %v512, %v4346
      %v4359 = vmul.f32 %v513, %v4346
      %4372 = vrot.lane.b32.xlu0 %v4348, 32
      %v4373 = vpop.permute.xlu0 %4372
      %4374 = vrot.lane.b32.xlu0 %v4349, 32
      %v4375 = vpop.permute.xlu0 %4374
      %4376 = vrot.lane.b32.xlu0 %v4350, 32
      %v4377 = vpop.permute.xlu0 %4376
      %4378 = vrot.lane.b32.xlu0 %v4351, 32
      %v4379 = vpop.permute.xlu0 %4378
      %4380 = vrot.lane.b32.xlu0 %v4352, 32
      %v4381 = vpop.permute.xlu0 %4380
      %4382 = vrot.lane.b32.xlu0 %v4353, 32
      %v4383 = vpop.permute.xlu0 %4382
      %4384 = vrot.lane.b32.xlu0 %v4354, 32
      %v4385 = vpop.permute.xlu0 %4384
      %4386 = vrot.lane.b32.xlu0 %v4355, 32
      %v4387 = vpop.permute.xlu0 %4386
      %4388 = vrot.lane.b32.xlu0 %v4356, 32
      %v4389 = vpop.permute.xlu0 %4388
      %4390 = vrot.lane.b32.xlu0 %v4357, 32
      %v4391 = vpop.permute.xlu0 %4390
      %4392 = vrot.lane.b32.xlu0 %v4358, 32
      %v4393 = vpop.permute.xlu0 %4392
      %4394 = vrot.lane.b32.xlu0 %v4359, 32
      %v4395 = vpop.permute.xlu0 %4394
      %v4396 = vsel %vm1023, %v4373, %v4375
      %v4397 = vsel %vm1023, %v4375, %v4377
      %v4398 = vsel %vm1023, %v4379, %v4381
      %v4399 = vsel %vm1023, %v4381, %v4383
      %v4400 = vsel %vm1023, %v4385, %v4387
      %v4401 = vsel %vm1023, %v4387, %v4389
      %v4402 = vsel %vm1023, %v4391, %v4393
      %v4403 = vsel %vm1023, %v4393, %v4395
      %v4416 = vadd.f32 %v4320, %v4396
      %v4417 = vadd.f32 %v4321, %v4397
      %v4418 = vadd.f32 %v4322, %v4377
      %v4419 = vadd.f32 %v4323, %v4398
      %v4420 = vadd.f32 %v4324, %v4399
      %v4421 = vadd.f32 %v4325, %v4383
      %v4422 = vadd.f32 %v4326, %v4400
      %v4423 = vadd.f32 %v4327, %v4401
      %v4424 = vadd.f32 %v4328, %v4389
      %v4425 = vadd.f32 %v4329, %v4402
      %v4426 = vadd.f32 %v4330, %v4403
      %v4427 = vadd.f32 %v4331, %v4395
      %s4428 = scalar_lea.vmem %s1, 5
      %v4429 = vld [vmem:[%s4428] ss:$8 sm:$0x3]
      %v4431 = vlaneseq
      %v4432 = vshrl.u32 %v4431, 7
      %v4433 = vsub.s32 0, %v4432
      %v4434 = vrot.slane %v4429, %v4433
      %v4435 = vlaneseq
      %v4436 = vshrl.u32 %v4435, 7
      %v4437 = vsub.s32 1, %v4436
      %v4438 = vrot.slane %v4429, %v4437
      %4439 = vrot.lane.b32.xlu0 %v4434, 5
      %v4440 = vpop.permute.xlu0 %4439
      %4441 = vrot.lane.b32.xlu0 %v4438, 5
      %v4442 = vpop.permute.xlu0 %4441
      %vm4443 = vcmask 39936
      %v4444 = vsel %vm4443, %v4440, %v4442
      %v4448 = vmul.f32 %v4416, %v4440
      %v4449 = vmul.f32 %v4417, %v4444
      %v4450 = vmul.f32 %v4418, %v4442
      %v4451 = vmul.f32 %v4419, %v4440
      %v4452 = vmul.f32 %v4420, %v4444
      %v4453 = vmul.f32 %v4421, %v4442
      %v4454 = vmul.f32 %v4422, %v4440
      %v4455 = vmul.f32 %v4423, %v4444
      %v4456 = vmul.f32 %v4424, %v4442
      %v4457 = vmul.f32 %v4425, %v4440
      %v4458 = vmul.f32 %v4426, %v4444
      %v4459 = vmul.f32 %v4427, %v4442
      %4472 = vrot.lane.b32.xlu0 %v4448, 123
      %v4473 = vpop.permute.xlu0 %4472
      %4474 = vrot.lane.b32.xlu0 %v4449, 123
      %v4475 = vpop.permute.xlu0 %4474
      %4476 = vrot.lane.b32.xlu0 %v4450, 123
      %v4477 = vpop.permute.xlu0 %4476
      %4478 = vrot.lane.b32.xlu0 %v4451, 123
      %v4479 = vpop.permute.xlu0 %4478
      %4480 = vrot.lane.b32.xlu0 %v4452, 123
      %v4481 = vpop.permute.xlu0 %4480
      %4482 = vrot.lane.b32.xlu0 %v4453, 123
      %v4483 = vpop.permute.xlu0 %4482
      %4484 = vrot.lane.b32.xlu0 %v4454, 123
      %v4485 = vpop.permute.xlu0 %4484
      %4486 = vrot.lane.b32.xlu0 %v4455, 123
      %v4487 = vpop.permute.xlu0 %4486
      %4488 = vrot.lane.b32.xlu0 %v4456, 123
      %v4489 = vpop.permute.xlu0 %4488
      %4490 = vrot.lane.b32.xlu0 %v4457, 123
      %v4491 = vpop.permute.xlu0 %4490
      %4492 = vrot.lane.b32.xlu0 %v4458, 123
      %v4493 = vpop.permute.xlu0 %4492
      %4494 = vrot.lane.b32.xlu0 %v4459, 123
      %v4495 = vpop.permute.xlu0 %4494
      %vm4496 = vcmask 1006592
      %v4497 = vsel %vm4496, %v4473, %v4475
      %v4498 = vsel %vm4496, %v4475, %v4477
      %v4499 = vsel %vm4496, %v4479, %v4481
      %v4500 = vsel %vm4496, %v4481, %v4483
      %v4501 = vsel %vm4496, %v4485, %v4487
      %v4502 = vsel %vm4496, %v4487, %v4489
      %v4503 = vsel %vm4496, %v4491, %v4493
      %v4504 = vsel %vm4496, %v4493, %v4495
      %v4513 = vadd.f32 %v3816, %v4497
      %v4514 = vadd.f32 %v3817, %v4498
      %v4515 = vadd.f32 %v3818, %v4499
      %v4516 = vadd.f32 %v3819, %v4500
      %v4517 = vadd.f32 %v3820, %v4501
      %v4518 = vadd.f32 %v3821, %v4502
      %v4519 = vadd.f32 %v3822, %v4503
      %v4520 = vadd.f32 %v3823, %v4504
      %4521 = vset.pattern.permute.xlu0 6
      %4522 = vperm.xlu0 %4521, %v470
      %v4523 = vpop.permute.xlu0 %4522
      %4525 = vset.pattern.permute.xlu0 6
      %4526 = vperm.xlu0 %4525, %v471
      %v4527 = vpop.permute.xlu0 %4526
      %4529 = vset.pattern.permute.xlu0 6
      %4530 = vperm.xlu0 %4529, %v472
      %v4531 = vpop.permute.xlu0 %4530
      %4533 = vset.pattern.permute.xlu0 6
      %4534 = vperm.xlu0 %4533, %v473
      %v4535 = vpop.permute.xlu0 %4534
      %v4537 = vmul.f32 %v502, %v4523
      %v4538 = vmul.f32 %v503, %v4523
      %v4539 = vmul.f32 %v504, %v4523
      %v4540 = vmul.f32 %v505, %v4527
      %v4541 = vmul.f32 %v506, %v4527
      %v4542 = vmul.f32 %v507, %v4527
      %v4543 = vmul.f32 %v508, %v4531
      %v4544 = vmul.f32 %v509, %v4531
      %v4545 = vmul.f32 %v510, %v4531
      %v4546 = vmul.f32 %v511, %v4535
      %v4547 = vmul.f32 %v512, %v4535
      %v4548 = vmul.f32 %v513, %v4535
      %4549 = vset.pattern.permute.xlu0 13
      %4550 = vperm.xlu0 %4549, %v470
      %v4551 = vpop.permute.xlu0 %4550
      %4553 = vset.pattern.permute.xlu0 13
      %4554 = vperm.xlu0 %4553, %v471
      %v4555 = vpop.permute.xlu0 %4554
      %4557 = vset.pattern.permute.xlu0 13
      %4558 = vperm.xlu0 %4557, %v472
      %v4559 = vpop.permute.xlu0 %4558
      %4561 = vset.pattern.permute.xlu0 13
      %4562 = vperm.xlu0 %4561, %v473
      %v4563 = vpop.permute.xlu0 %4562
      %v4565 = vmul.f32 %v502, %v4551
      %v4566 = vmul.f32 %v503, %v4551
      %v4567 = vmul.f32 %v504, %v4551
      %v4568 = vmul.f32 %v505, %v4555
      %v4569 = vmul.f32 %v506, %v4555
      %v4570 = vmul.f32 %v507, %v4555
      %v4571 = vmul.f32 %v508, %v4559
      %v4572 = vmul.f32 %v509, %v4559
      %v4573 = vmul.f32 %v510, %v4559
      %v4574 = vmul.f32 %v511, %v4563
      %v4575 = vmul.f32 %v512, %v4563
      %v4576 = vmul.f32 %v513, %v4563
      %4589 = vrot.lane.b32.xlu0 %v4565, 112
      %v4590 = vpop.permute.xlu0 %4589
      %4591 = vrot.lane.b32.xlu0 %v4566, 112
      %v4592 = vpop.permute.xlu0 %4591
      %4593 = vrot.lane.b32.xlu0 %v4567, 112
      %v4594 = vpop.permute.xlu0 %4593
      %4595 = vrot.lane.b32.xlu0 %v4568, 112
      %v4596 = vpop.permute.xlu0 %4595
      %4597 = vrot.lane.b32.xlu0 %v4569, 112
      %v4598 = vpop.permute.xlu0 %4597
      %4599 = vrot.lane.b32.xlu0 %v4570, 112
      %v4600 = vpop.permute.xlu0 %4599
      %4601 = vrot.lane.b32.xlu0 %v4571, 112
      %v4602 = vpop.permute.xlu0 %4601
      %4603 = vrot.lane.b32.xlu0 %v4572, 112
      %v4604 = vpop.permute.xlu0 %4603
      %4605 = vrot.lane.b32.xlu0 %v4573, 112
      %v4606 = vpop.permute.xlu0 %4605
      %4607 = vrot.lane.b32.xlu0 %v4574, 112
      %v4608 = vpop.permute.xlu0 %4607
      %4609 = vrot.lane.b32.xlu0 %v4575, 112
      %v4610 = vpop.permute.xlu0 %4609
      %4611 = vrot.lane.b32.xlu0 %v4576, 112
      %v4612 = vpop.permute.xlu0 %4611
      %v4613 = vsel %vm578, %v4590, %v4592
      %v4614 = vsel %vm578, %v4592, %v4594
      %v4615 = vsel %vm578, %v4596, %v4598
      %v4616 = vsel %vm578, %v4598, %v4600
      %v4617 = vsel %vm578, %v4602, %v4604
      %v4618 = vsel %vm578, %v4604, %v4606
      %v4619 = vsel %vm578, %v4608, %v4610
      %v4620 = vsel %vm578, %v4610, %v4612
      %v4633 = vadd.f32 %v4537, %v4613
      %v4634 = vadd.f32 %v4538, %v4614
      %v4635 = vadd.f32 %v4539, %v4594
      %v4636 = vadd.f32 %v4540, %v4615
      %v4637 = vadd.f32 %v4541, %v4616
      %v4638 = vadd.f32 %v4542, %v4600
      %v4639 = vadd.f32 %v4543, %v4617
      %v4640 = vadd.f32 %v4544, %v4618
      %v4641 = vadd.f32 %v4545, %v4606
      %v4642 = vadd.f32 %v4546, %v4619
      %v4643 = vadd.f32 %v4547, %v4620
      %v4644 = vadd.f32 %v4548, %v4612
      %4645 = vset.pattern.permute.xlu0 20
      %4646 = vperm.xlu0 %4645, %v470
      %v4647 = vpop.permute.xlu0 %4646
      %4649 = vset.pattern.permute.xlu0 20
      %4650 = vperm.xlu0 %4649, %v471
      %v4651 = vpop.permute.xlu0 %4650
      %4653 = vset.pattern.permute.xlu0 20
      %4654 = vperm.xlu0 %4653, %v472
      %v4655 = vpop.permute.xlu0 %4654
      %4657 = vset.pattern.permute.xlu0 20
      %4658 = vperm.xlu0 %4657, %v473
      %v4659 = vpop.permute.xlu0 %4658
      %v4661 = vmul.f32 %v502, %v4647
      %v4662 = vmul.f32 %v503, %v4647
      %v4663 = vmul.f32 %v504, %v4647
      %v4664 = vmul.f32 %v505, %v4651
      %v4665 = vmul.f32 %v506, %v4651
      %v4666 = vmul.f32 %v507, %v4651
      %v4667 = vmul.f32 %v508, %v4655
      %v4668 = vmul.f32 %v509, %v4655
      %v4669 = vmul.f32 %v510, %v4655
      %v4670 = vmul.f32 %v511, %v4659
      %v4671 = vmul.f32 %v512, %v4659
      %v4672 = vmul.f32 %v513, %v4659
      %4685 = vrot.lane.b32.xlu0 %v4661, 96
      %v4686 = vpop.permute.xlu0 %4685
      %4687 = vrot.lane.b32.xlu0 %v4662, 96
      %v4688 = vpop.permute.xlu0 %4687
      %4689 = vrot.lane.b32.xlu0 %v4663, 96
      %v4690 = vpop.permute.xlu0 %4689
      %4691 = vrot.lane.b32.xlu0 %v4664, 96
      %v4692 = vpop.permute.xlu0 %4691
      %4693 = vrot.lane.b32.xlu0 %v4665, 96
      %v4694 = vpop.permute.xlu0 %4693
      %4695 = vrot.lane.b32.xlu0 %v4666, 96
      %v4696 = vpop.permute.xlu0 %4695
      %4697 = vrot.lane.b32.xlu0 %v4667, 96
      %v4698 = vpop.permute.xlu0 %4697
      %4699 = vrot.lane.b32.xlu0 %v4668, 96
      %v4700 = vpop.permute.xlu0 %4699
      %4701 = vrot.lane.b32.xlu0 %v4669, 96
      %v4702 = vpop.permute.xlu0 %4701
      %4703 = vrot.lane.b32.xlu0 %v4670, 96
      %v4704 = vpop.permute.xlu0 %4703
      %4705 = vrot.lane.b32.xlu0 %v4671, 96
      %v4706 = vpop.permute.xlu0 %4705
      %4707 = vrot.lane.b32.xlu0 %v4672, 96
      %v4708 = vpop.permute.xlu0 %4707
      %v4709 = vsel %vm667, %v4686, %v4688
      %v4710 = vsel %vm667, %v4688, %v4690
      %v4711 = vsel %vm667, %v4692, %v4694
      %v4712 = vsel %vm667, %v4694, %v4696
      %v4713 = vsel %vm667, %v4698, %v4700
      %v4714 = vsel %vm667, %v4700, %v4702
      %v4715 = vsel %vm667, %v4704, %v4706
      %v4716 = vsel %vm667, %v4706, %v4708
      %v4729 = vadd.f32 %v4633, %v4709
      %v4730 = vadd.f32 %v4634, %v4710
      %v4731 = vadd.f32 %v4635, %v4690
      %v4732 = vadd.f32 %v4636, %v4711
      %v4733 = vadd.f32 %v4637, %v4712
      %v4734 = vadd.f32 %v4638, %v4696
      %v4735 = vadd.f32 %v4639, %v4713
      %v4736 = vadd.f32 %v4640, %v4714
      %v4737 = vadd.f32 %v4641, %v4702
      %v4738 = vadd.f32 %v4642, %v4715
      %v4739 = vadd.f32 %v4643, %v4716
      %v4740 = vadd.f32 %v4644, %v4708
      %4741 = vset.pattern.permute.xlu0 27
      %4742 = vperm.xlu0 %4741, %v470
      %v4743 = vpop.permute.xlu0 %4742
      %4745 = vset.pattern.permute.xlu0 27
      %4746 = vperm.xlu0 %4745, %v471
      %v4747 = vpop.permute.xlu0 %4746
      %4749 = vset.pattern.permute.xlu0 27
      %4750 = vperm.xlu0 %4749, %v472
      %v4751 = vpop.permute.xlu0 %4750
      %4753 = vset.pattern.permute.xlu0 27
      %4754 = vperm.xlu0 %4753, %v473
      %v4755 = vpop.permute.xlu0 %4754
      %v4757 = vmul.f32 %v502, %v4743
      %v4758 = vmul.f32 %v503, %v4743
      %v4759 = vmul.f32 %v504, %v4743
      %v4760 = vmul.f32 %v505, %v4747
      %v4761 = vmul.f32 %v506, %v4747
      %v4762 = vmul.f32 %v507, %v4747
      %v4763 = vmul.f32 %v508, %v4751
      %v4764 = vmul.f32 %v509, %v4751
      %v4765 = vmul.f32 %v510, %v4751
      %v4766 = vmul.f32 %v511, %v4755
      %v4767 = vmul.f32 %v512, %v4755
      %v4768 = vmul.f32 %v513, %v4755
      %4781 = vrot.lane.b32.xlu0 %v4757, 80
      %v4782 = vpop.permute.xlu0 %4781
      %4783 = vrot.lane.b32.xlu0 %v4758, 80
      %v4784 = vpop.permute.xlu0 %4783
      %4785 = vrot.lane.b32.xlu0 %v4759, 80
      %v4786 = vpop.permute.xlu0 %4785
      %4787 = vrot.lane.b32.xlu0 %v4760, 80
      %v4788 = vpop.permute.xlu0 %4787
      %4789 = vrot.lane.b32.xlu0 %v4761, 80
      %v4790 = vpop.permute.xlu0 %4789
      %4791 = vrot.lane.b32.xlu0 %v4762, 80
      %v4792 = vpop.permute.xlu0 %4791
      %4793 = vrot.lane.b32.xlu0 %v4763, 80
      %v4794 = vpop.permute.xlu0 %4793
      %4795 = vrot.lane.b32.xlu0 %v4764, 80
      %v4796 = vpop.permute.xlu0 %4795
      %4797 = vrot.lane.b32.xlu0 %v4765, 80
      %v4798 = vpop.permute.xlu0 %4797
      %4799 = vrot.lane.b32.xlu0 %v4766, 80
      %v4800 = vpop.permute.xlu0 %4799
      %4801 = vrot.lane.b32.xlu0 %v4767, 80
      %v4802 = vpop.permute.xlu0 %4801
      %4803 = vrot.lane.b32.xlu0 %v4768, 80
      %v4804 = vpop.permute.xlu0 %4803
      %v4805 = vsel %vm756, %v4782, %v4784
      %v4806 = vsel %vm756, %v4784, %v4786
      %v4807 = vsel %vm756, %v4788, %v4790
      %v4808 = vsel %vm756, %v4790, %v4792
      %v4809 = vsel %vm756, %v4794, %v4796
      %v4810 = vsel %vm756, %v4796, %v4798
      %v4811 = vsel %vm756, %v4800, %v4802
      %v4812 = vsel %vm756, %v4802, %v4804
      %v4825 = vadd.f32 %v4729, %v4805
      %v4826 = vadd.f32 %v4730, %v4806
      %v4827 = vadd.f32 %v4731, %v4786
      %v4828 = vadd.f32 %v4732, %v4807
      %v4829 = vadd.f32 %v4733, %v4808
      %v4830 = vadd.f32 %v4734, %v4792
      %v4831 = vadd.f32 %v4735, %v4809
      %v4832 = vadd.f32 %v4736, %v4810
      %v4833 = vadd.f32 %v4737, %v4798
      %v4834 = vadd.f32 %v4738, %v4811
      %v4835 = vadd.f32 %v4739, %v4812
      %v4836 = vadd.f32 %v4740, %v4804
      %4837 = vset.pattern.permute.xlu0 34
      %4838 = vperm.xlu0 %4837, %v470
      %v4839 = vpop.permute.xlu0 %4838
      %4841 = vset.pattern.permute.xlu0 34
      %4842 = vperm.xlu0 %4841, %v471
      %v4843 = vpop.permute.xlu0 %4842
      %4845 = vset.pattern.permute.xlu0 34
      %4846 = vperm.xlu0 %4845, %v472
      %v4847 = vpop.permute.xlu0 %4846
      %4849 = vset.pattern.permute.xlu0 34
      %4850 = vperm.xlu0 %4849, %v473
      %v4851 = vpop.permute.xlu0 %4850
      %v4853 = vmul.f32 %v502, %v4839
      %v4854 = vmul.f32 %v503, %v4839
      %v4855 = vmul.f32 %v504, %v4839
      %v4856 = vmul.f32 %v505, %v4843
      %v4857 = vmul.f32 %v506, %v4843
      %v4858 = vmul.f32 %v507, %v4843
      %v4859 = vmul.f32 %v508, %v4847
      %v4860 = vmul.f32 %v509, %v4847
      %v4861 = vmul.f32 %v510, %v4847
      %v4862 = vmul.f32 %v511, %v4851
      %v4863 = vmul.f32 %v512, %v4851
      %v4864 = vmul.f32 %v513, %v4851
      %4877 = vrot.lane.b32.xlu0 %v4853, 64
      %v4878 = vpop.permute.xlu0 %4877
      %4879 = vrot.lane.b32.xlu0 %v4854, 64
      %v4880 = vpop.permute.xlu0 %4879
      %4881 = vrot.lane.b32.xlu0 %v4855, 64
      %v4882 = vpop.permute.xlu0 %4881
      %4883 = vrot.lane.b32.xlu0 %v4856, 64
      %v4884 = vpop.permute.xlu0 %4883
      %4885 = vrot.lane.b32.xlu0 %v4857, 64
      %v4886 = vpop.permute.xlu0 %4885
      %4887 = vrot.lane.b32.xlu0 %v4858, 64
      %v4888 = vpop.permute.xlu0 %4887
      %4889 = vrot.lane.b32.xlu0 %v4859, 64
      %v4890 = vpop.permute.xlu0 %4889
      %4891 = vrot.lane.b32.xlu0 %v4860, 64
      %v4892 = vpop.permute.xlu0 %4891
      %4893 = vrot.lane.b32.xlu0 %v4861, 64
      %v4894 = vpop.permute.xlu0 %4893
      %4895 = vrot.lane.b32.xlu0 %v4862, 64
      %v4896 = vpop.permute.xlu0 %4895
      %4897 = vrot.lane.b32.xlu0 %v4863, 64
      %v4898 = vpop.permute.xlu0 %4897
      %4899 = vrot.lane.b32.xlu0 %v4864, 64
      %v4900 = vpop.permute.xlu0 %4899
      %v4901 = vsel %vm845, %v4878, %v4880
      %v4902 = vsel %vm845, %v4880, %v4882
      %v4903 = vsel %vm845, %v4884, %v4886
      %v4904 = vsel %vm845, %v4886, %v4888
      %v4905 = vsel %vm845, %v4890, %v4892
      %v4906 = vsel %vm845, %v4892, %v4894
      %v4907 = vsel %vm845, %v4896, %v4898
      %v4908 = vsel %vm845, %v4898, %v4900
      %v4921 = vadd.f32 %v4825, %v4901
      %v4922 = vadd.f32 %v4826, %v4902
      %v4923 = vadd.f32 %v4827, %v4882
      %v4924 = vadd.f32 %v4828, %v4903
      %v4925 = vadd.f32 %v4829, %v4904
      %v4926 = vadd.f32 %v4830, %v4888
      %v4927 = vadd.f32 %v4831, %v4905
      %v4928 = vadd.f32 %v4832, %v4906
      %v4929 = vadd.f32 %v4833, %v4894
      %v4930 = vadd.f32 %v4834, %v4907
      %v4931 = vadd.f32 %v4835, %v4908
      %v4932 = vadd.f32 %v4836, %v4900
      %4933 = vset.pattern.permute.xlu0 41
      %4934 = vperm.xlu0 %4933, %v470
      %v4935 = vpop.permute.xlu0 %4934
      %4937 = vset.pattern.permute.xlu0 41
      %4938 = vperm.xlu0 %4937, %v471
      %v4939 = vpop.permute.xlu0 %4938
      %4941 = vset.pattern.permute.xlu0 41
      %4942 = vperm.xlu0 %4941, %v472
      %v4943 = vpop.permute.xlu0 %4942
      %4945 = vset.pattern.permute.xlu0 41
      %4946 = vperm.xlu0 %4945, %v473
      %v4947 = vpop.permute.xlu0 %4946
      %v4949 = vmul.f32 %v502, %v4935
      %v4950 = vmul.f32 %v503, %v4935
      %v4951 = vmul.f32 %v504, %v4935
      %v4952 = vmul.f32 %v505, %v4939
      %v4953 = vmul.f32 %v506, %v4939
      %v4954 = vmul.f32 %v507, %v4939
      %v4955 = vmul.f32 %v508, %v4943
      %v4956 = vmul.f32 %v509, %v4943
      %v4957 = vmul.f32 %v510, %v4943
      %v4958 = vmul.f32 %v511, %v4947
      %v4959 = vmul.f32 %v512, %v4947
      %v4960 = vmul.f32 %v513, %v4947
      %4973 = vrot.lane.b32.xlu0 %v4949, 48
      %v4974 = vpop.permute.xlu0 %4973
      %4975 = vrot.lane.b32.xlu0 %v4950, 48
      %v4976 = vpop.permute.xlu0 %4975
      %4977 = vrot.lane.b32.xlu0 %v4951, 48
      %v4978 = vpop.permute.xlu0 %4977
      %4979 = vrot.lane.b32.xlu0 %v4952, 48
      %v4980 = vpop.permute.xlu0 %4979
      %4981 = vrot.lane.b32.xlu0 %v4953, 48
      %v4982 = vpop.permute.xlu0 %4981
      %4983 = vrot.lane.b32.xlu0 %v4954, 48
      %v4984 = vpop.permute.xlu0 %4983
      %4985 = vrot.lane.b32.xlu0 %v4955, 48
      %v4986 = vpop.permute.xlu0 %4985
      %4987 = vrot.lane.b32.xlu0 %v4956, 48
      %v4988 = vpop.permute.xlu0 %4987
      %4989 = vrot.lane.b32.xlu0 %v4957, 48
      %v4990 = vpop.permute.xlu0 %4989
      %4991 = vrot.lane.b32.xlu0 %v4958, 48
      %v4992 = vpop.permute.xlu0 %4991
      %4993 = vrot.lane.b32.xlu0 %v4959, 48
      %v4994 = vpop.permute.xlu0 %4993
      %4995 = vrot.lane.b32.xlu0 %v4960, 48
      %v4996 = vpop.permute.xlu0 %4995
      %v4997 = vsel %vm934, %v4974, %v4976
      %v4998 = vsel %vm934, %v4976, %v4978
      %v4999 = vsel %vm934, %v4980, %v4982
      %v5000 = vsel %vm934, %v4982, %v4984
      %v5001 = vsel %vm934, %v4986, %v4988
      %v5002 = vsel %vm934, %v4988, %v4990
      %v5003 = vsel %vm934, %v4992, %v4994
      %v5004 = vsel %vm934, %v4994, %v4996
      %v5017 = vadd.f32 %v4921, %v4997
      %v5018 = vadd.f32 %v4922, %v4998
      %v5019 = vadd.f32 %v4923, %v4978
      %v5020 = vadd.f32 %v4924, %v4999
      %v5021 = vadd.f32 %v4925, %v5000
      %v5022 = vadd.f32 %v4926, %v4984
      %v5023 = vadd.f32 %v4927, %v5001
      %v5024 = vadd.f32 %v4928, %v5002
      %v5025 = vadd.f32 %v4929, %v4990
      %v5026 = vadd.f32 %v4930, %v5003
      %v5027 = vadd.f32 %v4931, %v5004
      %v5028 = vadd.f32 %v4932, %v4996
      %5029 = vset.pattern.permute.xlu0 48
      %5030 = vperm.xlu0 %5029, %v470
      %v5031 = vpop.permute.xlu0 %5030
      %5033 = vset.pattern.permute.xlu0 48
      %5034 = vperm.xlu0 %5033, %v471
      %v5035 = vpop.permute.xlu0 %5034
      %5037 = vset.pattern.permute.xlu0 48
      %5038 = vperm.xlu0 %5037, %v472
      %v5039 = vpop.permute.xlu0 %5038
      %5041 = vset.pattern.permute.xlu0 48
      %5042 = vperm.xlu0 %5041, %v473
      %v5043 = vpop.permute.xlu0 %5042
      %v5045 = vmul.f32 %v502, %v5031
      %v5046 = vmul.f32 %v503, %v5031
      %v5047 = vmul.f32 %v504, %v5031
      %v5048 = vmul.f32 %v505, %v5035
      %v5049 = vmul.f32 %v506, %v5035
      %v5050 = vmul.f32 %v507, %v5035
      %v5051 = vmul.f32 %v508, %v5039
      %v5052 = vmul.f32 %v509, %v5039
      %v5053 = vmul.f32 %v510, %v5039
      %v5054 = vmul.f32 %v511, %v5043
      %v5055 = vmul.f32 %v512, %v5043
      %v5056 = vmul.f32 %v513, %v5043
      %5069 = vrot.lane.b32.xlu0 %v5045, 32
      %v5070 = vpop.permute.xlu0 %5069
      %5071 = vrot.lane.b32.xlu0 %v5046, 32
      %v5072 = vpop.permute.xlu0 %5071
      %5073 = vrot.lane.b32.xlu0 %v5047, 32
      %v5074 = vpop.permute.xlu0 %5073
      %5075 = vrot.lane.b32.xlu0 %v5048, 32
      %v5076 = vpop.permute.xlu0 %5075
      %5077 = vrot.lane.b32.xlu0 %v5049, 32
      %v5078 = vpop.permute.xlu0 %5077
      %5079 = vrot.lane.b32.xlu0 %v5050, 32
      %v5080 = vpop.permute.xlu0 %5079
      %5081 = vrot.lane.b32.xlu0 %v5051, 32
      %v5082 = vpop.permute.xlu0 %5081
      %5083 = vrot.lane.b32.xlu0 %v5052, 32
      %v5084 = vpop.permute.xlu0 %5083
      %5085 = vrot.lane.b32.xlu0 %v5053, 32
      %v5086 = vpop.permute.xlu0 %5085
      %5087 = vrot.lane.b32.xlu0 %v5054, 32
      %v5088 = vpop.permute.xlu0 %5087
      %5089 = vrot.lane.b32.xlu0 %v5055, 32
      %v5090 = vpop.permute.xlu0 %5089
      %5091 = vrot.lane.b32.xlu0 %v5056, 32
      %v5092 = vpop.permute.xlu0 %5091
      %v5093 = vsel %vm1023, %v5070, %v5072
      %v5094 = vsel %vm1023, %v5072, %v5074
      %v5095 = vsel %vm1023, %v5076, %v5078
      %v5096 = vsel %vm1023, %v5078, %v5080
      %v5097 = vsel %vm1023, %v5082, %v5084
      %v5098 = vsel %vm1023, %v5084, %v5086
      %v5099 = vsel %vm1023, %v5088, %v5090
      %v5100 = vsel %vm1023, %v5090, %v5092
      %v5113 = vadd.f32 %v5017, %v5093
      %v5114 = vadd.f32 %v5018, %v5094
      %v5115 = vadd.f32 %v5019, %v5074
      %v5116 = vadd.f32 %v5020, %v5095
      %v5117 = vadd.f32 %v5021, %v5096
      %v5118 = vadd.f32 %v5022, %v5080
      %v5119 = vadd.f32 %v5023, %v5097
      %v5120 = vadd.f32 %v5024, %v5098
      %v5121 = vadd.f32 %v5025, %v5086
      %v5122 = vadd.f32 %v5026, %v5099
      %v5123 = vadd.f32 %v5027, %v5100
      %v5124 = vadd.f32 %v5028, %v5092
      %s5125 = scalar_lea.vmem %s1, 6
      %v5126 = vld [vmem:[%s5125] ss:$8 sm:$0x3]
      %v5128 = vlaneseq
      %v5129 = vshrl.u32 %v5128, 7
      %v5130 = vsub.s32 0, %v5129
      %v5131 = vrot.slane %v5126, %v5130
      %v5132 = vlaneseq
      %v5133 = vshrl.u32 %v5132, 7
      %v5134 = vsub.s32 1, %v5133
      %v5135 = vrot.slane %v5126, %v5134
      %5136 = vrot.lane.b32.xlu0 %v5131, 6
      %v5137 = vpop.permute.xlu0 %5136
      %5138 = vrot.lane.b32.xlu0 %v5135, 6
      %v5139 = vpop.permute.xlu0 %5138
      %vm5140 = vcmask 48128
      %v5141 = vsel %vm5140, %v5137, %v5139
      %v5145 = vmul.f32 %v5113, %v5137
      %v5146 = vmul.f32 %v5114, %v5141
      %v5147 = vmul.f32 %v5115, %v5139
      %v5148 = vmul.f32 %v5116, %v5137
      %v5149 = vmul.f32 %v5117, %v5141
      %v5150 = vmul.f32 %v5118, %v5139
      %v5151 = vmul.f32 %v5119, %v5137
      %v5152 = vmul.f32 %v5120, %v5141
      %v5153 = vmul.f32 %v5121, %v5139
      %v5154 = vmul.f32 %v5122, %v5137
      %v5155 = vmul.f32 %v5123, %v5141
      %v5156 = vmul.f32 %v5124, %v5139
      %5169 = vrot.lane.b32.xlu0 %v5145, 122
      %v5170 = vpop.permute.xlu0 %5169
      %5171 = vrot.lane.b32.xlu0 %v5146, 122
      %v5172 = vpop.permute.xlu0 %5171
      %5173 = vrot.lane.b32.xlu0 %v5147, 122
      %v5174 = vpop.permute.xlu0 %5173
      %5175 = vrot.lane.b32.xlu0 %v5148, 122
      %v5176 = vpop.permute.xlu0 %5175
      %5177 = vrot.lane.b32.xlu0 %v5149, 122
      %v5178 = vpop.permute.xlu0 %5177
      %5179 = vrot.lane.b32.xlu0 %v5150, 122
      %v5180 = vpop.permute.xlu0 %5179
      %5181 = vrot.lane.b32.xlu0 %v5151, 122
      %v5182 = vpop.permute.xlu0 %5181
      %5183 = vrot.lane.b32.xlu0 %v5152, 122
      %v5184 = vpop.permute.xlu0 %5183
      %5185 = vrot.lane.b32.xlu0 %v5153, 122
      %v5186 = vpop.permute.xlu0 %5185
      %5187 = vrot.lane.b32.xlu0 %v5154, 122
      %v5188 = vpop.permute.xlu0 %5187
      %5189 = vrot.lane.b32.xlu0 %v5155, 122
      %v5190 = vpop.permute.xlu0 %5189
      %5191 = vrot.lane.b32.xlu0 %v5156, 122
      %v5192 = vpop.permute.xlu0 %5191
      %vm5193 = vcmask 998400
      %v5194 = vsel %vm5193, %v5170, %v5172
      %v5195 = vsel %vm5193, %v5172, %v5174
      %v5196 = vsel %vm5193, %v5176, %v5178
      %v5197 = vsel %vm5193, %v5178, %v5180
      %v5198 = vsel %vm5193, %v5182, %v5184
      %v5199 = vsel %vm5193, %v5184, %v5186
      %v5200 = vsel %vm5193, %v5188, %v5190
      %v5201 = vsel %vm5193, %v5190, %v5192
      %v5210 = vadd.f32 %v4513, %v5194
      %v5211 = vadd.f32 %v4514, %v5195
      %v5212 = vadd.f32 %v4515, %v5196
      %v5213 = vadd.f32 %v4516, %v5197
      %v5214 = vadd.f32 %v4517, %v5198
      %v5215 = vadd.f32 %v4518, %v5199
      %v5216 = vadd.f32 %v4519, %v5200
      %v5217 = vadd.f32 %v4520, %v5201
      %v5218 = vld [vmem:[%s3] sm:$0xff]
      %v5219 = vld [vmem:[%s3 + $0x8] sm:$0xff]
      %v5220 = vld [vmem:[%s3 + $0x10] sm:$0xff]
      %v5221 = vld [vmem:[%s3 + $0x18] sm:$0xff]
      %5223 = vset.pattern.permute.xlu0 0
      %5224 = vperm.xlu0 %5223, %v5218
      %v5225 = vpop.permute.xlu0 %5224
      %5228 = vset.pattern.permute.xlu0 0
      %5229 = vperm.xlu0 %5228, %v5219
      %v5230 = vpop.permute.xlu0 %5229
      %5233 = vset.pattern.permute.xlu0 0
      %5234 = vperm.xlu0 %5233, %v5220
      %v5235 = vpop.permute.xlu0 %5234
      %5238 = vset.pattern.permute.xlu0 0
      %5239 = vperm.xlu0 %5238, %v5221
      %v5240 = vpop.permute.xlu0 %5239
      %v5242 = vadd.f32 %v5210, %v5225
      %v5243 = vadd.f32 %v5211, %v5225
      %v5244 = vadd.f32 %v5212, %v5230
      %v5245 = vadd.f32 %v5213, %v5230
      %v5246 = vadd.f32 %v5214, %v5235
      %v5247 = vadd.f32 %v5215, %v5235
      %v5248 = vadd.f32 %v5216, %v5240
      %v5249 = vadd.f32 %v5217, %v5240
      %v5250 = vadd.f32 %v5242, %v5244
      %v5251 = vadd.f32 %v5250, %v5246
      %v5252 = vadd.f32 %v5251, %v5248
      %v5253 = vrot.slane %v5252, 4
      %v5254 = vadd.f32 %v5252, %v5253
      %v5255 = vrot.slane %v5254, 2
      %v5256 = vadd.f32 %v5254, %v5255
      %v5257 = vrot.slane %v5256, 1
      %v5258 = vadd.f32 %v5256, %v5257
      %v5259 = vadd.f32 %v5243, %v5245
      %v5260 = vadd.f32 %v5259, %v5247
      %v5261 = vadd.f32 %v5260, %v5249
      %v5262 = vrot.slane %v5261, 4
      %v5263 = vadd.f32 %v5261, %v5262
      %v5264 = vrot.slane %v5263, 2
      %v5265 = vadd.f32 %v5263, %v5264
      %v5266 = vrot.slane %v5265, 1
      %v5267 = vadd.f32 %v5265, %v5266
      %v5268 = vrcp.pop 32.0
      %v5269 = vmul.f32 %v5258, %v5268
      %v5270 = vmul.f32 %v5267, %v5268
      %v5271 = vsub.f32 %v5242, %v5269
      %v5272 = vsub.f32 %v5243, %v5270
      %v5273 = vsub.f32 %v5244, %v5269
      %v5274 = vsub.f32 %v5245, %v5270
      %v5275 = vsub.f32 %v5246, %v5269
      %v5276 = vsub.f32 %v5247, %v5270
      %v5277 = vsub.f32 %v5248, %v5269
      %v5278 = vsub.f32 %v5249, %v5270
      %v5279 = vmul.f32 %v5271, %v5271
      %v5280 = vmul.f32 %v5272, %v5272
      %v5281 = vmul.f32 %v5273, %v5273
      %v5282 = vmul.f32 %v5274, %v5274
      %v5283 = vmul.f32 %v5275, %v5275
      %v5284 = vmul.f32 %v5276, %v5276
      %v5285 = vmul.f32 %v5277, %v5277
      %v5286 = vmul.f32 %v5278, %v5278
      %v5287 = vadd.f32 %v5279, %v5281
      %v5288 = vadd.f32 %v5287, %v5283
      %v5289 = vadd.f32 %v5288, %v5285
      %v5290 = vrot.slane %v5289, 4
      %v5291 = vadd.f32 %v5289, %v5290
      %v5292 = vrot.slane %v5291, 2
      %v5293 = vadd.f32 %v5291, %v5292
      %v5294 = vrot.slane %v5293, 1
      %v5295 = vadd.f32 %v5293, %v5294
      %v5296 = vadd.f32 %v5280, %v5282
      %v5297 = vadd.f32 %v5296, %v5284
      %v5298 = vadd.f32 %v5297, %v5286
      %v5299 = vrot.slane %v5298, 4
      %v5300 = vadd.f32 %v5298, %v5299
      %v5301 = vrot.slane %v5300, 2
      %v5302 = vadd.f32 %v5300, %v5301
      %v5303 = vrot.slane %v5302, 1
      %v5304 = vadd.f32 %v5302, %v5303
      %v5305 = vmul.f32 %v5295, %v5268
      %v5306 = vmul.f32 %v5304, %v5268
      %v5307 = vadd.f32 %v5305, 1e-06
      %v5308 = vadd.f32 %v5306, 1e-06
      %v5309 = vrsqrt.pop %v5307
      %v5310 = vrsqrt.pop %v5308
      %v5311 = vmul.f32 %v5271, %v5309
      %v5312 = vmul.f32 %v5272, %v5310
      %v5313 = vmul.f32 %v5273, %v5309
      %v5314 = vmul.f32 %v5274, %v5310
      %v5315 = vmul.f32 %v5275, %v5309
      %v5316 = vmul.f32 %v5276, %v5310
      %v5317 = vmul.f32 %v5277, %v5309
      %v5318 = vmul.f32 %v5278, %v5310
      %v5319 = vld [vmem:[%s4] sm:$0xff]
      %v5320 = vld [vmem:[%s4 + $0x8] sm:$0xff]
      %v5321 = vld [vmem:[%s4 + $0x10] sm:$0xff]
      %v5322 = vld [vmem:[%s4 + $0x18] sm:$0xff]
      %5324 = vset.pattern.permute.xlu0 0
      %5325 = vperm.xlu0 %5324, %v5319
      %v5326 = vpop.permute.xlu0 %5325
      %5329 = vset.pattern.permute.xlu0 0
      %5330 = vperm.xlu0 %5329, %v5320
      %v5331 = vpop.permute.xlu0 %5330
      %5334 = vset.pattern.permute.xlu0 0
      %5335 = vperm.xlu0 %5334, %v5321
      %v5336 = vpop.permute.xlu0 %5335
      %5339 = vset.pattern.permute.xlu0 0
      %5340 = vperm.xlu0 %5339, %v5322
      %v5341 = vpop.permute.xlu0 %5340
      %v5343 = vmul.f32 %v5311, %v5326
      %v5344 = vmul.f32 %v5312, %v5326
      %v5345 = vmul.f32 %v5313, %v5331
      %v5346 = vmul.f32 %v5314, %v5331
      %v5347 = vmul.f32 %v5315, %v5336
      %v5348 = vmul.f32 %v5316, %v5336
      %v5349 = vmul.f32 %v5317, %v5341
      %v5350 = vmul.f32 %v5318, %v5341
      %v5351 = vld [vmem:[%s5] sm:$0xff]
      %v5352 = vld [vmem:[%s5 + $0x8] sm:$0xff]
      %v5353 = vld [vmem:[%s5 + $0x10] sm:$0xff]
      %v5354 = vld [vmem:[%s5 + $0x18] sm:$0xff]
      %5356 = vset.pattern.permute.xlu0 0
      %5357 = vperm.xlu0 %5356, %v5351
      %v5358 = vpop.permute.xlu0 %5357
      %5361 = vset.pattern.permute.xlu0 0
      %5362 = vperm.xlu0 %5361, %v5352
      %v5363 = vpop.permute.xlu0 %5362
      %5366 = vset.pattern.permute.xlu0 0
      %5367 = vperm.xlu0 %5366, %v5353
      %v5368 = vpop.permute.xlu0 %5367
      %5371 = vset.pattern.permute.xlu0 0
      %5372 = vperm.xlu0 %5371, %v5354
      %v5373 = vpop.permute.xlu0 %5372
      %v5375 = vadd.f32 %v5343, %v5358
      %v5376 = vadd.f32 %v5344, %v5358
      %v5377 = vadd.f32 %v5345, %v5363
      %v5378 = vadd.f32 %v5346, %v5363
      %v5379 = vadd.f32 %v5347, %v5368
      %v5380 = vadd.f32 %v5348, %v5368
      %v5381 = vadd.f32 %v5349, %v5373
      %v5382 = vadd.f32 %v5350, %v5373
      %v5383 = vld [vmem:[%s6] sm:$0xff]
      %v5384 = vld [vmem:[%s6 + $0x8] sm:$0xff]
      %v5385 = vld [vmem:[%s6 + $0x10] sm:$0xff]
      %v5386 = vld [vmem:[%s6 + $0x18] sm:$0xff]
      %v5387 = vld [vmem:[%s6 + $0x20] sm:$0xff]
      %v5388 = vld [vmem:[%s6 + $0x28] sm:$0xff]
      %v5389 = vld [vmem:[%s6 + $0x30] sm:$0xff]
      %v5390 = vld [vmem:[%s6 + $0x38] sm:$0xff]
      %v5391 = vld [vmem:[%s6 + $0x40] sm:$0xff]
      %v5392 = vld [vmem:[%s6 + $0x48] sm:$0xff]
      %v5393 = vld [vmem:[%s6 + $0x50] sm:$0xff]
      %v5394 = vld [vmem:[%s6 + $0x58] sm:$0xff]
      %v5395 = vld [vmem:[%s6 + $0x60] sm:$0xff]
      %v5396 = vld [vmem:[%s6 + $0x68] sm:$0xff]
      %v5397 = vld [vmem:[%s6 + $0x70] sm:$0xff]
      %v5398 = vld [vmem:[%s6 + $0x78] sm:$0xff]
      %v5399 = vld [vmem:[%s7] sm:$0xff]
      %v5400 = vld [vmem:[%s7 + $0x8] sm:$0xff]
      %v5401 = vld [vmem:[%s7 + $0x10] sm:$0xff]
      %v5402 = vld [vmem:[%s7 + $0x18] sm:$0xff]
      %v5403 = vld [vmem:[%s7 + $0x20] sm:$0xff]
      %v5404 = vld [vmem:[%s7 + $0x28] sm:$0xff]
      %v5405 = vld [vmem:[%s7 + $0x30] sm:$0xff]
      %v5406 = vld [vmem:[%s7 + $0x38] sm:$0xff]
      %v5407 = vld [vmem:[%s7 + $0x40] sm:$0xff]
      %v5408 = vld [vmem:[%s7 + $0x48] sm:$0xff]
      %v5409 = vld [vmem:[%s7 + $0x50] sm:$0xff]
      %v5410 = vld [vmem:[%s7 + $0x58] sm:$0xff]
      %v5411 = vld [vmem:[%s7 + $0x60] sm:$0xff]
      %v5412 = vld [vmem:[%s7 + $0x68] sm:$0xff]
      %v5413 = vld [vmem:[%s7 + $0x70] sm:$0xff]
      %v5414 = vld [vmem:[%s7 + $0x78] sm:$0xff]
      %5416 = vset.pattern.permute.xlu0 0
      %5417 = vperm.xlu0 %5416, %v5399
      %v5418 = vpop.permute.xlu0 %5417
      %5421 = vset.pattern.permute.xlu0 0
      %5422 = vperm.xlu0 %5421, %v5400
      %v5423 = vpop.permute.xlu0 %5422
      %5426 = vset.pattern.permute.xlu0 0
      %5427 = vperm.xlu0 %5426, %v5401
      %v5428 = vpop.permute.xlu0 %5427
      %5431 = vset.pattern.permute.xlu0 0
      %5432 = vperm.xlu0 %5431, %v5402
      %v5433 = vpop.permute.xlu0 %5432
      %5436 = vset.pattern.permute.xlu0 0
      %5437 = vperm.xlu0 %5436, %v5403
      %v5438 = vpop.permute.xlu0 %5437
      %5441 = vset.pattern.permute.xlu0 0
      %5442 = vperm.xlu0 %5441, %v5404
      %v5443 = vpop.permute.xlu0 %5442
      %5446 = vset.pattern.permute.xlu0 0
      %5447 = vperm.xlu0 %5446, %v5405
      %v5448 = vpop.permute.xlu0 %5447
      %5451 = vset.pattern.permute.xlu0 0
      %5452 = vperm.xlu0 %5451, %v5406
      %v5453 = vpop.permute.xlu0 %5452
      %5456 = vset.pattern.permute.xlu0 0
      %5457 = vperm.xlu0 %5456, %v5407
      %v5458 = vpop.permute.xlu0 %5457
      %5461 = vset.pattern.permute.xlu0 0
      %5462 = vperm.xlu0 %5461, %v5408
      %v5463 = vpop.permute.xlu0 %5462
      %5466 = vset.pattern.permute.xlu0 0
      %5467 = vperm.xlu0 %5466, %v5409
      %v5468 = vpop.permute.xlu0 %5467
      %5471 = vset.pattern.permute.xlu0 0
      %5472 = vperm.xlu0 %5471, %v5410
      %v5473 = vpop.permute.xlu0 %5472
      %5476 = vset.pattern.permute.xlu0 0
      %5477 = vperm.xlu0 %5476, %v5411
      %v5478 = vpop.permute.xlu0 %5477
      %5481 = vset.pattern.permute.xlu0 0
      %5482 = vperm.xlu0 %5481, %v5412
      %v5483 = vpop.permute.xlu0 %5482
      %5486 = vset.pattern.permute.xlu0 0
      %5487 = vperm.xlu0 %5486, %v5413
      %v5488 = vpop.permute.xlu0 %5487
      %5491 = vset.pattern.permute.xlu0 0
      %5492 = vperm.xlu0 %5491, %v5414
      %v5493 = vpop.permute.xlu0 %5492
      %v5496 = vsel %vm1023, %v5383, 0
      %v5499 = vsel %vm1023, %v5384, 0
      %v5502 = vsel %vm1023, %v5385, 0
      %v5505 = vsel %vm1023, %v5386, 0
      %v5508 = vsel %vm1023, %v5387, 0
      %v5511 = vsel %vm1023, %v5388, 0
      %v5514 = vsel %vm1023, %v5389, 0
      %v5517 = vsel %vm1023, %v5390, 0
      %v5520 = vsel %vm1023, %v5391, 0
      %v5523 = vsel %vm1023, %v5392, 0
      %v5526 = vsel %vm1023, %v5393, 0
      %v5529 = vsel %vm1023, %v5394, 0
      %v5532 = vsel %vm1023, %v5395, 0
      %v5535 = vsel %vm1023, %v5396, 0
      %v5538 = vsel %vm1023, %v5397, 0
      %v5541 = vsel %vm1023, %v5398, 0
      %5543 = vmatprep.subr.mxu0 0.0
      %5544 = vmatpush1.msra.mxu0 0.0
      %5545 = vmatprep.subr.mxu0 0.0
      %5546 = vmatpush1.msra.mxu0 0.0
      %5547 = vmatprep.subr.mxu0 0.0
      %5548 = vmatpush1.msra.mxu0 0.0
      %5549 = vmatprep.subr.mxu0 0.0
      %5550 = vmatpush1.msra.mxu0 0.0
      %5551 = vmatprep.subr.mxu0 0.0
      %5552 = vmatpush1.msra.mxu0 0.0
      %5553 = vmatprep.subr.mxu0 0.0
      %5554 = vmatpush1.msra.mxu0 0.0
      %5555 = vmatprep.subr.mxu0 0.0
      %5556 = vmatpush1.msra.mxu0 0.0
      %5557 = vmatprep.subr.mxu0 0.0
      %5558 = vmatpush1.msra.mxu0 0.0
      %5559 = vmatprep.subr.mxu0 0.0
      %5560 = vmatpush1.msra.mxu0 0.0
      %5561 = vmatprep.subr.mxu0 0.0
      %5562 = vmatpush1.msra.mxu0 0.0
      %5563 = vmatprep.subr.mxu0 0.0
      %5564 = vmatpush1.msra.mxu0 0.0
      %5565 = vmatprep.subr.mxu0 0.0
      %5566 = vmatpush1.msra.mxu0 0.0
      %5567 = vmatprep.subr.mxu0 %v5382
      %5568 = vmatpush1.msra.mxu0 %v5381
      %5569 = vmatprep.subr.mxu0 %v5380
      %5570 = vmatpush1.msra.mxu0 %v5379
      %5571 = vmatprep.subr.mxu0 %v5378
      %5572 = vmatpush1.msra.mxu0 %v5377
      %5573 = vmatprep.subr.mxu0 %v5376
      %5574 = vmatpush1.msra.mxu0 %v5375
      %5575 = vmatprep.subr.mxu0 0.0
      %5576 = vmatpush2.msra.mxu0 0.0
      %5577 = vmatprep.subr.mxu0 0.0
      %5578 = vmatpush2.msra.mxu0 0.0
      %5579 = vmatprep.subr.mxu0 0.0
      %5580 = vmatpush2.msra.mxu0 0.0
      %5581 = vmatprep.subr.mxu0 0.0
      %5582 = vmatpush2.msra.mxu0 0.0
      %5583 = vmatprep.subr.mxu0 0.0
      %5584 = vmatpush2.msra.mxu0 0.0
      %5585 = vmatprep.subr.mxu0 0.0
      %5586 = vmatpush2.msra.mxu0 0.0
      %5587 = vmatprep.subr.mxu0 0.0
      %5588 = vmatpush2.msra.mxu0 0.0
      %5589 = vmatprep.subr.mxu0 0.0
      %5590 = vmatpush2.msra.mxu0 0.0
      %5591 = vmatprep.subr.mxu0 0.0
      %5592 = vmatpush2.msra.mxu0 0.0
      %5593 = vmatprep.subr.mxu0 0.0
      %5594 = vmatpush2.msra.mxu0 0.0
      %5595 = vmatprep.subr.mxu0 0.0
      %5596 = vmatpush2.msra.mxu0 0.0
      %5597 = vmatprep.subr.mxu0 0.0
      %5598 = vmatpush2.msra.mxu0 0.0
      %5599 = vmatprep.subr.mxu0 0.0
      %5600 = vmatpush2.msra.mxu0 0.0
      %5601 = vmatprep.subr.mxu0 0.0
      %5602 = vmatpush2.msra.mxu0 0.0
      %5603 = vmatprep.subr.mxu0 0.0
      %5604 = vmatpush2.msra.mxu0 0.0
      %5605 = vmatprep.subr.mxu0 0.0
      %5606 = vmatpush2.msra.mxu0 0.0
      %5607 = vmatprep.mubr.f32.mxu0 0.0
      %5608 = vmatmul.mubr.f32.gmra.mxu0 %v5496
      %v5609 = vpop.f32.mrf.mxu0
      %v5610 = vadd.f32 %v5418, %v5609
      %v5611 = vpop.f32.mrf.mxu0
      %v5612 = vadd.f32 %v5418, %v5611
      %5613 = vmatprep.mubr.f32.mxu0 0.0
      %5614 = vmatmul.mubr.f32.gmra.mxu0 %v5499
      %v5615 = vpop.f32.mrf.mxu0
      %v5616 = vadd.f32 %v5423, %v5615
      %v5617 = vpop.f32.mrf.mxu0
      %v5618 = vadd.f32 %v5423, %v5617
      %5619 = vmatprep.mubr.f32.mxu0 0.0
      %5620 = vmatmul.mubr.f32.gmra.mxu0 %v5502
      %v5621 = vpop.f32.mrf.mxu0
      %v5622 = vadd.f32 %v5428, %v5621
      %v5623 = vpop.f32.mrf.mxu0
      %v5624 = vadd.f32 %v5428, %v5623
      %5625 = vmatprep.mubr.f32.mxu0 0.0
      %5626 = vmatmul.mubr.f32.gmra.mxu0 %v5505
      %v5627 = vpop.f32.mrf.mxu0
      %v5628 = vadd.f32 %v5433, %v5627
      %v5629 = vpop.f32.mrf.mxu0
      %v5630 = vadd.f32 %v5433, %v5629
      %5631 = vmatprep.mubr.f32.mxu0 0.0
      %5632 = vmatmul.mubr.f32.gmra.mxu0 %v5508
      %v5633 = vpop.f32.mrf.mxu0
      %v5634 = vadd.f32 %v5438, %v5633
      %v5635 = vpop.f32.mrf.mxu0
      %v5636 = vadd.f32 %v5438, %v5635
      %5637 = vmatprep.mubr.f32.mxu0 0.0
      %5638 = vmatmul.mubr.f32.gmra.mxu0 %v5511
      %v5639 = vpop.f32.mrf.mxu0
      %v5640 = vadd.f32 %v5443, %v5639
      %v5641 = vpop.f32.mrf.mxu0
      %v5642 = vadd.f32 %v5443, %v5641
      %5643 = vmatprep.mubr.f32.mxu0 0.0
      %5644 = vmatmul.mubr.f32.gmra.mxu0 %v5514
      %v5645 = vpop.f32.mrf.mxu0
      %v5646 = vadd.f32 %v5448, %v5645
      %v5647 = vpop.f32.mrf.mxu0
      %v5648 = vadd.f32 %v5448, %v5647
      %5649 = vmatprep.mubr.f32.mxu0 0.0
      %5650 = vmatmul.mubr.f32.gmra.mxu0 %v5517
      %v5651 = vpop.f32.mrf.mxu0
      %v5652 = vadd.f32 %v5453, %v5651
      %v5653 = vpop.f32.mrf.mxu0
      %v5654 = vadd.f32 %v5453, %v5653
      %5655 = vmatprep.mubr.f32.mxu0 0.0
      %5656 = vmatmul.mubr.f32.gmra.mxu0 %v5520
      %v5657 = vpop.f32.mrf.mxu0
      %v5658 = vadd.f32 %v5458, %v5657
      %v5659 = vpop.f32.mrf.mxu0
      %v5660 = vadd.f32 %v5458, %v5659
      %5661 = vmatprep.mubr.f32.mxu0 0.0
      %5662 = vmatmul.mubr.f32.gmra.mxu0 %v5523
      %v5663 = vpop.f32.mrf.mxu0
      %v5664 = vadd.f32 %v5463, %v5663
      %v5665 = vpop.f32.mrf.mxu0
      %v5666 = vadd.f32 %v5463, %v5665
      %5667 = vmatprep.mubr.f32.mxu0 0.0
      %5668 = vmatmul.mubr.f32.gmra.mxu0 %v5526
      %v5669 = vpop.f32.mrf.mxu0
      %v5670 = vadd.f32 %v5468, %v5669
      %v5671 = vpop.f32.mrf.mxu0
      %v5672 = vadd.f32 %v5468, %v5671
      %5673 = vmatprep.mubr.f32.mxu0 0.0
      %5674 = vmatmul.mubr.f32.gmra.mxu0 %v5529
      %v5675 = vpop.f32.mrf.mxu0
      %v5676 = vadd.f32 %v5473, %v5675
      %v5677 = vpop.f32.mrf.mxu0
      %v5678 = vadd.f32 %v5473, %v5677
      %5679 = vmatprep.mubr.f32.mxu0 0.0
      %5680 = vmatmul.mubr.f32.gmra.mxu0 %v5532
      %v5681 = vpop.f32.mrf.mxu0
      %v5682 = vadd.f32 %v5478, %v5681
      %v5683 = vpop.f32.mrf.mxu0
      %v5684 = vadd.f32 %v5478, %v5683
      %5685 = vmatprep.mubr.f32.mxu0 0.0
      %5686 = vmatmul.mubr.f32.gmra.mxu0 %v5535
      %v5687 = vpop.f32.mrf.mxu0
      %v5688 = vadd.f32 %v5483, %v5687
      %v5689 = vpop.f32.mrf.mxu0
      %v5690 = vadd.f32 %v5483, %v5689
      %5691 = vmatprep.mubr.f32.mxu0 0.0
      %5692 = vmatmul.mubr.f32.gmra.mxu0 %v5538
      %v5693 = vpop.f32.mrf.mxu0
      %v5694 = vadd.f32 %v5488, %v5693
      %v5695 = vpop.f32.mrf.mxu0
      %v5696 = vadd.f32 %v5488, %v5695
      %5697 = vmatprep.mubr.f32.mxu0 0.0
      %5698 = vmatmul.mubr.f32.gmra.mxu0 %v5541
      %v5699 = vpop.f32.mrf.mxu0
      %v5700 = vadd.f32 %v5493, %v5699
      %v5701 = vpop.f32.mrf.mxu0
      %v5702 = vadd.f32 %v5493, %v5701
      %5703 = vdwg.mxu0
      %v5704 = vmul.f32 %v5610, 0.5
      %v5705 = vmul.f32 %v5612, 0.5
      %v5706 = vmul.f32 %v5616, 0.5
      %v5707 = vmul.f32 %v5618, 0.5
      %v5708 = vmul.f32 %v5622, 0.5
      %v5709 = vmul.f32 %v5624, 0.5
      %v5710 = vmul.f32 %v5628, 0.5
      %v5711 = vmul.f32 %v5630, 0.5
      %v5712 = vmul.f32 %v5634, 0.5
      %v5713 = vmul.f32 %v5636, 0.5
      %v5714 = vmul.f32 %v5640, 0.5
      %v5715 = vmul.f32 %v5642, 0.5
      %v5716 = vmul.f32 %v5646, 0.5
      %v5717 = vmul.f32 %v5648, 0.5
      %v5718 = vmul.f32 %v5652, 0.5
      %v5719 = vmul.f32 %v5654, 0.5
      %v5720 = vmul.f32 %v5658, 0.5
      %v5721 = vmul.f32 %v5660, 0.5
      %v5722 = vmul.f32 %v5664, 0.5
      %v5723 = vmul.f32 %v5666, 0.5
      %v5724 = vmul.f32 %v5670, 0.5
      %v5725 = vmul.f32 %v5672, 0.5
      %v5726 = vmul.f32 %v5676, 0.5
      %v5727 = vmul.f32 %v5678, 0.5
      %v5728 = vmul.f32 %v5682, 0.5
      %v5729 = vmul.f32 %v5684, 0.5
      %v5730 = vmul.f32 %v5688, 0.5
      %v5731 = vmul.f32 %v5690, 0.5
      %v5732 = vmul.f32 %v5694, 0.5
      %v5733 = vmul.f32 %v5696, 0.5
      %v5734 = vmul.f32 %v5700, 0.5
      %v5735 = vmul.f32 %v5702, 0.5
      %v5736 = vmul.f32 %v5610, 0.70710677
      %v5737 = vmul.f32 %v5612, 0.70710677
      %v5738 = vmul.f32 %v5616, 0.70710677
      %v5739 = vmul.f32 %v5618, 0.70710677
      %v5740 = vmul.f32 %v5622, 0.70710677
      %v5741 = vmul.f32 %v5624, 0.70710677
      %v5742 = vmul.f32 %v5628, 0.70710677
      %v5743 = vmul.f32 %v5630, 0.70710677
      %v5744 = vmul.f32 %v5634, 0.70710677
      %v5745 = vmul.f32 %v5636, 0.70710677
      %v5746 = vmul.f32 %v5640, 0.70710677
      %v5747 = vmul.f32 %v5642, 0.70710677
      %v5748 = vmul.f32 %v5646, 0.70710677
      %v5749 = vmul.f32 %v5648, 0.70710677
      %v5750 = vmul.f32 %v5652, 0.70710677
      %v5751 = vmul.f32 %v5654, 0.70710677
      %v5752 = vmul.f32 %v5658, 0.70710677
      %v5753 = vmul.f32 %v5660, 0.70710677
      %v5754 = vmul.f32 %v5664, 0.70710677
      %v5755 = vmul.f32 %v5666, 0.70710677
      %v5756 = vmul.f32 %v5670, 0.70710677
      %v5757 = vmul.f32 %v5672, 0.70710677
      %v5758 = vmul.f32 %v5676, 0.70710677
      %v5759 = vmul.f32 %v5678, 0.70710677
      %v5760 = vmul.f32 %v5682, 0.70710677
      %v5761 = vmul.f32 %v5684, 0.70710677
      %v5762 = vmul.f32 %v5688, 0.70710677
      %v5763 = vmul.f32 %v5690, 0.70710677
      %v5764 = vmul.f32 %v5694, 0.70710677
      %v5765 = vmul.f32 %v5696, 0.70710677
      %v5766 = vmul.f32 %v5700, 0.70710677
      %v5767 = vmul.f32 %v5702, 0.70710677
      %v5768 = verf.f32.pop %v5736
      %v5769 = verf.f32.pop %v5737
      %v5770 = verf.f32.pop %v5738
      %v5771 = verf.f32.pop %v5739
      %v5772 = verf.f32.pop %v5740
      %v5773 = verf.f32.pop %v5741
      %v5774 = verf.f32.pop %v5742
      %v5775 = verf.f32.pop %v5743
      %v5776 = verf.f32.pop %v5744
      %v5777 = verf.f32.pop %v5745
      %v5778 = verf.f32.pop %v5746
      %v5779 = verf.f32.pop %v5747
      %v5780 = verf.f32.pop %v5748
      %v5781 = verf.f32.pop %v5749
      %v5782 = verf.f32.pop %v5750
      %v5783 = verf.f32.pop %v5751
      %v5784 = verf.f32.pop %v5752
      %v5785 = verf.f32.pop %v5753
      %v5786 = verf.f32.pop %v5754
      %v5787 = verf.f32.pop %v5755
      %v5788 = verf.f32.pop %v5756
      %v5789 = verf.f32.pop %v5757
      %v5790 = verf.f32.pop %v5758
      %v5791 = verf.f32.pop %v5759
      %v5792 = verf.f32.pop %v5760
      %v5793 = verf.f32.pop %v5761
      %v5794 = verf.f32.pop %v5762
      %v5795 = verf.f32.pop %v5763
      %v5796 = verf.f32.pop %v5764
      %v5797 = verf.f32.pop %v5765
      %v5798 = verf.f32.pop %v5766
      %v5799 = verf.f32.pop %v5767
      %v5800 = vadd.f32 %v5768, 1.0
      %v5801 = vadd.f32 %v5769, 1.0
      %v5802 = vadd.f32 %v5770, 1.0
      %v5803 = vadd.f32 %v5771, 1.0
      %v5804 = vadd.f32 %v5772, 1.0
      %v5805 = vadd.f32 %v5773, 1.0
      %v5806 = vadd.f32 %v5774, 1.0
      %v5807 = vadd.f32 %v5775, 1.0
      %v5808 = vadd.f32 %v5776, 1.0
      %v5809 = vadd.f32 %v5777, 1.0
      %v5810 = vadd.f32 %v5778, 1.0
      %v5811 = vadd.f32 %v5779, 1.0
      %v5812 = vadd.f32 %v5780, 1.0
      %v5813 = vadd.f32 %v5781, 1.0
      %v5814 = vadd.f32 %v5782, 1.0
      %v5815 = vadd.f32 %v5783, 1.0
      %v5816 = vadd.f32 %v5784, 1.0
      %v5817 = vadd.f32 %v5785, 1.0
      %v5818 = vadd.f32 %v5786, 1.0
      %v5819 = vadd.f32 %v5787, 1.0
      %v5820 = vadd.f32 %v5788, 1.0
      %v5821 = vadd.f32 %v5789, 1.0
      %v5822 = vadd.f32 %v5790, 1.0
      %v5823 = vadd.f32 %v5791, 1.0
      %v5824 = vadd.f32 %v5792, 1.0
      %v5825 = vadd.f32 %v5793, 1.0
      %v5826 = vadd.f32 %v5794, 1.0
      %v5827 = vadd.f32 %v5795, 1.0
      %v5828 = vadd.f32 %v5796, 1.0
      %v5829 = vadd.f32 %v5797, 1.0
      %v5830 = vadd.f32 %v5798, 1.0
      %v5831 = vadd.f32 %v5799, 1.0
      %v5832 = vmul.f32 %v5704, %v5800
      %v5833 = vmul.f32 %v5705, %v5801
      %v5834 = vmul.f32 %v5706, %v5802
      %v5835 = vmul.f32 %v5707, %v5803
      %v5836 = vmul.f32 %v5708, %v5804
      %v5837 = vmul.f32 %v5709, %v5805
      %v5838 = vmul.f32 %v5710, %v5806
      %v5839 = vmul.f32 %v5711, %v5807
      %v5840 = vmul.f32 %v5712, %v5808
      %v5841 = vmul.f32 %v5713, %v5809
      %v5842 = vmul.f32 %v5714, %v5810
      %v5843 = vmul.f32 %v5715, %v5811
      %v5844 = vmul.f32 %v5716, %v5812
      %v5845 = vmul.f32 %v5717, %v5813
      %v5846 = vmul.f32 %v5718, %v5814
      %v5847 = vmul.f32 %v5719, %v5815
      %v5848 = vmul.f32 %v5720, %v5816
      %v5849 = vmul.f32 %v5721, %v5817
      %v5850 = vmul.f32 %v5722, %v5818
      %v5851 = vmul.f32 %v5723, %v5819
      %v5852 = vmul.f32 %v5724, %v5820
      %v5853 = vmul.f32 %v5725, %v5821
      %v5854 = vmul.f32 %v5726, %v5822
      %v5855 = vmul.f32 %v5727, %v5823
      %v5856 = vmul.f32 %v5728, %v5824
      %v5857 = vmul.f32 %v5729, %v5825
      %v5858 = vmul.f32 %v5730, %v5826
      %v5859 = vmul.f32 %v5731, %v5827
      %v5860 = vmul.f32 %v5732, %v5828
      %v5861 = vmul.f32 %v5733, %v5829
      %v5862 = vmul.f32 %v5734, %v5830
      %v5863 = vmul.f32 %v5735, %v5831
      %v5864 = vld [vmem:[%s8] sm:$0xff]
      %v5865 = vld [vmem:[%s8 + $0x8] sm:$0xff]
      %v5866 = vld [vmem:[%s8 + $0x10] sm:$0xff]
      %v5867 = vld [vmem:[%s8 + $0x18] sm:$0xff]
      %v5868 = vld [vmem:[%s9] sm:$0xff]
      %v5869 = vld [vmem:[%s9 + $0x8] sm:$0xff]
      %v5870 = vld [vmem:[%s9 + $0x10] sm:$0xff]
      %v5871 = vld [vmem:[%s9 + $0x18] sm:$0xff]
      %5873 = vset.pattern.permute.xlu0 0
      %5874 = vperm.xlu0 %5873, %v5868
      %v5875 = vpop.permute.xlu0 %5874
      %5878 = vset.pattern.permute.xlu0 0
      %5879 = vperm.xlu0 %5878, %v5869
      %v5880 = vpop.permute.xlu0 %5879
      %5883 = vset.pattern.permute.xlu0 0
      %5884 = vperm.xlu0 %5883, %v5870
      %v5885 = vpop.permute.xlu0 %5884
      %5888 = vset.pattern.permute.xlu0 0
      %5889 = vperm.xlu0 %5888, %v5871
      %v5890 = vpop.permute.xlu0 %5889
      %5892 = vmatprep.subr.mxu0 %v5863
      %5893 = vmatpush1.msra.mxu0 %v5862
      %5894 = vmatprep.subr.mxu0 %v5861
      %5895 = vmatpush1.msra.mxu0 %v5860
      %5896 = vmatprep.subr.mxu0 %v5859
      %5897 = vmatpush1.msra.mxu0 %v5858
      %5898 = vmatprep.subr.mxu0 %v5857
      %5899 = vmatpush1.msra.mxu0 %v5856
      %5900 = vmatprep.subr.mxu0 %v5855
      %5901 = vmatpush1.msra.mxu0 %v5854
      %5902 = vmatprep.subr.mxu0 %v5853
      %5903 = vmatpush1.msra.mxu0 %v5852
      %5904 = vmatprep.subr.mxu0 %v5851
      %5905 = vmatpush1.msra.mxu0 %v5850
      %5906 = vmatprep.subr.mxu0 %v5849
      %5907 = vmatpush1.msra.mxu0 %v5848
      %5908 = vmatprep.subr.mxu0 %v5847
      %5909 = vmatpush1.msra.mxu0 %v5846
      %5910 = vmatprep.subr.mxu0 %v5845
      %5911 = vmatpush1.msra.mxu0 %v5844
      %5912 = vmatprep.subr.mxu0 %v5843
      %5913 = vmatpush1.msra.mxu0 %v5842
      %5914 = vmatprep.subr.mxu0 %v5841
      %5915 = vmatpush1.msra.mxu0 %v5840
      %5916 = vmatprep.subr.mxu0 %v5839
      %5917 = vmatpush1.msra.mxu0 %v5838
      %5918 = vmatprep.subr.mxu0 %v5837
      %5919 = vmatpush1.msra.mxu0 %v5836
      %5920 = vmatprep.subr.mxu0 %v5835
      %5921 = vmatpush1.msra.mxu0 %v5834
      %5922 = vmatprep.subr.mxu0 %v5833
      %5923 = vmatpush1.msra.mxu0 %v5832
      %5924 = vmatprep.subr.mxu0 0.0
      %5925 = vmatpush2.msra.mxu0 0.0
      %5926 = vmatprep.subr.mxu0 0.0
      %5927 = vmatpush2.msra.mxu0 0.0
      %5928 = vmatprep.subr.mxu0 0.0
      %5929 = vmatpush2.msra.mxu0 0.0
      %5930 = vmatprep.subr.mxu0 0.0
      %5931 = vmatpush2.msra.mxu0 0.0
      %5932 = vmatprep.subr.mxu0 0.0
      %5933 = vmatpush2.msra.mxu0 0.0
      %5934 = vmatprep.subr.mxu0 0.0
      %5935 = vmatpush2.msra.mxu0 0.0
      %5936 = vmatprep.subr.mxu0 0.0
      %5937 = vmatpush2.msra.mxu0 0.0
      %5938 = vmatprep.subr.mxu0 0.0
      %5939 = vmatpush2.msra.mxu0 0.0
      %5940 = vmatprep.subr.mxu0 0.0
      %5941 = vmatpush2.msra.mxu0 0.0
      %5942 = vmatprep.subr.mxu0 0.0
      %5943 = vmatpush2.msra.mxu0 0.0
      %5944 = vmatprep.subr.mxu0 0.0
      %5945 = vmatpush2.msra.mxu0 0.0
      %5946 = vmatprep.subr.mxu0 0.0
      %5947 = vmatpush2.msra.mxu0 0.0
      %5948 = vmatprep.subr.mxu0 0.0
      %5949 = vmatpush2.msra.mxu0 0.0
      %5950 = vmatprep.subr.mxu0 0.0
      %5951 = vmatpush2.msra.mxu0 0.0
      %5952 = vmatprep.subr.mxu0 0.0
      %5953 = vmatpush2.msra.mxu0 0.0
      %5954 = vmatprep.subr.mxu0 0.0
      %5955 = vmatpush2.msra.mxu0 0.0
      %5956 = vmatprep.mubr.f32.mxu0 0.0
      %5957 = vmatmul.mubr.f32.gmra.mxu0 %v5864
      %v5958 = vpop.f32.mrf.mxu0
      %v5959 = vadd.f32 %v5875, %v5958
      %v5960 = vpop.f32.mrf.mxu0
      %v5961 = vadd.f32 %v5875, %v5960
      %5962 = vmatprep.mubr.f32.mxu0 0.0
      %5963 = vmatmul.mubr.f32.gmra.mxu0 %v5865
      %v5964 = vpop.f32.mrf.mxu0
      %v5965 = vadd.f32 %v5880, %v5964
      %v5966 = vpop.f32.mrf.mxu0
      %v5967 = vadd.f32 %v5880, %v5966
      %5968 = vmatprep.mubr.f32.mxu0 0.0
      %5969 = vmatmul.mubr.f32.gmra.mxu0 %v5866
      %v5970 = vpop.f32.mrf.mxu0
      %v5971 = vadd.f32 %v5885, %v5970
      %v5972 = vpop.f32.mrf.mxu0
      %v5973 = vadd.f32 %v5885, %v5972
      %5974 = vmatprep.mubr.f32.mxu0 0.0
      %5975 = vmatmul.mubr.f32.gmra.mxu0 %v5867
      %v5976 = vpop.f32.mrf.mxu0
      %v5977 = vadd.f32 %v5890, %v5976
      %v5978 = vpop.f32.mrf.mxu0
      %v5979 = vadd.f32 %v5890, %v5978
      %5980 = vdwg.mxu0
      %v5981 = vld [vmem:[%s381] sm:$0xff]
      %v5982 = vld [vmem:[%s381 + $0x8] sm:$0xff]
      %v5983 = vld [vmem:[%s381 + $0x10] sm:$0xff]
      %v5984 = vld [vmem:[%s381 + $0x18] sm:$0xff]
      %v5985 = vld [vmem:[%s381 + $0x20] sm:$0xff]
      %v5986 = vld [vmem:[%s381 + $0x28] sm:$0xff]
      %v5987 = vld [vmem:[%s381 + $0x30] sm:$0xff]
      %v5988 = vld [vmem:[%s381 + $0x38] sm:$0xff]
      %v5989 = vld [vmem:[%s10] sm:$0xff]
      %v5990 = vld [vmem:[%s10 + $0x8] sm:$0xff]
      %v5991 = vld [vmem:[%s10 + $0x10] sm:$0xff]
      %v5992 = vld [vmem:[%s10 + $0x18] sm:$0xff]
      %5994 = vset.pattern.permute.xlu0 0
      %5995 = vperm.xlu0 %5994, %v5989
      %v5996 = vpop.permute.xlu0 %5995
      %5999 = vset.pattern.permute.xlu0 0
      %6000 = vperm.xlu0 %5999, %v5990
      %v6001 = vpop.permute.xlu0 %6000
      %6004 = vset.pattern.permute.xlu0 0
      %6005 = vperm.xlu0 %6004, %v5991
      %v6006 = vpop.permute.xlu0 %6005
      %6009 = vset.pattern.permute.xlu0 0
      %6010 = vperm.xlu0 %6009, %v5992
      %v6011 = vpop.permute.xlu0 %6010
      %v6013 = vmul.f32 %v5959, %v5996
      %v6014 = vmul.f32 %v5961, %v5996
      %v6015 = vmul.f32 %v5965, %v6001
      %v6016 = vmul.f32 %v5967, %v6001
      %v6017 = vmul.f32 %v5971, %v6006
      %v6018 = vmul.f32 %v5973, %v6006
      %v6019 = vmul.f32 %v5977, %v6011
      %v6020 = vmul.f32 %v5979, %v6011
      %v6021 = vadd.f32 %v5981, %v6013
      %v6022 = vadd.f32 %v5982, %v6014
      %v6023 = vadd.f32 %v5983, %v6015
      %v6024 = vadd.f32 %v5984, %v6016
      %v6025 = vadd.f32 %v5985, %v6017
      %v6026 = vadd.f32 %v5986, %v6018
      %v6027 = vadd.f32 %v5987, %v6019
      %v6028 = vadd.f32 %v5988, %v6020
      %6029 = vst [vmem:[%s386] sm:$0xff] %v6021
      %6030 = vst [vmem:[%s386 + $0x8] sm:$0xff] %v6022
      %6031 = vst [vmem:[%s386 + $0x10] sm:$0xff] %v6023
      %6032 = vst [vmem:[%s386 + $0x18] sm:$0xff] %v6024
      %6033 = vst [vmem:[%s386 + $0x20] sm:$0xff] %v6025
      %6034 = vst [vmem:[%s386 + $0x28] sm:$0xff] %v6026
      %6035 = vst [vmem:[%s386 + $0x30] sm:$0xff] %v6027
      %6036 = vst [vmem:[%s386 + $0x38] sm:$0xff] %v6028
      %p6037 = scmp.lt.s32.totalorder %s22, 1
      %s6038 = scalar_select %p6037, %s22, 1
      %s6039 = smul.addr %s6038, 8
      %s6040 = smul.addr %s6039, 8
      %s6041 = scalar_lea.vmem %s11, %s6040
      // Predicated region
      $region65: #{convnext_block.1} parent=63 // pred_check
        %p6042 = pneg %p276
      $region66: #{convnext_block.1} parent=63 // pred_check_branch
        %6044 = sbr.rel (%p6042) target = $region68
      $region67: #{convnext_block.1} parent=63 // pred_region
        _
      $region68: #{convnext_block.1} parent=63 // pred_fallthru
        _
    $region64: #{convnext_block.1} parent=5 // pred_fallthru
      _
    %p6045 = scmp.le.s32.totalorder 2, %s17
    // Predicated region
    $region69: #{convnext_block.1} parent=5 // pred_check
      %p6046 = pneg %p6045
    $region70: #{convnext_block.1} parent=5 // pred_check_branch
      %6048 = sbr.rel (%p6046) target = $region72
    $region71: #{convnext_block.1} parent=5 // pred_region
      %s6049 = ssub.s32 %s17, 2
      // Predicated region
      $region73: #{convnext_block.1} parent=71 // pred_check
        %p6050 = pneg %p282
      $region74: #{convnext_block.1} parent=71 // pred_check_branch
        %6052 = sbr.rel (%p6050) target = $region76
      $region75: #{convnext_block.1} parent=71 // pred_region
        %p6053 = scmp.lt.s32.totalorder %s23, 1
        %s6054 = scalar_select %p6053, %s23, 1
        %s6055 = smul.addr %s6054, 8
        %s6056 = smul.addr %s6055, 8
        %s6057 = scalar_lea.vmem %s11, %s6056
      $region76: #{convnext_block.1} parent=71 // pred_fallthru
        _
    $region72: #{convnext_block.1} parent=5 // pred_fallthru
      _
  $region6: #{convnext_block.1} parent=0 // loop_footer
    %s21 = sadd.s32 1, %s17
  $region7: #{convnext_block.1} parent=0 // loop_footer_branch
    %16 = sbr.rel target = $region3
  $region8: #{convnext_block.1} parent=0 // loop_exit
    _

</llo_original>
